<compile_context>
chip_gen: v5e
topology: v5e:2x2
jax: 0.10.0
libtpu: 0.0.40
codegen_flags: <defaults>
</compile_context>

<pallas_src>
import jax
import jax.numpy as jnp
from jax import lax
from jax.experimental import pallas as pl
from jax.experimental.pallas import tpu as pltpu  # noqa: F401  (TPU backend)

# ----------------- small synthetic flan-t5-like config -----------------
VOCAB = 128
D_MODEL = 32
N_HEADS = 4
D_HEAD = D_MODEL // N_HEADS
D_FF = 64
N_ENC_LAYERS = 1
N_DEC_LAYERS = 1
EPS = 1e-6
NEG_INF = -1e9

ENC_KEYS = ("ln_self", "wqkv", "wo", "ln_ff", "wi01", "wo_ff")
DEC_KEYS = ("ln_self", "wqkv", "wo", "ln_cross", "wq_c", "wkv_c", "wo_c",
            "ln_ff", "wi01", "wo_ff")


# --------------------- static weight-slab layout ----------------------------
def _round8(n):
    return -(-n // 8) * 8


def _build_weight_layout():
    """Every weight is a [rows, cols<=128] block stacked along the sublane axis
    of ONE (R, 128) f32 slab.  Row offsets are 8-aligned and columns start at
    lane 0, so in-kernel slices never need a lane realignment."""
    shapes = [("embed", VOCAB, D_MODEL), ("lm_head", D_MODEL, VOCAB),
              ("enc_final_ln", 1, D_MODEL), ("dec_final_ln", 1, D_MODEL)]
    enc_shapes = dict(ln_self=(1, D_MODEL), wqkv=(D_MODEL, 3 * D_MODEL),
                      wo=(D_MODEL, D_MODEL), ln_ff=(1, D_MODEL),
                      wi01=(D_MODEL, 2 * D_FF), wo_ff=(D_FF, D_MODEL))
    dec_shapes = dict(enc_shapes, ln_cross=(1, D_MODEL),
                      wq_c=(D_MODEL, D_MODEL), wkv_c=(D_MODEL, 2 * D_MODEL),
                      wo_c=(D_MODEL, D_MODEL))
    for l in range(N_ENC_LAYERS):
        for k in ENC_KEYS:
            shapes.append((f"enc{l}_{k}",) + enc_shapes[k])
    for l in range(N_DEC_LAYERS):
        for k in DEC_KEYS:
            shapes.append((f"dec{l}_{k}",) + dec_shapes[k])
    layout, off = {}, 0
    for name, r, c in shapes:
        layout[name] = (off, r, c)
        off += _round8(r)
    return layout, _round8(off)


_W_LAYOUT, _W_ROWS = _build_weight_layout()


def _pack_weights(params):
    """Wrapper-side layout plumbing: concatenate all weights into one slab."""
    slab = jnp.zeros((_W_ROWS, 128), jnp.float32)

    def put(slab, name, w):
        off, r, c = _W_LAYOUT[name]
        return slab.at[off:off + r, :c].set(
            jnp.asarray(w, jnp.float32).reshape(r, c))

    slab = put(slab, "embed", params['embed'])
    slab = put(slab, "lm_head", params['lm_head'])
    slab = put(slab, "enc_final_ln", params['enc_final_ln'])
    slab = put(slab, "dec_final_ln", params['dec_final_ln'])
    for l, blk in enumerate(params['enc_blocks']):
        for k in ENC_KEYS:
            slab = put(slab, f"enc{l}_{k}", blk[k])
    for l, blk in enumerate(params['dec_blocks']):
        for k in DEC_KEYS:
            slab = put(slab, f"dec{l}_{k}", blk[k])
    return slab


# --------------------- in-kernel building blocks (traced) -------------------
def _f32dot(a, b):
    """2-D matmul, f32 operands, f32 accumulation (MXU)."""
    return jnp.dot(a, b, preferred_element_type=jnp.float32)


def _rmsnorm(x2d, w_row):
    # T5LayerNorm: no mean subtraction, no bias.  f32 throughout.
    var = jnp.mean(x2d * x2d, axis=-1, keepdims=True)
    return (x2d * lax.rsqrt(var + EPS)) * w_row


def _softmax_f32(s):
    # f32 softmax (bias values of ~-1e9 would overflow bf16).
    m = jnp.max(s, axis=-1, keepdims=True)
    p = jnp.exp(s - m)
    return p * pl.reciprocal(jnp.sum(p, axis=-1, keepdims=True), approx=True)


def _embed_lookup(ids, embed_w):
    """Embedding as one-hot @ table: (M, VOCAB=128) x (VOCAB, D) lane-dense MXU
    matmul.  ids: (M, 1) int32."""
    M = ids.shape[0]
    vocab_iota = lax.broadcasted_iota(jnp.int32, (M, VOCAB), 1)
    onehot = (vocab_iota == ids).astype(jnp.float32)
    return _f32dot(onehot, embed_w)


def _mha(q2d, k2d, v2d, wo, bias_nqk, B, Sq, Sk):
    """Multi-head attention with heads packed into the batch (major) axis.
    q2d:(B*Sq,D), k2d/v2d:(B*Sk,D), bias_nqk already (H*B, Sq, Sk) (hoisted).
    Scores / softmax / P@V / output projection are each a single batched op."""
    q3 = q2d.reshape(B, Sq, D_MODEL)
    k3 = k2d.reshape(B, Sk, D_MODEL)
    v3 = v2d.reshape(B, Sk, D_MODEL)

    def heads(t):  # (B, S, D) -> (H*B, S, D_HEAD), head-major order
        return jnp.concatenate(
            [t[:, :, h * D_HEAD:(h + 1) * D_HEAD] for h in range(N_HEADS)],
            axis=0)

    qh, kh, vh = heads(q3), heads(k3), heads(v3)
    # NOTE: T5 attention does NOT scale scores by 1/sqrt(d_head).
    s = jnp.einsum('nqd,nkd->nqk', qh, kh,
                   preferred_element_type=jnp.float32) + bias_nqk
    p = _softmax_f32(s)                                  # one softmax, all heads
    o = jnp.einsum('nqk,nkd->nqd', p, vh,
                   preferred_element_type=jnp.float32)   # (H*B, Sq, D_HEAD)

    # Single batched output projection: (H, B*Sq, Dh) x (H, Dh, D), then sum
    # over the head axis (3 cheap vector adds) -> no per-head matmul chain and
    # no minor-dim concat.
    oh = o.reshape(N_HEADS, B * Sq, D_HEAD)
    wo3 = wo.reshape(N_HEADS, D_HEAD, D_MODEL)
    prj = jnp.einsum('hmd,hde->hme', oh, wo3,
                     preferred_element_type=jnp.float32)  # (H, B*Sq, D)
    out = prj[0]
    for h in range(1, N_HEADS):
        out = out + prj[h]
    return out


def _gated_ffn(x2d, wi01, wo_ff):
    # flan-t5 gated-GELU FFN with fused wi0|wi1 -> (M, 2*D_FF) = 128 lanes.
    h = _f32dot(x2d, wi01)
    hg = jax.nn.gelu(h[:, :D_FF], approximate=True)
    return _f32dot(hg * h[:, D_FF:], wo_ff)


def _encoder_block(x2d, lw, bias, B, S):
    h = _rmsnorm(x2d, lw['ln_self'])
    proj = _f32dot(h, lw['wqkv'])                        # fused q|k|v (M, 3D)
    x2d = x2d + _mha(proj[:, :D_MODEL], proj[:, D_MODEL:2 * D_MODEL],
                     proj[:, 2 * D_MODEL:], lw['wo'], bias, B, S, S)
    h = _rmsnorm(x2d, lw['ln_ff'])
    return x2d + _gated_ffn(h, lw['wi01'], lw['wo_ff'])


def _decoder_block(y2d, enc2d, lw, self_bias, cross_bias, B, Sd, Se):
    h = _rmsnorm(y2d, lw['ln_self'])
    proj = _f32dot(h, lw['wqkv'])
    y2d = y2d + _mha(proj[:, :D_MODEL], proj[:, D_MODEL:2 * D_MODEL],
                     proj[:, 2 * D_MODEL:], lw['wo'], self_bias, B, Sd, Sd)
    h = _rmsnorm(y2d, lw['ln_cross'])
    q = _f32dot(h, lw['wq_c'])
    kv = _f32dot(enc2d, lw['wkv_c'])                     # fused k|v (M, 2D)
    y2d = y2d + _mha(q, kv[:, :D_MODEL], kv[:, D_MODEL:], lw['wo_c'],
                     cross_bias, B, Sd, Se)
    h = _rmsnorm(y2d, lw['ln_ff'])
    return y2d + _gated_ffn(h, lw['wi01'], lw['wo_ff'])


# ------------------------- the single fused kernel ---------------------------
def _t5_fused_forward_kernel(enc_ids_ref, dec_ids_ref, labels_ref, enc_mask_ref,
                             w_ref, enc_out_ref, logits_ref, loss_ref):
    """Entire encoder-decoder forward + LM head + masked NLL, one invocation."""
    B, S_enc = enc_mask_ref.shape
    S_dec = dec_ids_ref.shape[0] // B

    def W(name):
        off, r, c = _W_LAYOUT[name]
        return w_ref[off:off + r, :c]

    # --------- embeddings (one-hot @ table: VOCAB=128 is lane-dense) ---------
    embed_w = W("embed")
    x2d = _embed_lookup(enc_ids_ref[...], embed_w)          # (B*S_enc, D)
    y2d = _embed_lookup(dec_ids_ref[...], embed_w)          # (B*S_dec, D)

    # --------- attention biases, built & head-broadcast ONCE (f32) ----------
    pad = (1.0 - enc_mask_ref[...]) * NEG_INF               # (B, S_enc)
    rows = lax.broadcasted_iota(jnp.int32, (S_dec, S_dec), 0)
    cols = lax.broadcasted_iota(jnp.int32, (S_dec, S_dec), 1)
    causal = jnp.where(cols <= rows, 0.0, NEG_INF)           # (S_dec, S_dec)

    def tile_heads(b3):  # (B, Sq, Sk) -> (H*B, Sq, Sk), head-major order
        return jnp.concatenate([b3] * N_HEADS, axis=0)

    enc_bias = tile_heads(jnp.broadcast_to(pad[:, None, :], (B, S_enc, S_enc)))
    dec_bias = tile_heads(jnp.broadcast_to(causal[None, :, :], (B, S_dec, S_dec)))
    cross_bias = tile_heads(jnp.broadcast_to(pad[:, None, :], (B, S_dec, S_enc)))

    # ------------------------------- encoder -------------------------------
    for l in range(N_ENC_LAYERS):
        lw = {k: W(f"enc{l}_{k}") for k in ENC_KEYS}
        x2d = _encoder_block(x2d, lw, enc_bias, B, S_enc)
    x2d = _rmsnorm(x2d, W("enc_final_ln"))
    enc_out_ref[...] = x2d.reshape(B, S_enc, D_MODEL)

    # ------------------------------- decoder -------------------------------
    for l in range(N_DEC_LAYERS):
        lw = {k: W(f"dec{l}_{k}") for k in DEC_KEYS}
        y2d = _decoder_block(y2d, x2d, lw, dec_bias, cross_bias, B, S_dec, S_enc)
    y2d = _rmsnorm(y2d, W("dec_final_ln"))

    # ------------- LM head + log-softmax + masked NLL (fused) -------------
    logits = _f32dot(y2d, W("lm_head"))                     # (B*S_dec, 128)
    logits_ref[...] = logits.reshape(B, S_dec, VOCAB)

    m = jnp.max(logits, axis=-1, keepdims=True)
    shifted = logits - m
    lse = jnp.log(jnp.sum(jnp.exp(shifted), axis=-1, keepdims=True))
    log_probs = shifted - lse                               # (B*S_dec, VOCAB)

    lbl = labels_ref[...]                                   # (B*S_dec, 1) int32
    valid = (lbl != -100).astype(jnp.float32)
    safe = jnp.where(lbl == -100, 0, lbl)
    vocab_ids = lax.broadcasted_iota(jnp.int32, log_probs.shape, 1)
    onehot = (vocab_ids == safe).astype(jnp.float32)        # label gather as 1-hot
    nll = -jnp.sum(log_probs * onehot, axis=-1, keepdims=True)       # (M, 1)
    num = jnp.sum(nll * valid, keepdims=True)                        # (1, 1)
    den = jnp.maximum(jnp.sum(valid, keepdims=True), 1.0)
    loss_ref[...] = num / den


def _fused_forward(enc_ids, dec_ids, labels2d, enc_mask, w_slab, B, S_enc, S_dec):
    out_shape = (
        jax.ShapeDtypeStruct((B, S_enc, D_MODEL), jnp.float32),   # enc hidden
        jax.ShapeDtypeStruct((B, S_dec, VOCAB), jnp.float32),     # lm logits
        jax.ShapeDtypeStruct((1, 1), jnp.float32),                # loss
    )
    # No grid: whole problem (~330 KB weights + tiny activations) lives in VMEM
    # for one invocation; 5 input DMAs total (3 id/label vectors, mask, slab).
    return pl.pallas_call(
        _t5_fused_forward_kernel,
        out_shape=out_shape,
        cost_estimate=pl.CostEstimate(flops=1_400_000,
                                      transcendentals=6_000,
                                      bytes_accessed=340_000),
    )(enc_ids, dec_ids, labels2d, enc_mask, w_slab)


# ----------------------------- params & wrapper ------------------------------
def init_params(key):
    keys = iter(jax.random.split(key, 64))

    def dense(shape):
        return jax.random.normal(next(keys), shape, jnp.float32) * 0.02

    def ln():
        return jnp.ones((1, D_MODEL), jnp.float32)

    def enc_block():
        return dict(ln_self=ln(), wqkv=dense((D_MODEL, 3 * D_MODEL)),
                    wo=dense((D_MODEL, D_MODEL)), ln_ff=ln(),
                    wi01=dense((D_MODEL, 2 * D_FF)), wo_ff=dense((D_FF, D_MODEL)))

    def dec_block():
        return dict(ln_self=ln(), wqkv=dense((D_MODEL, 3 * D_MODEL)),
                    wo=dense((D_MODEL, D_MODEL)), ln_cross=ln(),
                    wq_c=dense((D_MODEL, D_MODEL)),
                    wkv_c=dense((D_MODEL, 2 * D_MODEL)),
                    wo_c=dense((D_MODEL, D_MODEL)), ln_ff=ln(),
                    wi01=dense((D_MODEL, 2 * D_FF)), wo_ff=dense((D_FF, D_MODEL)))

    return dict(
        embed=dense((VOCAB, D_MODEL)),
        enc_blocks=[enc_block() for _ in range(N_ENC_LAYERS)],
        enc_final_ln=ln(),
        dec_blocks=[dec_block() for _ in range(N_DEC_LAYERS)],
        dec_final_ln=ln(),
        lm_head=dense((D_MODEL, VOCAB)),
    )


@jax.jit
def medical_llama7b_forward(params, input_ids, attention_mask, labels):
    """Mirrors MedicalLlama7B.forward(input_ids, attention_mask, labels):
    returns dict(loss, logits, encoder_last_hidden_state)."""
    B, S_enc = input_ids.shape
    if attention_mask is None:
        attention_mask = jnp.ones_like(input_ids)

    # T5 shift-right: decoder_start_token_id = 0; -100 labels mapped to pad 0.
    dec_in = jnp.concatenate(
        [jnp.zeros((B, 1), labels.dtype), labels[:, :-1]], axis=1)
    dec_in = jnp.where(dec_in == -100, 0, dec_in)
    S_dec = dec_in.shape[1]

    enc_ids = input_ids.reshape(B * S_enc, 1).astype(jnp.int32)
    dec_ids = dec_in.reshape(B * S_dec, 1).astype(jnp.int32)
    labels2d = labels.reshape(B * S_dec, 1).astype(jnp.int32)
    enc_mask = attention_mask.astype(jnp.float32)                    # (B, S)
    w_slab = _pack_weights(params)                                   # (R, 128)

    enc_out, logits, loss = _fused_forward(
        enc_ids, dec_ids, labels2d, enc_mask, w_slab, B, S_enc, S_dec)

    return {'loss': loss[0, 0], 'logits': logits,
            'encoder_last_hidden_state': enc_out}


if __name__ == "__main__":
    key = jax.random.PRNGKey(0)
    k_params, k_ids, k_lbl = jax.random.split(key, 3)

    params = init_params(k_params)

    B, S = 2, 8
    input_ids = jax.random.randint(k_ids, (B, S), 0, VOCAB, dtype=jnp.int32)
    attention_mask = jnp.ones((B, S), dtype=jnp.int32).at[1, 6:].set(0)
    labels = jax.random.randint(k_lbl, (B, S), 0, VOCAB, dtype=jnp.int32)

    out = medical_llama7b_forward(params, input_ids, attention_mask, labels)
    jax.block_until_ready(out)

    assert out['logits'].shape == (B, S, VOCAB)
    assert out['encoder_last_hidden_state'].shape == (B, S, D_MODEL)
    assert out['loss'].shape == ()
    assert bool(jnp.isfinite(out['loss']))
    print("KERNEL_OK")
</pallas_src>

<mosaic_0001>
module attributes {stable_mosaic.version = 11 : i64} {
  func.func @_t5_fused_forward_kernel(%arg0: memref<16x1xi32, #tpu.memory_space<vmem>>, %arg1: memref<16x1xi32, #tpu.memory_space<vmem>>, %arg2: memref<16x1xi32, #tpu.memory_space<vmem>>, %arg3: memref<2x8xf32, #tpu.memory_space<vmem>>, %arg4: memref<632x128xf32, #tpu.memory_space<vmem>>, %arg5: memref<2x8x32xf32, #tpu.memory_space<vmem>>, %arg6: memref<2x8x128xf32, #tpu.memory_space<vmem>>, %arg7: memref<1x1xf32, #tpu.memory_space<vmem>>) attributes {dimension_semantics = [], scalar_prefetch = 0 : i64, scratch_operands = 0 : i64, tpu.core_type = #tpu.core_type<tc>} {
    %c0 = arith.constant 0 : index
    %c0_0 = arith.constant 0 : index
    %0 = vector.load %arg4[%c0, %c0_0] : memref<632x128xf32, #tpu.memory_space<vmem>>, vector<128x32xf32>
    %c0_1 = arith.constant 0 : index
    %c0_2 = arith.constant 0 : index
    %1 = vector.load %arg0[%c0_1, %c0_2] : memref<16x1xi32, #tpu.memory_space<vmem>>, vector<16x1xi32>
    %2 = tpu.iota {dimensions = array<i32: 1>} : vector<16x128xi32>
    %3 = vector.broadcast %1 : vector<16x1xi32> to vector<16x128xi32>
    %4 = arith.cmpi eq, %2, %3 : vector<16x128xi32>
    %5 = arith.extui %4 : vector<16x128xi1> to vector<16x128xi32>
    %6 = arith.sitofp %5 : vector<16x128xi32> to vector<16x128xf32>
    %cst = arith.constant dense<0.000000e+00> : vector<16x32xf32>
    %7 = tpu.matmul %6, %0, %cst {dimension_numbers = #tpu.dot_dimension_numbers<[1], [0], [0], [1], [0, 0, 1, 1], [], []>} : vector<16x128xf32>, vector<128x32xf32>, vector<16x32xf32> -> vector<16x32xf32>
    %c0_3 = arith.constant 0 : index
    %c0_4 = arith.constant 0 : index
    %8 = vector.load %arg1[%c0_3, %c0_4] : memref<16x1xi32, #tpu.memory_space<vmem>>, vector<16x1xi32>
    %9 = tpu.iota {dimensions = array<i32: 1>} : vector<16x128xi32>
    %10 = vector.broadcast %8 : vector<16x1xi32> to vector<16x128xi32>
    %11 = arith.cmpi eq, %9, %10 : vector<16x128xi32>
    %12 = arith.extui %11 : vector<16x128xi1> to vector<16x128xi32>
    %13 = arith.sitofp %12 : vector<16x128xi32> to vector<16x128xf32>
    %cst_5 = arith.constant dense<0.000000e+00> : vector<16x32xf32>
    %14 = tpu.matmul %13, %0, %cst_5 {dimension_numbers = #tpu.dot_dimension_numbers<[1], [0], [0], [1], [0, 0, 1, 1], [], []>} : vector<16x128xf32>, vector<128x32xf32>, vector<16x32xf32> -> vector<16x32xf32>
    %c0_6 = arith.constant 0 : index
    %c0_7 = arith.constant 0 : index
    %15 = vector.load %arg3[%c0_6, %c0_7] : memref<2x8xf32, #tpu.memory_space<vmem>>, vector<2x8xf32>
    %cst_8 = arith.constant 1.000000e+00 : f32
    %16 = vector.broadcast %cst_8 : f32 to vector<2x8xf32>
    %17 = arith.subf %16, %15 : vector<2x8xf32>
    %cst_9 = arith.constant -1.000000e+09 : f32
    %18 = vector.broadcast %cst_9 : f32 to vector<2x8xf32>
    %19 = arith.mulf %17, %18 : vector<2x8xf32>
    %20 = tpu.iota {dimensions = array<i32: 0>} : vector<8x8xi32>
    %21 = tpu.iota {dimensions = array<i32: 1>} : vector<8x8xi32>
    %22 = arith.cmpi sle, %21, %20 : vector<8x8xi32>
    %cst_10 = arith.constant 0.000000e+00 : f32
    %cst_11 = arith.constant -1.000000e+09 : f32
    %23 = vector.broadcast %cst_10 : f32 to vector<8x8xf32>
    %24 = vector.broadcast %cst_11 : f32 to vector<8x8xf32>
    %25 = arith.select %22, %23, %24 : vector<8x8xi1>, vector<8x8xf32>
    %26 = vector.shape_cast %19 : vector<2x8xf32> to vector<2x1x8xf32>
    %27 = vector.shape_cast %26 : vector<2x1x8xf32> to vector<2x1x8xf32>
    %28 = vector.broadcast %27 : vector<2x1x8xf32> to vector<2x8x8xf32>
    %29 = tpu.concatenate %28, %28, %28, %28 in 0 : vector<2x8x8xf32>, vector<2x8x8xf32>, vector<2x8x8xf32>, vector<2x8x8xf32> -> vector<8x8x8xf32>
    %30 = vector.shape_cast %25 : vector<8x8xf32> to vector<1x8x8xf32>
    %31 = vector.shape_cast %30 : vector<1x8x8xf32> to vector<1x8x8xf32>
    %32 = vector.broadcast %31 : vector<1x8x8xf32> to vector<2x8x8xf32>
    %33 = tpu.concatenate %32, %32, %32, %32 in 0 : vector<2x8x8xf32>, vector<2x8x8xf32>, vector<2x8x8xf32>, vector<2x8x8xf32> -> vector<8x8x8xf32>
    %34 = vector.shape_cast %19 : vector<2x8xf32> to vector<2x1x8xf32>
    %35 = vector.shape_cast %34 : vector<2x1x8xf32> to vector<2x1x8xf32>
    %36 = vector.broadcast %35 : vector<2x1x8xf32> to vector<2x8x8xf32>
    %37 = tpu.concatenate %36, %36, %36, %36 in 0 : vector<2x8x8xf32>, vector<2x8x8xf32>, vector<2x8x8xf32>, vector<2x8x8xf32> -> vector<8x8x8xf32>
    %c176 = arith.constant 176 : index
    %c0_12 = arith.constant 0 : index
    %38 = vector.load %arg4[%c176, %c0_12] : memref<632x128xf32, #tpu.memory_space<vmem>>, vector<1x32xf32>
    %c184 = arith.constant 184 : index
    %c0_13 = arith.constant 0 : index
    %39 = vector.load %arg4[%c184, %c0_13] : memref<632x128xf32, #tpu.memory_space<vmem>>, vector<32x96xf32>
    %c216 = arith.constant 216 : index
    %c0_14 = arith.constant 0 : index
    %40 = vector.load %arg4[%c216, %c0_14] : memref<632x128xf32, #tpu.memory_space<vmem>>, vector<32x32xf32>
    %c248 = arith.constant 248 : index
    %c0_15 = arith.constant 0 : index
    %41 = vector.load %arg4[%c248, %c0_15] : memref<632x128xf32, #tpu.memory_space<vmem>>, vector<1x32xf32>
    %c256 = arith.constant 256 : index
    %c0_16 = arith.constant 0 : index
    %42 = vector.load %arg4[%c256, %c0_16] : memref<632x128xf32, #tpu.memory_space<vmem>>, vector<32x128xf32>
    %c288 = arith.constant 288 : index
    %c0_17 = arith.constant 0 : index
    %43 = vector.load %arg4[%c288, %c0_17] : memref<632x128xf32, #tpu.memory_space<vmem>>, vector<64x32xf32>
    %44 = arith.mulf %7, %7 : vector<16x32xf32>
    %cst_18 = arith.constant dense<0.000000e+00> : vector<16xf32>
    %45 = vector.multi_reduction <add>, %44, %cst_18 [1] : vector<16x32xf32> to vector<16xf32>
    %46 = vector.shape_cast %45 : vector<16xf32> to vector<16x1xf32>
    %cst_19 = arith.constant 3.200000e+01 : f32
    %47 = vector.broadcast %cst_19 : f32 to vector<16x1xf32>
    %48 = arith.divf %46, %47 : vector<16x1xf32>
    %cst_20 = arith.constant 9.99999997E-7 : f32
    %49 = vector.broadcast %cst_20 : f32 to vector<16x1xf32>
    %50 = arith.addf %48, %49 : vector<16x1xf32>
    %51 = math.rsqrt %50 : vector<16x1xf32>
    %52 = vector.broadcast %51 : vector<16x1xf32> to vector<16x32xf32>
    %53 = arith.mulf %7, %52 : vector<16x32xf32>
    %54 = vector.broadcast %38 : vector<1x32xf32> to vector<16x32xf32>
    %55 = arith.mulf %53, %54 : vector<16x32xf32>
    %cst_21 = arith.constant dense<0.000000e+00> : vector<16x96xf32>
    %56 = tpu.matmul %55, %39, %cst_21 {dimension_numbers = #tpu.dot_dimension_numbers<[1], [0], [0], [1], [0, 0, 1, 1], [], []>} : vector<16x32xf32>, vector<32x96xf32>, vector<16x96xf32> -> vector<16x96xf32>
    %57 = vector.extract_strided_slice %56 {offsets = [0, 0], sizes = [16, 32], strides = [1, 1]} : vector<16x96xf32> to vector<16x32xf32>
    %58 = vector.extract_strided_slice %56 {offsets = [0, 32], sizes = [16, 32], strides = [1, 1]} : vector<16x96xf32> to vector<16x32xf32>
    %59 = vector.extract_strided_slice %56 {offsets = [0, 64], sizes = [16, 32], strides = [1, 1]} : vector<16x96xf32> to vector<16x32xf32>
    %60 = vector.shape_cast %57 : vector<16x32xf32> to vector<2x8x32xf32>
    %61 = vector.shape_cast %58 : vector<16x32xf32> to vector<2x8x32xf32>
    %62 = vector.shape_cast %59 : vector<16x32xf32> to vector<2x8x32xf32>
    %63 = vector.extract_strided_slice %60 {offsets = [0, 0, 0], sizes = [2, 8, 8], strides = [1, 1, 1]} : vector<2x8x32xf32> to vector<2x8x8xf32>
    %64 = vector.extract_strided_slice %60 {offsets = [0, 0, 8], sizes = [2, 8, 8], strides = [1, 1, 1]} : vector<2x8x32xf32> to vector<2x8x8xf32>
    %65 = vector.extract_strided_slice %60 {offsets = [0, 0, 16], sizes = [2, 8, 8], strides = [1, 1, 1]} : vector<2x8x32xf32> to vector<2x8x8xf32>
    %66 = vector.extract_strided_slice %60 {offsets = [0, 0, 24], sizes = [2, 8, 8], strides = [1, 1, 1]} : vector<2x8x32xf32> to vector<2x8x8xf32>
    %67 = tpu.concatenate %63, %64, %65, %66 in 0 : vector<2x8x8xf32>, vector<2x8x8xf32>, vector<2x8x8xf32>, vector<2x8x8xf32> -> vector<8x8x8xf32>
    %68 = vector.extract_strided_slice %61 {offsets = [0, 0, 0], sizes = [2, 8, 8], strides = [1, 1, 1]} : vector<2x8x32xf32> to vector<2x8x8xf32>
    %69 = vector.extract_strided_slice %61 {offsets = [0, 0, 8], sizes = [2, 8, 8], strides = [1, 1, 1]} : vector<2x8x32xf32> to vector<2x8x8xf32>
    %70 = vector.extract_strided_slice %61 {offsets = [0, 0, 16], sizes = [2, 8, 8], strides = [1, 1, 1]} : vector<2x8x32xf32> to vector<2x8x8xf32>
    %71 = vector.extract_strided_slice %61 {offsets = [0, 0, 24], sizes = [2, 8, 8], strides = [1, 1, 1]} : vector<2x8x32xf32> to vector<2x8x8xf32>
    %72 = tpu.concatenate %68, %69, %70, %71 in 0 : vector<2x8x8xf32>, vector<2x8x8xf32>, vector<2x8x8xf32>, vector<2x8x8xf32> -> vector<8x8x8xf32>
    %73 = vector.extract_strided_slice %62 {offsets = [0, 0, 0], sizes = [2, 8, 8], strides = [1, 1, 1]} : vector<2x8x32xf32> to vector<2x8x8xf32>
    %74 = vector.extract_strided_slice %62 {offsets = [0, 0, 8], sizes = [2, 8, 8], strides = [1, 1, 1]} : vector<2x8x32xf32> to vector<2x8x8xf32>
    %75 = vector.extract_strided_slice %62 {offsets = [0, 0, 16], sizes = [2, 8, 8], strides = [1, 1, 1]} : vector<2x8x32xf32> to vector<2x8x8xf32>
    %76 = vector.extract_strided_slice %62 {offsets = [0, 0, 24], sizes = [2, 8, 8], strides = [1, 1, 1]} : vector<2x8x32xf32> to vector<2x8x8xf32>
    %77 = tpu.concatenate %73, %74, %75, %76 in 0 : vector<2x8x8xf32>, vector<2x8x8xf32>, vector<2x8x8xf32>, vector<2x8x8xf32> -> vector<8x8x8xf32>
    "tpu.trace_start"() <{level = 10 : i32, message = "nqd,nkd->nqk"}> : () -> ()
    %cst_22 = arith.constant dense<0.000000e+00> : vector<8x8x8xf32>
    %78 = tpu.matmul %67, %72, %cst_22 {dimension_numbers = #tpu.dot_dimension_numbers<[2], [2], [1], [1], [0, 0, 0, 1, 1, 1], [0], [0]>} : vector<8x8x8xf32>, vector<8x8x8xf32>, vector<8x8x8xf32> -> vector<8x8x8xf32>
    "tpu.trace_stop"() : () -> ()
    %79 = arith.addf %78, %29 : vector<8x8x8xf32>
    %cst_23 = arith.constant dense<0xFF800000> : vector<8x8xf32>
    %80 = vector.multi_reduction <maximumf>, %79, %cst_23 [2] : vector<8x8x8xf32> to vector<8x8xf32>
    %81 = vector.shape_cast %80 : vector<8x8xf32> to vector<8x8x1xf32>
    %82 = vector.broadcast %81 : vector<8x8x1xf32> to vector<8x8x8xf32>
    %83 = arith.subf %79, %82 : vector<8x8x8xf32>
    %84 = math.exp %83 : vector<8x8x8xf32>
    %cst_24 = arith.constant dense<0.000000e+00> : vector<8x8xf32>
    %85 = vector.multi_reduction <add>, %84, %cst_24 [2] : vector<8x8x8xf32> to vector<8x8xf32>
    %86 = vector.shape_cast %85 : vector<8x8xf32> to vector<8x8x1xf32>
    %87 = tpu.reciprocal %86 {approx = true} : vector<8x8x1xf32> -> vector<8x8x1xf32>
    %88 = vector.broadcast %87 : vector<8x8x1xf32> to vector<8x8x8xf32>
    %89 = arith.mulf %84, %88 : vector<8x8x8xf32>
    "tpu.trace_start"() <{level = 10 : i32, message = "nqk,nkd->nqd"}> : () -> ()
    %cst_25 = arith.constant dense<0.000000e+00> : vector<8x8x8xf32>
    %90 = tpu.matmul %89, %77, %cst_25 {dimension_numbers = #tpu.dot_dimension_numbers<[2], [1], [1], [2], [0, 0, 0, 1, 1, 2], [0], [0]>} : vector<8x8x8xf32>, vector<8x8x8xf32>, vector<8x8x8xf32> -> vector<8x8x8xf32>
    "tpu.trace_stop"() : () -> ()
    %91 = vector.shape_cast %90 : vector<8x8x8xf32> to vector<4x16x8xf32>
    %92 = vector.shape_cast %40 : vector<32x32xf32> to vector<4x8x32xf32>
    "tpu.trace_start"() <{level = 10 : i32, message = "hmd,hde->hme"}> : () -> ()
    %cst_26 = arith.constant dense<0.000000e+00> : vector<4x16x32xf32>
    %93 = tpu.matmul %91, %92, %cst_26 {dimension_numbers = #tpu.dot_dimension_numbers<[2], [1], [1], [2], [0, 0, 0, 1, 1, 2], [0], [0]>} : vector<4x16x8xf32>, vector<4x8x32xf32>, vector<4x16x32xf32> -> vector<4x16x32xf32>
    "tpu.trace_stop"() : () -> ()
    %94 = vector.extract_strided_slice %93 {offsets = [0, 0, 0], sizes = [1, 16, 32], strides = [1, 1, 1]} : vector<4x16x32xf32> to vector<1x16x32xf32>
    %95 = vector.shape_cast %94 : vector<1x16x32xf32> to vector<16x32xf32>
    %96 = vector.extract_strided_slice %93 {offsets = [1, 0, 0], sizes = [1, 16, 32], strides = [1, 1, 1]} : vector<4x16x32xf32> to vector<1x16x32xf32>
    %97 = vector.shape_cast %96 : vector<1x16x32xf32> to vector<16x32xf32>
    %98 = arith.addf %95, %97 : vector<16x32xf32>
    %99 = vector.extract_strided_slice %93 {offsets = [2, 0, 0], sizes = [1, 16, 32], strides = [1, 1, 1]} : vector<4x16x32xf32> to vector<1x16x32xf32>
    %100 = vector.shape_cast %99 : vector<1x16x32xf32> to vector<16x32xf32>
    %101 = arith.addf %98, %100 : vector<16x32xf32>
    %102 = vector.extract_strided_slice %93 {offsets = [3, 0, 0], sizes = [1, 16, 32], strides = [1, 1, 1]} : vector<4x16x32xf32> to vector<1x16x32xf32>
    %103 = vector.shape_cast %102 : vector<1x16x32xf32> to vector<16x32xf32>
    %104 = arith.addf %101, %103 : vector<16x32xf32>
    %105 = arith.addf %7, %104 : vector<16x32xf32>
    %106 = arith.mulf %105, %105 : vector<16x32xf32>
    %cst_27 = arith.constant dense<0.000000e+00> : vector<16xf32>
    %107 = vector.multi_reduction <add>, %106, %cst_27 [1] : vector<16x32xf32> to vector<16xf32>
    %108 = vector.shape_cast %107 : vector<16xf32> to vector<16x1xf32>
    %cst_28 = arith.constant 3.200000e+01 : f32
    %109 = vector.broadcast %cst_28 : f32 to vector<16x1xf32>
    %110 = arith.divf %108, %109 : vector<16x1xf32>
    %cst_29 = arith.constant 9.99999997E-7 : f32
    %111 = vector.broadcast %cst_29 : f32 to vector<16x1xf32>
    %112 = arith.addf %110, %111 : vector<16x1xf32>
    %113 = math.rsqrt %112 : vector<16x1xf32>
    %114 = vector.broadcast %113 : vector<16x1xf32> to vector<16x32xf32>
    %115 = arith.mulf %105, %114 : vector<16x32xf32>
    %116 = vector.broadcast %41 : vector<1x32xf32> to vector<16x32xf32>
    %117 = arith.mulf %115, %116 : vector<16x32xf32>
    %cst_30 = arith.constant dense<0.000000e+00> : vector<16x128xf32>
    %118 = tpu.matmul %117, %42, %cst_30 {dimension_numbers = #tpu.dot_dimension_numbers<[1], [0], [0], [1], [0, 0, 1, 1], [], []>} : vector<16x32xf32>, vector<32x128xf32>, vector<16x128xf32> -> vector<16x128xf32>
    %119 = vector.extract_strided_slice %118 {offsets = [0, 0], sizes = [16, 64], strides = [1, 1]} : vector<16x128xf32> to vector<16x64xf32>
    %120 = arith.mulf %119, %119 : vector<16x64xf32>
    %121 = arith.mulf %119, %120 : vector<16x64xf32>
    %cst_31 = arith.constant 4.471500e-02 : f32
    %122 = vector.broadcast %cst_31 : f32 to vector<16x64xf32>
    %123 = arith.mulf %122, %121 : vector<16x64xf32>
    %124 = arith.addf %119, %123 : vector<16x64xf32>
    %cst_32 = arith.constant 0.797884583 : f32
    %125 = vector.broadcast %cst_32 : f32 to vector<16x64xf32>
    %126 = arith.mulf %125, %124 : vector<16x64xf32>
    %127 = math.tanh %126 : vector<16x64xf32>
    %cst_33 = arith.constant 1.000000e+00 : f32
    %128 = vector.broadcast %cst_33 : f32 to vector<16x64xf32>
    %129 = arith.addf %128, %127 : vector<16x64xf32>
    %cst_34 = arith.constant 5.000000e-01 : f32
    %130 = vector.broadcast %cst_34 : f32 to vector<16x64xf32>
    %131 = arith.mulf %130, %129 : vector<16x64xf32>
    %132 = arith.mulf %119, %131 : vector<16x64xf32>
    %133 = vector.extract_strided_slice %118 {offsets = [0, 64], sizes = [16, 64], strides = [1, 1]} : vector<16x128xf32> to vector<16x64xf32>
    %134 = arith.mulf %132, %133 : vector<16x64xf32>
    %cst_35 = arith.constant dense<0.000000e+00> : vector<16x32xf32>
    %135 = tpu.matmul %134, %43, %cst_35 {dimension_numbers = #tpu.dot_dimension_numbers<[1], [0], [0], [1], [0, 0, 1, 1], [], []>} : vector<16x64xf32>, vector<64x32xf32>, vector<16x32xf32> -> vector<16x32xf32>
    %136 = arith.addf %105, %135 : vector<16x32xf32>
    %c160 = arith.constant 160 : index
    %c0_36 = arith.constant 0 : index
    %137 = vector.load %arg4[%c160, %c0_36] : memref<632x128xf32, #tpu.memory_space<vmem>>, vector<1x32xf32>
    %138 = arith.mulf %136, %136 : vector<16x32xf32>
    %cst_37 = arith.constant dense<0.000000e+00> : vector<16xf32>
    %139 = vector.multi_reduction <add>, %138, %cst_37 [1] : vector<16x32xf32> to vector<16xf32>
    %140 = vector.shape_cast %139 : vector<16xf32> to vector<16x1xf32>
    %cst_38 = arith.constant 3.200000e+01 : f32
    %141 = vector.broadcast %cst_38 : f32 to vector<16x1xf32>
    %142 = arith.divf %140, %141 : vector<16x1xf32>
    %cst_39 = arith.constant 9.99999997E-7 : f32
    %143 = vector.broadcast %cst_39 : f32 to vector<16x1xf32>
    %144 = arith.addf %142, %143 : vector<16x1xf32>
    %145 = math.rsqrt %144 : vector<16x1xf32>
    %146 = vector.broadcast %145 : vector<16x1xf32> to vector<16x32xf32>
    %147 = arith.mulf %136, %146 : vector<16x32xf32>
    %148 = vector.broadcast %137 : vector<1x32xf32> to vector<16x32xf32>
    %149 = arith.mulf %147, %148 : vector<16x32xf32>
    %150 = vector.shape_cast %149 : vector<16x32xf32> to vector<2x8x32xf32>
    %c0_40 = arith.constant 0 : index
    %c0_41 = arith.constant 0 : index
    %c0_42 = arith.constant 0 : index
    %151 = vector.load %arg5[%c0_40, %c0_41, %c0_42] : memref<2x8x32xf32, #tpu.memory_space<vmem>>, vector<2x8x32xf32>
    tpu.vector_store %arg5[%c0_40, %c0_41, %c0_42], %150 {strides = array<i32>} : memref<2x8x32xf32, #tpu.memory_space<vmem>>, vector<2x8x32xf32>,
    %c352 = arith.constant 352 : index
    %c0_43 = arith.constant 0 : index
    %152 = vector.load %arg4[%c352, %c0_43] : memref<632x128xf32, #tpu.memory_space<vmem>>, vector<1x32xf32>
    %c360 = arith.constant 360 : index
    %c0_44 = arith.constant 0 : index
    %153 = vector.load %arg4[%c360, %c0_44] : memref<632x128xf32, #tpu.memory_space<vmem>>, vector<32x96xf32>
    %c392 = arith.constant 392 : index
    %c0_45 = arith.constant 0 : index
    %154 = vector.load %arg4[%c392, %c0_45] : memref<632x128xf32, #tpu.memory_space<vmem>>, vector<32x32xf32>
    %c424 = arith.constant 424 : index
    %c0_46 = arith.constant 0 : index
    %155 = vector.load %arg4[%c424, %c0_46] : memref<632x128xf32, #tpu.memory_space<vmem>>, vector<1x32xf32>
    %c432 = arith.constant 432 : index
    %c0_47 = arith.constant 0 : index
    %156 = vector.load %arg4[%c432, %c0_47] : memref<632x128xf32, #tpu.memory_space<vmem>>, vector<32x32xf32>
    %c464 = arith.constant 464 : index
    %c0_48 = arith.constant 0 : index
    %157 = vector.load %arg4[%c464, %c0_48] : memref<632x128xf32, #tpu.memory_space<vmem>>, vector<32x64xf32>
    %c496 = arith.constant 496 : index
    %c0_49 = arith.constant 0 : index
    %158 = vector.load %arg4[%c496, %c0_49] : memref<632x128xf32, #tpu.memory_space<vmem>>, vector<32x32xf32>
    %c528 = arith.constant 528 : index
    %c0_50 = arith.constant 0 : index
    %159 = vector.load %arg4[%c528, %c0_50] : memref<632x128xf32, #tpu.memory_space<vmem>>, vector<1x32xf32>
    %c536 = arith.constant 536 : index
    %c0_51 = arith.constant 0 : index
    %160 = vector.load %arg4[%c536, %c0_51] : memref<632x128xf32, #tpu.memory_space<vmem>>, vector<32x128xf32>
    %c568 = arith.constant 568 : index
    %c0_52 = arith.constant 0 : index
    %161 = vector.load %arg4[%c568, %c0_52] : memref<632x128xf32, #tpu.memory_space<vmem>>, vector<64x32xf32>
    %162 = arith.mulf %14, %14 : vector<16x32xf32>
    %cst_53 = arith.constant dense<0.000000e+00> : vector<16xf32>
    %163 = vector.multi_reduction <add>, %162, %cst_53 [1] : vector<16x32xf32> to vector<16xf32>
    %164 = vector.shape_cast %163 : vector<16xf32> to vector<16x1xf32>
    %cst_54 = arith.constant 3.200000e+01 : f32
    %165 = vector.broadcast %cst_54 : f32 to vector<16x1xf32>
    %166 = arith.divf %164, %165 : vector<16x1xf32>
    %cst_55 = arith.constant 9.99999997E-7 : f32
    %167 = vector.broadcast %cst_55 : f32 to vector<16x1xf32>
    %168 = arith.addf %166, %167 : vector<16x1xf32>
    %169 = math.rsqrt %168 : vector<16x1xf32>
    %170 = vector.broadcast %169 : vector<16x1xf32> to vector<16x32xf32>
    %171 = arith.mulf %14, %170 : vector<16x32xf32>
    %172 = vector.broadcast %152 : vector<1x32xf32> to vector<16x32xf32>
    %173 = arith.mulf %171, %172 : vector<16x32xf32>
    %cst_56 = arith.constant dense<0.000000e+00> : vector<16x96xf32>
    %174 = tpu.matmul %173, %153, %cst_56 {dimension_numbers = #tpu.dot_dimension_numbers<[1], [0], [0], [1], [0, 0, 1, 1], [], []>} : vector<16x32xf32>, vector<32x96xf32>, vector<16x96xf32> -> vector<16x96xf32>
    %175 = vector.extract_strided_slice %174 {offsets = [0, 0], sizes = [16, 32], strides = [1, 1]} : vector<16x96xf32> to vector<16x32xf32>
    %176 = vector.extract_strided_slice %174 {offsets = [0, 32], sizes = [16, 32], strides = [1, 1]} : vector<16x96xf32> to vector<16x32xf32>
    %177 = vector.extract_strided_slice %174 {offsets = [0, 64], sizes = [16, 32], strides = [1, 1]} : vector<16x96xf32> to vector<16x32xf32>
    %178 = vector.shape_cast %175 : vector<16x32xf32> to vector<2x8x32xf32>
    %179 = vector.shape_cast %176 : vector<16x32xf32> to vector<2x8x32xf32>
    %180 = vector.shape_cast %177 : vector<16x32xf32> to vector<2x8x32xf32>
    %181 = vector.extract_strided_slice %178 {offsets = [0, 0, 0], sizes = [2, 8, 8], strides = [1, 1, 1]} : vector<2x8x32xf32> to vector<2x8x8xf32>
    %182 = vector.extract_strided_slice %178 {offsets = [0, 0, 8], sizes = [2, 8, 8], strides = [1, 1, 1]} : vector<2x8x32xf32> to vector<2x8x8xf32>
    %183 = vector.extract_strided_slice %178 {offsets = [0, 0, 16], sizes = [2, 8, 8], strides = [1, 1, 1]} : vector<2x8x32xf32> to vector<2x8x8xf32>
    %184 = vector.extract_strided_slice %178 {offsets = [0, 0, 24], sizes = [2, 8, 8], strides = [1, 1, 1]} : vector<2x8x32xf32> to vector<2x8x8xf32>
    %185 = tpu.concatenate %181, %182, %183, %184 in 0 : vector<2x8x8xf32>, vector<2x8x8xf32>, vector<2x8x8xf32>, vector<2x8x8xf32> -> vector<8x8x8xf32>
    %186 = vector.extract_strided_slice %179 {offsets = [0, 0, 0], sizes = [2, 8, 8], strides = [1, 1, 1]} : vector<2x8x32xf32> to vector<2x8x8xf32>
    %187 = vector.extract_strided_slice %179 {offsets = [0, 0, 8], sizes = [2, 8, 8], strides = [1, 1, 1]} : vector<2x8x32xf32> to vector<2x8x8xf32>
    %188 = vector.extract_strided_slice %179 {offsets = [0, 0, 16], sizes = [2, 8, 8], strides = [1, 1, 1]} : vector<2x8x32xf32> to vector<2x8x8xf32>
    %189 = vector.extract_strided_slice %179 {offsets = [0, 0, 24], sizes = [2, 8, 8], strides = [1, 1, 1]} : vector<2x8x32xf32> to vector<2x8x8xf32>
    %190 = tpu.concatenate %186, %187, %188, %189 in 0 : vector<2x8x8xf32>, vector<2x8x8xf32>, vector<2x8x8xf32>, vector<2x8x8xf32> -> vector<8x8x8xf32>
    %191 = vector.extract_strided_slice %180 {offsets = [0, 0, 0], sizes = [2, 8, 8], strides = [1, 1, 1]} : vector<2x8x32xf32> to vector<2x8x8xf32>
    %192 = vector.extract_strided_slice %180 {offsets = [0, 0, 8], sizes = [2, 8, 8], strides = [1, 1, 1]} : vector<2x8x32xf32> to vector<2x8x8xf32>
    %193 = vector.extract_strided_slice %180 {offsets = [0, 0, 16], sizes = [2, 8, 8], strides = [1, 1, 1]} : vector<2x8x32xf32> to vector<2x8x8xf32>
    %194 = vector.extract_strided_slice %180 {offsets = [0, 0, 24], sizes = [2, 8, 8], strides = [1, 1, 1]} : vector<2x8x32xf32> to vector<2x8x8xf32>
    %195 = tpu.concatenate %191, %192, %193, %194 in 0 : vector<2x8x8xf32>, vector<2x8x8xf32>, vector<2x8x8xf32>, vector<2x8x8xf32> -> vector<8x8x8xf32>
    "tpu.trace_start"() <{level = 10 : i32, message = "nqd,nkd->nqk"}> : () -> ()
    %cst_57 = arith.constant dense<0.000000e+00> : vector<8x8x8xf32>
    %196 = tpu.matmul %185, %190, %cst_57 {dimension_numbers = #tpu.dot_dimension_numbers<[2], [2], [1], [1], [0, 0, 0, 1, 1, 1], [0], [0]>} : vector<8x8x8xf32>, vector<8x8x8xf32>, vector<8x8x8xf32> -> vector<8x8x8xf32>
    "tpu.trace_stop"() : () -> ()
    %197 = arith.addf %196, %33 : vector<8x8x8xf32>
    %cst_58 = arith.constant dense<0xFF800000> : vector<8x8xf32>
    %198 = vector.multi_reduction <maximumf>, %197, %cst_58 [2] : vector<8x8x8xf32> to vector<8x8xf32>
    %199 = vector.shape_cast %198 : vector<8x8xf32> to vector<8x8x1xf32>
    %200 = vector.broadcast %199 : vector<8x8x1xf32> to vector<8x8x8xf32>
    %201 = arith.subf %197, %200 : vector<8x8x8xf32>
    %202 = math.exp %201 : vector<8x8x8xf32>
    %cst_59 = arith.constant dense<0.000000e+00> : vector<8x8xf32>
    %203 = vector.multi_reduction <add>, %202, %cst_59 [2] : vector<8x8x8xf32> to vector<8x8xf32>
    %204 = vector.shape_cast %203 : vector<8x8xf32> to vector<8x8x1xf32>
    %205 = tpu.reciprocal %204 {approx = true} : vector<8x8x1xf32> -> vector<8x8x1xf32>
    %206 = vector.broadcast %205 : vector<8x8x1xf32> to vector<8x8x8xf32>
    %207 = arith.mulf %202, %206 : vector<8x8x8xf32>
    "tpu.trace_start"() <{level = 10 : i32, message = "nqk,nkd->nqd"}> : () -> ()
    %cst_60 = arith.constant dense<0.000000e+00> : vector<8x8x8xf32>
    %208 = tpu.matmul %207, %195, %cst_60 {dimension_numbers = #tpu.dot_dimension_numbers<[2], [1], [1], [2], [0, 0, 0, 1, 1, 2], [0], [0]>} : vector<8x8x8xf32>, vector<8x8x8xf32>, vector<8x8x8xf32> -> vector<8x8x8xf32>
    "tpu.trace_stop"() : () -> ()
    %209 = vector.shape_cast %208 : vector<8x8x8xf32> to vector<4x16x8xf32>
    %210 = vector.shape_cast %154 : vector<32x32xf32> to vector<4x8x32xf32>
    "tpu.trace_start"() <{level = 10 : i32, message = "hmd,hde->hme"}> : () -> ()
    %cst_61 = arith.constant dense<0.000000e+00> : vector<4x16x32xf32>
    %211 = tpu.matmul %209, %210, %cst_61 {dimension_numbers = #tpu.dot_dimension_numbers<[2], [1], [1], [2], [0, 0, 0, 1, 1, 2], [0], [0]>} : vector<4x16x8xf32>, vector<4x8x32xf32>, vector<4x16x32xf32> -> vector<4x16x32xf32>
    "tpu.trace_stop"() : () -> ()
    %212 = vector.extract_strided_slice %211 {offsets = [0, 0, 0], sizes = [1, 16, 32], strides = [1, 1, 1]} : vector<4x16x32xf32> to vector<1x16x32xf32>
    %213 = vector.shape_cast %212 : vector<1x16x32xf32> to vector<16x32xf32>
    %214 = vector.extract_strided_slice %211 {offsets = [1, 0, 0], sizes = [1, 16, 32], strides = [1, 1, 1]} : vector<4x16x32xf32> to vector<1x16x32xf32>
    %215 = vector.shape_cast %214 : vector<1x16x32xf32> to vector<16x32xf32>
    %216 = arith.addf %213, %215 : vector<16x32xf32>
    %217 = vector.extract_strided_slice %211 {offsets = [2, 0, 0], sizes = [1, 16, 32], strides = [1, 1, 1]} : vector<4x16x32xf32> to vector<1x16x32xf32>
    %218 = vector.shape_cast %217 : vector<1x16x32xf32> to vector<16x32xf32>
    %219 = arith.addf %216, %218 : vector<16x32xf32>
    %220 = vector.extract_strided_slice %211 {offsets = [3, 0, 0], sizes = [1, 16, 32], strides = [1, 1, 1]} : vector<4x16x32xf32> to vector<1x16x32xf32>
    %221 = vector.shape_cast %220 : vector<1x16x32xf32> to vector<16x32xf32>
    %222 = arith.addf %219, %221 : vector<16x32xf32>
    %223 = arith.addf %14, %222 : vector<16x32xf32>
    %224 = arith.mulf %223, %223 : vector<16x32xf32>
    %cst_62 = arith.constant dense<0.000000e+00> : vector<16xf32>
    %225 = vector.multi_reduction <add>, %224, %cst_62 [1] : vector<16x32xf32> to vector<16xf32>
    %226 = vector.shape_cast %225 : vector<16xf32> to vector<16x1xf32>
    %cst_63 = arith.constant 3.200000e+01 : f32
    %227 = vector.broadcast %cst_63 : f32 to vector<16x1xf32>
    %228 = arith.divf %226, %227 : vector<16x1xf32>
    %cst_64 = arith.constant 9.99999997E-7 : f32
    %229 = vector.broadcast %cst_64 : f32 to vector<16x1xf32>
    %230 = arith.addf %228, %229 : vector<16x1xf32>
    %231 = math.rsqrt %230 : vector<16x1xf32>
    %232 = vector.broadcast %231 : vector<16x1xf32> to vector<16x32xf32>
    %233 = arith.mulf %223, %232 : vector<16x32xf32>
    %234 = vector.broadcast %155 : vector<1x32xf32> to vector<16x32xf32>
    %235 = arith.mulf %233, %234 : vector<16x32xf32>
    %cst_65 = arith.constant dense<0.000000e+00> : vector<16x32xf32>
    %236 = tpu.matmul %235, %156, %cst_65 {dimension_numbers = #tpu.dot_dimension_numbers<[1], [0], [0], [1], [0, 0, 1, 1], [], []>} : vector<16x32xf32>, vector<32x32xf32>, vector<16x32xf32> -> vector<16x32xf32>
    %cst_66 = arith.constant dense<0.000000e+00> : vector<16x64xf32>
    %237 = tpu.matmul %149, %157, %cst_66 {dimension_numbers = #tpu.dot_dimension_numbers<[1], [0], [0], [1], [0, 0, 1, 1], [], []>} : vector<16x32xf32>, vector<32x64xf32>, vector<16x64xf32> -> vector<16x64xf32>
    %238 = vector.extract_strided_slice %237 {offsets = [0, 0], sizes = [16, 32], strides = [1, 1]} : vector<16x64xf32> to vector<16x32xf32>
    %239 = vector.extract_strided_slice %237 {offsets = [0, 32], sizes = [16, 32], strides = [1, 1]} : vector<16x64xf32> to vector<16x32xf32>
    %240 = vector.shape_cast %236 : vector<16x32xf32> to vector<2x8x32xf32>
    %241 = vector.shape_cast %238 : vector<16x32xf32> to vector<2x8x32xf32>
    %242 = vector.shape_cast %239 : vector<16x32xf32> to vector<2x8x32xf32>
    %243 = vector.extract_strided_slice %240 {offsets = [0, 0, 0], sizes = [2, 8, 8], strides = [1, 1, 1]} : vector<2x8x32xf32> to vector<2x8x8xf32>
    %244 = vector.extract_strided_slice %240 {offsets = [0, 0, 8], sizes = [2, 8, 8], strides = [1, 1, 1]} : vector<2x8x32xf32> to vector<2x8x8xf32>
    %245 = vector.extract_strided_slice %240 {offsets = [0, 0, 16], sizes = [2, 8, 8], strides = [1, 1, 1]} : vector<2x8x32xf32> to vector<2x8x8xf32>
    %246 = vector.extract_strided_slice %240 {offsets = [0, 0, 24], sizes = [2, 8, 8], strides = [1, 1, 1]} : vector<2x8x32xf32> to vector<2x8x8xf32>
    %247 = tpu.concatenate %243, %244, %245, %246 in 0 : vector<2x8x8xf32>, vector<2x8x8xf32>, vector<2x8x8xf32>, vector<2x8x8xf32> -> vector<8x8x8xf32>
    %248 = vector.extract_strided_slice %241 {offsets = [0, 0, 0], sizes = [2, 8, 8], strides = [1, 1, 1]} : vector<2x8x32xf32> to vector<2x8x8xf32>
    %249 = vector.extract_strided_slice %241 {offsets = [0, 0, 8], sizes = [2, 8, 8], strides = [1, 1, 1]} : vector<2x8x32xf32> to vector<2x8x8xf32>
    %250 = vector.extract_strided_slice %241 {offsets = [0, 0, 16], sizes = [2, 8, 8], strides = [1, 1, 1]} : vector<2x8x32xf32> to vector<2x8x8xf32>
    %251 = vector.extract_strided_slice %241 {offsets = [0, 0, 24], sizes = [2, 8, 8], strides = [1, 1, 1]} : vector<2x8x32xf32> to vector<2x8x8xf32>
    %252 = tpu.concatenate %248, %249, %250, %251 in 0 : vector<2x8x8xf32>, vector<2x8x8xf32>, vector<2x8x8xf32>, vector<2x8x8xf32> -> vector<8x8x8xf32>
    %253 = vector.extract_strided_slice %242 {offsets = [0, 0, 0], sizes = [2, 8, 8], strides = [1, 1, 1]} : vector<2x8x32xf32> to vector<2x8x8xf32>
    %254 = vector.extract_strided_slice %242 {offsets = [0, 0, 8], sizes = [2, 8, 8], strides = [1, 1, 1]} : vector<2x8x32xf32> to vector<2x8x8xf32>
    %255 = vector.extract_strided_slice %242 {offsets = [0, 0, 16], sizes = [2, 8, 8], strides = [1, 1, 1]} : vector<2x8x32xf32> to vector<2x8x8xf32>
    %256 = vector.extract_strided_slice %242 {offsets = [0, 0, 24], sizes = [2, 8, 8], strides = [1, 1, 1]} : vector<2x8x32xf32> to vector<2x8x8xf32>
    %257 = tpu.concatenate %253, %254, %255, %256 in 0 : vector<2x8x8xf32>, vector<2x8x8xf32>, vector<2x8x8xf32>, vector<2x8x8xf32> -> vector<8x8x8xf32>
    "tpu.trace_start"() <{level = 10 : i32, message = "nqd,nkd->nqk"}> : () -> ()
    %cst_67 = arith.constant dense<0.000000e+00> : vector<8x8x8xf32>
    %258 = tpu.matmul %247, %252, %cst_67 {dimension_numbers = #tpu.dot_dimension_numbers<[2], [2], [1], [1], [0, 0, 0, 1, 1, 1], [0], [0]>} : vector<8x8x8xf32>, vector<8x8x8xf32>, vector<8x8x8xf32> -> vector<8x8x8xf32>
    "tpu.trace_stop"() : () -> ()
    %259 = arith.addf %258, %37 : vector<8x8x8xf32>
    %cst_68 = arith.constant dense<0xFF800000> : vector<8x8xf32>
    %260 = vector.multi_reduction <maximumf>, %259, %cst_68 [2] : vector<8x8x8xf32> to vector<8x8xf32>
    %261 = vector.shape_cast %260 : vector<8x8xf32> to vector<8x8x1xf32>
    %262 = vector.broadcast %261 : vector<8x8x1xf32> to vector<8x8x8xf32>
    %263 = arith.subf %259, %262 : vector<8x8x8xf32>
    %264 = math.exp %263 : vector<8x8x8xf32>
    %cst_69 = arith.constant dense<0.000000e+00> : vector<8x8xf32>
    %265 = vector.multi_reduction <add>, %264, %cst_69 [2] : vector<8x8x8xf32> to vector<8x8xf32>
    %266 = vector.shape_cast %265 : vector<8x8xf32> to vector<8x8x1xf32>
    %267 = tpu.reciprocal %266 {approx = true} : vector<8x8x1xf32> -> vector<8x8x1xf32>
    %268 = vector.broadcast %267 : vector<8x8x1xf32> to vector<8x8x8xf32>
    %269 = arith.mulf %264, %268 : vector<8x8x8xf32>
    "tpu.trace_start"() <{level = 10 : i32, message = "nqk,nkd->nqd"}> : () -> ()
    %cst_70 = arith.constant dense<0.000000e+00> : vector<8x8x8xf32>
    %270 = tpu.matmul %269, %257, %cst_70 {dimension_numbers = #tpu.dot_dimension_numbers<[2], [1], [1], [2], [0, 0, 0, 1, 1, 2], [0], [0]>} : vector<8x8x8xf32>, vector<8x8x8xf32>, vector<8x8x8xf32> -> vector<8x8x8xf32>
    "tpu.trace_stop"() : () -> ()
    %271 = vector.shape_cast %270 : vector<8x8x8xf32> to vector<4x16x8xf32>
    %272 = vector.shape_cast %158 : vector<32x32xf32> to vector<4x8x32xf32>
    "tpu.trace_start"() <{level = 10 : i32, message = "hmd,hde->hme"}> : () -> ()
    %cst_71 = arith.constant dense<0.000000e+00> : vector<4x16x32xf32>
    %273 = tpu.matmul %271, %272, %cst_71 {dimension_numbers = #tpu.dot_dimension_numbers<[2], [1], [1], [2], [0, 0, 0, 1, 1, 2], [0], [0]>} : vector<4x16x8xf32>, vector<4x8x32xf32>, vector<4x16x32xf32> -> vector<4x16x32xf32>
    "tpu.trace_stop"() : () -> ()
    %274 = vector.extract_strided_slice %273 {offsets = [0, 0, 0], sizes = [1, 16, 32], strides = [1, 1, 1]} : vector<4x16x32xf32> to vector<1x16x32xf32>
    %275 = vector.shape_cast %274 : vector<1x16x32xf32> to vector<16x32xf32>
    %276 = vector.extract_strided_slice %273 {offsets = [1, 0, 0], sizes = [1, 16, 32], strides = [1, 1, 1]} : vector<4x16x32xf32> to vector<1x16x32xf32>
    %277 = vector.shape_cast %276 : vector<1x16x32xf32> to vector<16x32xf32>
    %278 = arith.addf %275, %277 : vector<16x32xf32>
    %279 = vector.extract_strided_slice %273 {offsets = [2, 0, 0], sizes = [1, 16, 32], strides = [1, 1, 1]} : vector<4x16x32xf32> to vector<1x16x32xf32>
    %280 = vector.shape_cast %279 : vector<1x16x32xf32> to vector<16x32xf32>
    %281 = arith.addf %278, %280 : vector<16x32xf32>
    %282 = vector.extract_strided_slice %273 {offsets = [3, 0, 0], sizes = [1, 16, 32], strides = [1, 1, 1]} : vector<4x16x32xf32> to vector<1x16x32xf32>
    %283 = vector.shape_cast %282 : vector<1x16x32xf32> to vector<16x32xf32>
    %284 = arith.addf %281, %283 : vector<16x32xf32>
    %285 = arith.addf %223, %284 : vector<16x32xf32>
    %286 = arith.mulf %285, %285 : vector<16x32xf32>
    %cst_72 = arith.constant dense<0.000000e+00> : vector<16xf32>
    %287 = vector.multi_reduction <add>, %286, %cst_72 [1] : vector<16x32xf32> to vector<16xf32>
    %288 = vector.shape_cast %287 : vector<16xf32> to vector<16x1xf32>
    %cst_73 = arith.constant 3.200000e+01 : f32
    %289 = vector.broadcast %cst_73 : f32 to vector<16x1xf32>
    %290 = arith.divf %288, %289 : vector<16x1xf32>
    %cst_74 = arith.constant 9.99999997E-7 : f32
    %291 = vector.broadcast %cst_74 : f32 to vector<16x1xf32>
    %292 = arith.addf %290, %291 : vector<16x1xf32>
    %293 = math.rsqrt %292 : vector<16x1xf32>
    %294 = vector.broadcast %293 : vector<16x1xf32> to vector<16x32xf32>
    %295 = arith.mulf %285, %294 : vector<16x32xf32>
    %296 = vector.broadcast %159 : vector<1x32xf32> to vector<16x32xf32>
    %297 = arith.mulf %295, %296 : vector<16x32xf32>
    %cst_75 = arith.constant dense<0.000000e+00> : vector<16x128xf32>
    %298 = tpu.matmul %297, %160, %cst_75 {dimension_numbers = #tpu.dot_dimension_numbers<[1], [0], [0], [1], [0, 0, 1, 1], [], []>} : vector<16x32xf32>, vector<32x128xf32>, vector<16x128xf32> -> vector<16x128xf32>
    %299 = vector.extract_strided_slice %298 {offsets = [0, 0], sizes = [16, 64], strides = [1, 1]} : vector<16x128xf32> to vector<16x64xf32>
    %300 = arith.mulf %299, %299 : vector<16x64xf32>
    %301 = arith.mulf %299, %300 : vector<16x64xf32>
    %cst_76 = arith.constant 4.471500e-02 : f32
    %302 = vector.broadcast %cst_76 : f32 to vector<16x64xf32>
    %303 = arith.mulf %302, %301 : vector<16x64xf32>
    %304 = arith.addf %299, %303 : vector<16x64xf32>
    %cst_77 = arith.constant 0.797884583 : f32
    %305 = vector.broadcast %cst_77 : f32 to vector<16x64xf32>
    %306 = arith.mulf %305, %304 : vector<16x64xf32>
    %307 = math.tanh %306 : vector<16x64xf32>
    %cst_78 = arith.constant 1.000000e+00 : f32
    %308 = vector.broadcast %cst_78 : f32 to vector<16x64xf32>
    %309 = arith.addf %308, %307 : vector<16x64xf32>
    %cst_79 = arith.constant 5.000000e-01 : f32
    %310 = vector.broadcast %cst_79 : f32 to vector<16x64xf32>
    %311 = arith.mulf %310, %309 : vector<16x64xf32>
    %312 = arith.mulf %299, %311 : vector<16x64xf32>
    %313 = vector.extract_strided_slice %298 {offsets = [0, 64], sizes = [16, 64], strides = [1, 1]} : vector<16x128xf32> to vector<16x64xf32>
    %314 = arith.mulf %312, %313 : vector<16x64xf32>
    %cst_80 = arith.constant dense<0.000000e+00> : vector<16x32xf32>
    %315 = tpu.matmul %314, %161, %cst_80 {dimension_numbers = #tpu.dot_dimension_numbers<[1], [0], [0], [1], [0, 0, 1, 1], [], []>} : vector<16x64xf32>, vector<64x32xf32>, vector<16x32xf32> -> vector<16x32xf32>
    %316 = arith.addf %285, %315 : vector<16x32xf32>
    %c168 = arith.constant 168 : index
    %c0_81 = arith.constant 0 : index
    %317 = vector.load %arg4[%c168, %c0_81] : memref<632x128xf32, #tpu.memory_space<vmem>>, vector<1x32xf32>
    %318 = arith.mulf %316, %316 : vector<16x32xf32>
    %cst_82 = arith.constant dense<0.000000e+00> : vector<16xf32>
    %319 = vector.multi_reduction <add>, %318, %cst_82 [1] : vector<16x32xf32> to vector<16xf32>
    %320 = vector.shape_cast %319 : vector<16xf32> to vector<16x1xf32>
    %cst_83 = arith.constant 3.200000e+01 : f32
    %321 = vector.broadcast %cst_83 : f32 to vector<16x1xf32>
    %322 = arith.divf %320, %321 : vector<16x1xf32>
    %cst_84 = arith.constant 9.99999997E-7 : f32
    %323 = vector.broadcast %cst_84 : f32 to vector<16x1xf32>
    %324 = arith.addf %322, %323 : vector<16x1xf32>
    %325 = math.rsqrt %324 : vector<16x1xf32>
    %326 = vector.broadcast %325 : vector<16x1xf32> to vector<16x32xf32>
    %327 = arith.mulf %316, %326 : vector<16x32xf32>
    %328 = vector.broadcast %317 : vector<1x32xf32> to vector<16x32xf32>
    %329 = arith.mulf %327, %328 : vector<16x32xf32>
    %c128 = arith.constant 128 : index
    %c0_85 = arith.constant 0 : index
    %330 = vector.load %arg4[%c128, %c0_85] : memref<632x128xf32, #tpu.memory_space<vmem>>, vector<32x128xf32>
    %cst_86 = arith.constant dense<0.000000e+00> : vector<16x128xf32>
    %331 = tpu.matmul %329, %330, %cst_86 {dimension_numbers = #tpu.dot_dimension_numbers<[1], [0], [0], [1], [0, 0, 1, 1], [], []>} : vector<16x32xf32>, vector<32x128xf32>, vector<16x128xf32> -> vector<16x128xf32>
    %332 = vector.shape_cast %331 : vector<16x128xf32> to vector<2x8x128xf32>
    %c0_87 = arith.constant 0 : index
    %c0_88 = arith.constant 0 : index
    %c0_89 = arith.constant 0 : index
    %333 = vector.load %arg6[%c0_87, %c0_88, %c0_89] : memref<2x8x128xf32, #tpu.memory_space<vmem>>, vector<2x8x128xf32>
    tpu.vector_store %arg6[%c0_87, %c0_88, %c0_89], %332 {strides = array<i32>} : memref<2x8x128xf32, #tpu.memory_space<vmem>>, vector<2x8x128xf32>,
    %cst_90 = arith.constant dense<0xFF800000> : vector<16xf32>
    %334 = vector.multi_reduction <maximumf>, %331, %cst_90 [1] : vector<16x128xf32> to vector<16xf32>
    %335 = vector.shape_cast %334 : vector<16xf32> to vector<16x1xf32>
    %336 = vector.broadcast %335 : vector<16x1xf32> to vector<16x128xf32>
    %337 = arith.subf %331, %336 : vector<16x128xf32>
    %338 = math.exp %337 : vector<16x128xf32>
    %cst_91 = arith.constant dense<0.000000e+00> : vector<16xf32>
    %339 = vector.multi_reduction <add>, %338, %cst_91 [1] : vector<16x128xf32> to vector<16xf32>
    %340 = vector.shape_cast %339 : vector<16xf32> to vector<16x1xf32>
    %341 = math.log %340 : vector<16x1xf32>
    %342 = vector.broadcast %341 : vector<16x1xf32> to vector<16x128xf32>
    %343 = arith.subf %337, %342 : vector<16x128xf32>
    %c0_92 = arith.constant 0 : index
    %c0_93 = arith.constant 0 : index
    %344 = vector.load %arg2[%c0_92, %c0_93] : memref<16x1xi32, #tpu.memory_space<vmem>>, vector<16x1xi32>
    %c-100_i32 = arith.constant -100 : i32
    %345 = vector.broadcast %c-100_i32 : i32 to vector<16x1xi32>
    %346 = arith.cmpi ne, %344, %345 : vector<16x1xi32>
    %347 = arith.extui %346 : vector<16x1xi1> to vector<16x1xi32>
    %348 = arith.sitofp %347 : vector<16x1xi32> to vector<16x1xf32>
    %c-100_i32_94 = arith.constant -100 : i32
    %349 = vector.broadcast %c-100_i32_94 : i32 to vector<16x1xi32>
    %350 = arith.cmpi eq, %344, %349 : vector<16x1xi32>
    %c0_i32 = arith.constant 0 : i32
    %351 = vector.broadcast %c0_i32 : i32 to vector<16x1xi32>
    %352 = arith.select %350, %351, %344 : vector<16x1xi1>, vector<16x1xi32>
    %353 = tpu.iota {dimensions = array<i32: 1>} : vector<16x128xi32>
    %354 = vector.broadcast %352 : vector<16x1xi32> to vector<16x128xi32>
    %355 = arith.cmpi eq, %353, %354 : vector<16x128xi32>
    %356 = arith.extui %355 : vector<16x128xi1> to vector<16x128xi32>
    %357 = arith.sitofp %356 : vector<16x128xi32> to vector<16x128xf32>
    %358 = arith.mulf %343, %357 : vector<16x128xf32>
    %cst_95 = arith.constant dense<0.000000e+00> : vector<16xf32>
    %359 = vector.multi_reduction <add>, %358, %cst_95 [1] : vector<16x128xf32> to vector<16xf32>
    %360 = vector.shape_cast %359 : vector<16xf32> to vector<16x1xf32>
    %cst_96 = arith.constant 0.000000e+00 : f32
    %361 = vector.broadcast %cst_96 : f32 to vector<16x1xf32>
    %362 = arith.subf %361, %360 : vector<16x1xf32>
    %363 = arith.mulf %362, %348 : vector<16x1xf32>
    %364 = vector.shape_cast %363 : vector<16x1xf32> to vector<1x16x1xf32>
    %cst_97 = arith.constant dense<0.000000e+00> : vector<1xf32>
    %365 = vector.multi_reduction <add>, %364, %cst_97 [1, 2] : vector<1x16x1xf32> to vector<1xf32>
    %366 = vector.shape_cast %365 : vector<1xf32> to vector<1x1x1xf32>
    %367 = vector.extract %366[0, 0, 0] : f32 from vector<1x1x1xf32>
    %368 = vector.broadcast %367 : f32 to vector<1x1xf32>
    %369 = vector.shape_cast %348 : vector<16x1xf32> to vector<1x16x1xf32>
    %cst_98 = arith.constant dense<0.000000e+00> : vector<1xf32>
    %370 = vector.multi_reduction <add>, %369, %cst_98 [1, 2] : vector<1x16x1xf32> to vector<1xf32>
    %371 = vector.shape_cast %370 : vector<1xf32> to vector<1x1x1xf32>
    %372 = vector.extract %371[0, 0, 0] : f32 from vector<1x1x1xf32>
    %373 = vector.broadcast %372 : f32 to vector<1x1xf32>
    %cst_99 = arith.constant 1.000000e+00 : f32
    %374 = vector.broadcast %cst_99 : f32 to vector<1x1xf32>
    %375 = arith.maximumf %373, %374 : vector<1x1xf32>
    %376 = arith.divf %368, %375 : vector<1x1xf32>
    %c0_100 = arith.constant 0 : index
    %c0_101 = arith.constant 0 : index
    %377 = vector.load %arg7[%c0_100, %c0_101] : memref<1x1xf32, #tpu.memory_space<vmem>>, vector<1x1xf32>
    tpu.vector_store %arg7[%c0_100, %c0_101], %376 {strides = array<i32>} : memref<1x1xf32, #tpu.memory_space<vmem>>, vector<1x1xf32>,
    return
  }
}

</mosaic_0001>

<llo_original>
// kernel: medical_llama7b_forward.1
$region0: #{medical_llama7b_forward.1}
  #allocation0 [shape = 'u32[]', space=smem, size = 0x4, offset = 0x4, fixed_abs, tag = 'smem constant byte address 0x4 - core index']
  #allocation1 [shape = 'u32[72,128]{1,0:T(1,128)}', space=vmem, size = 0x9000, scoped, tag = 'internal scratch']
  %s0 = inlined_call_operand.vmem [shape: s32[16,1], index: 0, kind: input, shape index: {}]
  %s1 = inlined_call_operand.vmem [shape: s32[16,1], index: 1, kind: input, shape index: {}]
  %s2 = inlined_call_operand.vmem [shape: s32[16,1], index: 2, kind: input, shape index: {}]
  %s3 = inlined_call_operand.vmem [shape: f32[2,8], index: 3, kind: input, shape index: {}]
  %s4 = inlined_call_operand.vmem [shape: f32[632,128], index: 4, kind: input, shape index: {}]
  %s5 = inlined_call_operand.hbm [shape: f32[2,8,32], index: 5, kind: output, shape index: {0}]
  %s6 = inlined_call_operand.hbm [shape: f32[2,8,128], index: 6, kind: output, shape index: {1}]
  %s7 = inlined_call_operand.hbm [shape: f32[1,1], index: 7, kind: output, shape index: {2}]
  %8 = xla_tuple %s5, %s6, %s7
  %s9 = sld [smem:[#allocation0]]
  $region46: #{medical_llama7b_forward.1} parent=0
    _
  %s11 = ssub.s32 1, %s9
  %s12 = scalar_select 0, %s11, %s9
  $region1: #{medical_llama7b_forward.1} parent=0
    #allocation2 [shape = 'u8[8192]{0}', space=vmem, size = 0x2000, scoped, tag = 'output window, operand 0, single buffered']
    #allocation3 [shape = 's32[1]{0}', space=sflag, size = 0x4, scoped, tag = 'scoped memory for medical_llama7b_forward.1']
    #allocation4 [shape = 'u8[8192]{0}', space=vmem, size = 0x2000, scoped, tag = 'output window, operand 1, single buffered']
    #allocation5 [shape = 's32[1]{0}', space=sflag, size = 0x4, scoped, tag = 'scoped memory for medical_llama7b_forward.1']
    #allocation6 [shape = 'u8[512]{0}', space=vmem, size = 0x400, scoped, tag = 'output window, operand 2, single buffered']
    %13 = vsyncpa [#allocation3], 0
    %14 = vsyncpa [#allocation5], 0
    // Predicated region
    $region2: #{medical_llama7b_forward.1} parent=1 // pred_check
      _
    $region3: #{medical_llama7b_forward.1} parent=1 // pred_check_branch
      %16 = sbr.rel (0) target = $region5
    $region4: #{medical_llama7b_forward.1} parent=1 // pred_region
      _
    $region5: #{medical_llama7b_forward.1} parent=1 // pred_fallthru
      _
    // Predicated region
    $region6: #{medical_llama7b_forward.1} parent=1 // pred_check
      _
    $region7: #{medical_llama7b_forward.1} parent=1 // pred_check_branch
      %18 = sbr.rel (0) target = $region9
    $region8: #{medical_llama7b_forward.1} parent=1 // pred_region
      _
    $region9: #{medical_llama7b_forward.1} parent=1 // pred_fallthru
      _
    // Predicated region
    $region10: #{medical_llama7b_forward.1} parent=1 // pred_check
      _
    $region11: #{medical_llama7b_forward.1} parent=1 // pred_check_branch
      %20 = sbr.rel (0) target = $region13
    $region12: #{medical_llama7b_forward.1} parent=1 // pred_region
      _
    $region13: #{medical_llama7b_forward.1} parent=1 // pred_fallthru
      _
    // Predicated region
    $region14: #{medical_llama7b_forward.1} parent=1 // pred_check
      _
    $region15: #{medical_llama7b_forward.1} parent=1 // pred_check_branch
      %22 = sbr.rel (0) target = $region17
    $region16: #{medical_llama7b_forward.1} parent=1 // pred_region
      _
    $region17: #{medical_llama7b_forward.1} parent=1 // pred_fallthru
      _
    // Predicated region
    $region18: #{medical_llama7b_forward.1} parent=1 // pred_check
      _
    $region19: #{medical_llama7b_forward.1} parent=1 // pred_check_branch
      %24 = sbr.rel (0) target = $region21
    $region20: #{medical_llama7b_forward.1} parent=1 // pred_region
      _
    $region21: #{medical_llama7b_forward.1} parent=1 // pred_fallthru
      _
    %v25 = vld [vmem:[%s4] sm:$0xff]
    %v26 = vld [vmem:[%s4 + $0x8] sm:$0xff]
    %v27 = vld [vmem:[%s4 + $0x10] sm:$0xff]
    %v28 = vld [vmem:[%s4 + $0x18] sm:$0xff]
    %v29 = vld [vmem:[%s4 + $0x20] sm:$0xff]
    %v30 = vld [vmem:[%s4 + $0x28] sm:$0xff]
    %v31 = vld [vmem:[%s4 + $0x30] sm:$0xff]
    %v32 = vld [vmem:[%s4 + $0x38] sm:$0xff]
    %v33 = vld [vmem:[%s4 + $0x40] sm:$0xff]
    %v34 = vld [vmem:[%s4 + $0x48] sm:$0xff]
    %v35 = vld [vmem:[%s4 + $0x50] sm:$0xff]
    %v36 = vld [vmem:[%s4 + $0x58] sm:$0xff]
    %v37 = vld [vmem:[%s4 + $0x60] sm:$0xff]
    %v38 = vld [vmem:[%s4 + $0x68] sm:$0xff]
    %v39 = vld [vmem:[%s4 + $0x70] sm:$0xff]
    %v40 = vld [vmem:[%s4 + $0x78] sm:$0xff]
    %v41 = vld [vmem:[%s0] sm:$0xff]
    %v42 = vld [vmem:[%s0 + $0x8] sm:$0xff]
    %v43 = vlaneseq
    %v44 = vand.u32 %v43, 127
    %45 = vset.pattern.permute.xlu0 0
    %46 = vperm.xlu0 %45, %v41
    %v47 = vpop.permute.xlu0 %46
    %48 = vset.pattern.permute.xlu0 0
    %49 = vperm.xlu0 %48, %v42
    %v50 = vpop.permute.xlu0 %49
    %vm51 = vcmp.eq.s32.totalorder %v44, %v47
    %vm52 = vcmp.eq.s32.totalorder %v44, %v50
    %v53 = vsel %vm51, 1, 0
    %v54 = vsel %vm52, 1, 0
    %v55 = vcvt.s32.f32 %v53
    %v56 = vcvt.s32.f32 %v54
    %57 = vmatpush.msra.mxu0 %v40
    %58 = vmatpush.msra.mxu0 %v39
    %59 = vmatpush.msra.mxu0 %v38
    %60 = vmatpush.msra.mxu0 %v37
    %61 = vmatpush.msra.mxu0 %v36
    %62 = vmatpush.msra.mxu0 %v35
    %63 = vmatpush.msra.mxu0 %v34
    %64 = vmatpush.msra.mxu0 %v33
    %65 = vmatpush.msra.mxu0 %v32
    %66 = vmatpush.msra.mxu0 %v31
    %67 = vmatpush.msra.mxu0 %v30
    %68 = vmatpush.msra.mxu0 %v29
    %69 = vmatpush.msra.mxu0 %v28
    %70 = vmatpush.msra.mxu0 %v27
    %71 = vmatpush.msra.mxu0 %v26
    %72 = vmatpush.msra.mxu0 %v25
    %73 = vmatmul.f32.gmra.mxu0 %v55
    %v74 = vpop.f32.mrf.mxu0
    %v75 = vadd.f32 0.0, %v74
    %76 = vmatmul.f32.gmra.mxu0 %v56
    %v77 = vpop.f32.mrf.mxu0
    %v78 = vadd.f32 0.0, %v77
    %79 = vdwg.mxu0
    %v80 = vld [vmem:[%s1] sm:$0xff]
    %v81 = vld [vmem:[%s1 + $0x8] sm:$0xff]
    %82 = vset.pattern.permute.xlu0 0
    %83 = vperm.xlu0 %82, %v80
    %v84 = vpop.permute.xlu0 %83
    %85 = vset.pattern.permute.xlu0 0
    %86 = vperm.xlu0 %85, %v81
    %v87 = vpop.permute.xlu0 %86
    %vm88 = vcmp.eq.s32.totalorder %v44, %v84
    %vm89 = vcmp.eq.s32.totalorder %v44, %v87
    %v90 = vsel %vm88, 1, 0
    %v91 = vsel %vm89, 1, 0
    %v92 = vcvt.s32.f32 %v90
    %v93 = vcvt.s32.f32 %v91
    %94 = vmatpush.msra.mxu0 %v40
    %95 = vmatpush.msra.mxu0 %v39
    %96 = vmatpush.msra.mxu0 %v38
    %97 = vmatpush.msra.mxu0 %v37
    %98 = vmatpush.msra.mxu0 %v36
    %99 = vmatpush.msra.mxu0 %v35
    %100 = vmatpush.msra.mxu0 %v34
    %101 = vmatpush.msra.mxu0 %v33
    %102 = vmatpush.msra.mxu0 %v32
    %103 = vmatpush.msra.mxu0 %v31
    %104 = vmatpush.msra.mxu0 %v30
    %105 = vmatpush.msra.mxu0 %v29
    %106 = vmatpush.msra.mxu0 %v28
    %107 = vmatpush.msra.mxu0 %v27
    %108 = vmatpush.msra.mxu0 %v26
    %109 = vmatpush.msra.mxu0 %v25
    %110 = vmatmul.f32.gmra.mxu0 %v92
    %v111 = vpop.f32.mrf.mxu0
    %v112 = vadd.f32 0.0, %v111
    %113 = vmatmul.f32.gmra.mxu0 %v93
    %v114 = vpop.f32.mrf.mxu0
    %v115 = vadd.f32 0.0, %v114
    %116 = vdwg.mxu0
    %v117 = vld [vmem:[%s3] sm:$0x3]
    %v118 = vsub.f32 1.0, %v117
    %v119 = vmul.f32 %v118, -1e+09
    %v120 = vlaneseq
    %v121 = vshrl.u32 %v120, 7
    %vm122 = vcmp.le.s32.totalorder %v44, %v121
    %v123 = vsel %vm122, 0.0, -1e+09
    %v125 = vrot.slane %v119, 1
    %v126 = vperm.slane %v119, 0
    %v127 = vperm.slane %v125, 0
    %v130 = vld [vmem:[%s4 + $0xb0] sm:$0x1]
    %v131 = vld [vmem:[%s4 + $0xb8] sm:$0xff]
    %v132 = vld [vmem:[%s4 + $0xc0] sm:$0xff]
    %v133 = vld [vmem:[%s4 + $0xc8] sm:$0xff]
    %v134 = vld [vmem:[%s4 + $0xd0] sm:$0xff]
    %v135 = vld [vmem:[%s4 + $0xd8] sm:$0xff]
    %v136 = vld [vmem:[%s4 + $0xe0] sm:$0xff]
    %v137 = vld [vmem:[%s4 + $0xe8] sm:$0xff]
    %v138 = vld [vmem:[%s4 + $0xf0] sm:$0xff]
    %v139 = vld [vmem:[%s4 + $0xf8] sm:$0x1]
    %v140 = vld [vmem:[%s4 + $0x100] sm:$0xff]
    %v141 = vld [vmem:[%s4 + $0x108] sm:$0xff]
    %v142 = vld [vmem:[%s4 + $0x110] sm:$0xff]
    %v143 = vld [vmem:[%s4 + $0x118] sm:$0xff]
    %v144 = vld [vmem:[%s4 + $0x120] sm:$0xff]
    %v145 = vld [vmem:[%s4 + $0x128] sm:$0xff]
    %v146 = vld [vmem:[%s4 + $0x130] sm:$0xff]
    %v147 = vld [vmem:[%s4 + $0x138] sm:$0xff]
    %v148 = vld [vmem:[%s4 + $0x140] sm:$0xff]
    %v149 = vld [vmem:[%s4 + $0x148] sm:$0xff]
    %v150 = vld [vmem:[%s4 + $0x150] sm:$0xff]
    %v151 = vld [vmem:[%s4 + $0x158] sm:$0xff]
    %v152 = vmul.f32 %v75, %v75
    %v153 = vmul.f32 %v78, %v78
    %vm154 = vcmask 261120
    %v155 = vsel %vm154, %v152, 0.0
    %156 = vadd.xlane.f32.xlu0 %v155
    %v157 = vpop.xlane.xlu0 %156
    %v158 = vsel %vm154, %v153, 0.0
    %159 = vadd.xlane.f32.xlu0 %v158
    %v160 = vpop.xlane.xlu0 %159
    %v161 = vrcp.pop 32.0
    %v162 = vmul.f32 32.0, %v161
    %v163 = vsub.f32 1.0, %v162
    %v164 = vmul.f32 %v161, %v163
    %v165 = vadd.f32 %v161, %v164
    %vm166 = vweird.f32 %v161
    %v167 = vsel %vm166, %v161, %v165
    %v168 = vmul.f32 %v157, %v167
    %v169 = vmul.f32 %v160, %v167
    %v170 = vadd.f32 %v168, 1e-06
    %v171 = vadd.f32 %v169, 1e-06
    %v172 = vrsqrt.pop %v170
    %v173 = vmul.f32 %v172, %v170
    %v174 = vmul.f32 %v173, %v172
    %v175 = vmul.f32 0.5, %v174
    %v176 = vsub.f32 1.5, %v175
    %v177 = vmul.f32 %v172, %v176
    %vm178 = vweird.f32 %v170
    %vm179 = vweird.f32 %v172
    %vm180 = vmor %vm178, %vm179
    %v181 = vsel %vm180, %v172, %v177
    %v182 = vrsqrt.pop %v171
    %v183 = vmul.f32 %v182, %v171
    %v184 = vmul.f32 %v183, %v182
    %v185 = vmul.f32 0.5, %v184
    %v186 = vsub.f32 1.5, %v185
    %v187 = vmul.f32 %v182, %v186
    %vm188 = vweird.f32 %v171
    %vm189 = vweird.f32 %v182
    %vm190 = vmor %vm188, %vm189
    %v191 = vsel %vm190, %v182, %v187
    %v192 = vmul.f32 %v75, %v181
    %v193 = vmul.f32 %v78, %v191
    %v194 = vperm.slane %v130, 0
    %v195 = vmul.f32 %v192, %v194
    %v196 = vmul.f32 %v193, %v194
    %v198 = vsel %vm154, %v195, 0
    %v201 = vsel %vm154, %v196, 0
    %203 = vmatpush.msra.mxu0 0.0
    %204 = vmatpush.msra.mxu0 0.0
    %205 = vmatpush.msra.mxu0 0.0
    %206 = vmatpush.msra.mxu0 0.0
    %207 = vmatpush.msra.mxu0 0.0
    %208 = vmatpush.msra.mxu0 0.0
    %209 = vmatpush.msra.mxu0 0.0
    %210 = vmatpush.msra.mxu0 0.0
    %211 = vmatpush.msra.mxu0 0.0
    %212 = vmatpush.msra.mxu0 0.0
    %213 = vmatpush.msra.mxu0 0.0
    %214 = vmatpush.msra.mxu0 0.0
    %215 = vmatpush.msra.mxu0 %v134
    %216 = vmatpush.msra.mxu0 %v133
    %217 = vmatpush.msra.mxu0 %v132
    %218 = vmatpush.msra.mxu0 %v131
    %219 = vmatmul.f32.gmra.mxu0 %v198
    %v220 = vpop.f32.mrf.mxu0
    %v221 = vadd.f32 0.0, %v220
    %222 = vmatmul.f32.gmra.mxu0 %v201
    %v223 = vpop.f32.mrf.mxu0
    %v224 = vadd.f32 0.0, %v223
    %225 = vdwg.mxu0
    %228 = vrot.lane.b32.xlu0 %v221, 120
    %v229 = vpop.permute.xlu0 %228
    %230 = vrot.lane.b32.xlu0 %v224, 120
    %v231 = vpop.permute.xlu0 %230
    %232 = vrot.lane.b32.xlu0 %v221, 112
    %v233 = vpop.permute.xlu0 %232
    %234 = vrot.lane.b32.xlu0 %v224, 112
    %v235 = vpop.permute.xlu0 %234
    %236 = vrot.lane.b32.xlu0 %v221, 104
    %v237 = vpop.permute.xlu0 %236
    %238 = vrot.lane.b32.xlu0 %v224, 104
    %v239 = vpop.permute.xlu0 %238
    %240 = vrot.lane.b32.xlu0 %v221, 96
    %v241 = vpop.permute.xlu0 %240
    %vm242 = vcmask 64512
    %v243 = vsel %vm242, %v221, 0
    %v245 = vsel %vm242, %v241, 0
    %247 = vmatpush.xpose.msra.mxu0 0.0
    %248 = vmatpush.xpose.msra.mxu0 0.0
    %249 = vmatpush.xpose.msra.mxu0 0.0
    %250 = vmatpush.xpose.msra.mxu0 0.0
    %251 = vmatpush.xpose.msra.mxu0 0.0
    %252 = vmatpush.xpose.msra.mxu0 0.0
    %253 = vmatpush.xpose.msra.mxu0 0.0
    %254 = vmatpush.xpose.msra.mxu0 0.0
    %255 = vmatpush.xpose.msra.mxu0 0.0
    %256 = vmatpush.xpose.msra.mxu0 0.0
    %257 = vmatpush.xpose.msra.mxu0 0.0
    %258 = vmatpush.xpose.msra.mxu0 0.0
    %259 = vmatpush.xpose.msra.mxu0 0.0
    %260 = vmatpush.xpose.msra.mxu0 0.0
    %261 = vmatpush.xpose.msra.mxu0 0.0
    %262 = vmatpush.xpose.msra.mxu0 %v245
    %263 = vmatmul.f32.gmra.mxu0 %v243
    %v264 = vpop.f32.mrf.mxu0
    %v265 = vadd.f32 %v126, %v264
    %266 = vdwg.mxu0
    %267 = vrot.lane.b32.xlu0 %v224, 96
    %v268 = vpop.permute.xlu0 %267
    %v269 = vsel %vm242, %v224, 0
    %v271 = vsel %vm242, %v268, 0
    %273 = vmatpush.xpose.msra.mxu0 0.0
    %274 = vmatpush.xpose.msra.mxu0 0.0
    %275 = vmatpush.xpose.msra.mxu0 0.0
    %276 = vmatpush.xpose.msra.mxu0 0.0
    %277 = vmatpush.xpose.msra.mxu0 0.0
    %278 = vmatpush.xpose.msra.mxu0 0.0
    %279 = vmatpush.xpose.msra.mxu0 0.0
    %280 = vmatpush.xpose.msra.mxu0 0.0
    %281 = vmatpush.xpose.msra.mxu0 0.0
    %282 = vmatpush.xpose.msra.mxu0 0.0
    %283 = vmatpush.xpose.msra.mxu0 0.0
    %284 = vmatpush.xpose.msra.mxu0 0.0
    %285 = vmatpush.xpose.msra.mxu0 0.0
    %286 = vmatpush.xpose.msra.mxu0 0.0
    %287 = vmatpush.xpose.msra.mxu0 0.0
    %288 = vmatpush.xpose.msra.mxu0 %v271
    %289 = vmatmul.f32.gmra.mxu0 %v269
    %v290 = vpop.f32.mrf.mxu0
    %v291 = vadd.f32 %v127, %v290
    %292 = vdwg.mxu0
    %293 = vrot.lane.b32.xlu0 %v229, 96
    %v294 = vpop.permute.xlu0 %293
    %v295 = vsel %vm242, %v229, 0
    %v297 = vsel %vm242, %v294, 0
    %299 = vmatpush.xpose.msra.mxu0 0.0
    %300 = vmatpush.xpose.msra.mxu0 0.0
    %301 = vmatpush.xpose.msra.mxu0 0.0
    %302 = vmatpush.xpose.msra.mxu0 0.0
    %303 = vmatpush.xpose.msra.mxu0 0.0
    %304 = vmatpush.xpose.msra.mxu0 0.0
    %305 = vmatpush.xpose.msra.mxu0 0.0
    %306 = vmatpush.xpose.msra.mxu0 0.0
    %307 = vmatpush.xpose.msra.mxu0 0.0
    %308 = vmatpush.xpose.msra.mxu0 0.0
    %309 = vmatpush.xpose.msra.mxu0 0.0
    %310 = vmatpush.xpose.msra.mxu0 0.0
    %311 = vmatpush.xpose.msra.mxu0 0.0
    %312 = vmatpush.xpose.msra.mxu0 0.0
    %313 = vmatpush.xpose.msra.mxu0 0.0
    %314 = vmatpush.xpose.msra.mxu0 %v297
    %315 = vmatmul.f32.gmra.mxu0 %v295
    %v316 = vpop.f32.mrf.mxu0
    %v317 = vadd.f32 %v126, %v316
    %318 = vdwg.mxu0
    %319 = vrot.lane.b32.xlu0 %v231, 96
    %v320 = vpop.permute.xlu0 %319
    %v321 = vsel %vm242, %v231, 0
    %v323 = vsel %vm242, %v320, 0
    %325 = vmatpush.xpose.msra.mxu0 0.0
    %326 = vmatpush.xpose.msra.mxu0 0.0
    %327 = vmatpush.xpose.msra.mxu0 0.0
    %328 = vmatpush.xpose.msra.mxu0 0.0
    %329 = vmatpush.xpose.msra.mxu0 0.0
    %330 = vmatpush.xpose.msra.mxu0 0.0
    %331 = vmatpush.xpose.msra.mxu0 0.0
    %332 = vmatpush.xpose.msra.mxu0 0.0
    %333 = vmatpush.xpose.msra.mxu0 0.0
    %334 = vmatpush.xpose.msra.mxu0 0.0
    %335 = vmatpush.xpose.msra.mxu0 0.0
    %336 = vmatpush.xpose.msra.mxu0 0.0
    %337 = vmatpush.xpose.msra.mxu0 0.0
    %338 = vmatpush.xpose.msra.mxu0 0.0
    %339 = vmatpush.xpose.msra.mxu0 0.0
    %340 = vmatpush.xpose.msra.mxu0 %v323
    %341 = vmatmul.f32.gmra.mxu0 %v321
    %v342 = vpop.f32.mrf.mxu0
    %v343 = vadd.f32 %v127, %v342
    %344 = vdwg.mxu0
    %345 = vrot.lane.b32.xlu0 %v233, 96
    %v346 = vpop.permute.xlu0 %345
    %v347 = vsel %vm242, %v233, 0
    %v349 = vsel %vm242, %v346, 0
    %351 = vmatpush.xpose.msra.mxu0 0.0
    %352 = vmatpush.xpose.msra.mxu0 0.0
    %353 = vmatpush.xpose.msra.mxu0 0.0
    %354 = vmatpush.xpose.msra.mxu0 0.0
    %355 = vmatpush.xpose.msra.mxu0 0.0
    %356 = vmatpush.xpose.msra.mxu0 0.0
    %357 = vmatpush.xpose.msra.mxu0 0.0
    %358 = vmatpush.xpose.msra.mxu0 0.0
    %359 = vmatpush.xpose.msra.mxu0 0.0
    %360 = vmatpush.xpose.msra.mxu0 0.0
    %361 = vmatpush.xpose.msra.mxu0 0.0
    %362 = vmatpush.xpose.msra.mxu0 0.0
    %363 = vmatpush.xpose.msra.mxu0 0.0
    %364 = vmatpush.xpose.msra.mxu0 0.0
    %365 = vmatpush.xpose.msra.mxu0 0.0
    %366 = vmatpush.xpose.msra.mxu0 %v349
    %367 = vmatmul.f32.gmra.mxu0 %v347
    %v368 = vpop.f32.mrf.mxu0
    %v369 = vadd.f32 %v126, %v368
    %370 = vdwg.mxu0
    %371 = vrot.lane.b32.xlu0 %v235, 96
    %v372 = vpop.permute.xlu0 %371
    %v373 = vsel %vm242, %v235, 0
    %v375 = vsel %vm242, %v372, 0
    %377 = vmatpush.xpose.msra.mxu0 0.0
    %378 = vmatpush.xpose.msra.mxu0 0.0
    %379 = vmatpush.xpose.msra.mxu0 0.0
    %380 = vmatpush.xpose.msra.mxu0 0.0
    %381 = vmatpush.xpose.msra.mxu0 0.0
    %382 = vmatpush.xpose.msra.mxu0 0.0
    %383 = vmatpush.xpose.msra.mxu0 0.0
    %384 = vmatpush.xpose.msra.mxu0 0.0
    %385 = vmatpush.xpose.msra.mxu0 0.0
    %386 = vmatpush.xpose.msra.mxu0 0.0
    %387 = vmatpush.xpose.msra.mxu0 0.0
    %388 = vmatpush.xpose.msra.mxu0 0.0
    %389 = vmatpush.xpose.msra.mxu0 0.0
    %390 = vmatpush.xpose.msra.mxu0 0.0
    %391 = vmatpush.xpose.msra.mxu0 0.0
    %392 = vmatpush.xpose.msra.mxu0 %v375
    %393 = vmatmul.f32.gmra.mxu0 %v373
    %v394 = vpop.f32.mrf.mxu0
    %v395 = vadd.f32 %v127, %v394
    %396 = vdwg.mxu0
    %397 = vrot.lane.b32.xlu0 %v237, 96
    %v398 = vpop.permute.xlu0 %397
    %v399 = vsel %vm242, %v237, 0
    %v401 = vsel %vm242, %v398, 0
    %403 = vmatpush.xpose.msra.mxu0 0.0
    %404 = vmatpush.xpose.msra.mxu0 0.0
    %405 = vmatpush.xpose.msra.mxu0 0.0
    %406 = vmatpush.xpose.msra.mxu0 0.0
    %407 = vmatpush.xpose.msra.mxu0 0.0
    %408 = vmatpush.xpose.msra.mxu0 0.0
    %409 = vmatpush.xpose.msra.mxu0 0.0
    %410 = vmatpush.xpose.msra.mxu0 0.0
    %411 = vmatpush.xpose.msra.mxu0 0.0
    %412 = vmatpush.xpose.msra.mxu0 0.0
    %413 = vmatpush.xpose.msra.mxu0 0.0
    %414 = vmatpush.xpose.msra.mxu0 0.0
    %415 = vmatpush.xpose.msra.mxu0 0.0
    %416 = vmatpush.xpose.msra.mxu0 0.0
    %417 = vmatpush.xpose.msra.mxu0 0.0
    %418 = vmatpush.xpose.msra.mxu0 %v401
    %419 = vmatmul.f32.gmra.mxu0 %v399
    %v420 = vpop.f32.mrf.mxu0
    %v421 = vadd.f32 %v126, %v420
    %422 = vdwg.mxu0
    %423 = vrot.lane.b32.xlu0 %v239, 96
    %v424 = vpop.permute.xlu0 %423
    %v425 = vsel %vm242, %v239, 0
    %v427 = vsel %vm242, %v424, 0
    %429 = vmatpush.xpose.msra.mxu0 0.0
    %430 = vmatpush.xpose.msra.mxu0 0.0
    %431 = vmatpush.xpose.msra.mxu0 0.0
    %432 = vmatpush.xpose.msra.mxu0 0.0
    %433 = vmatpush.xpose.msra.mxu0 0.0
    %434 = vmatpush.xpose.msra.mxu0 0.0
    %435 = vmatpush.xpose.msra.mxu0 0.0
    %436 = vmatpush.xpose.msra.mxu0 0.0
    %437 = vmatpush.xpose.msra.mxu0 0.0
    %438 = vmatpush.xpose.msra.mxu0 0.0
    %439 = vmatpush.xpose.msra.mxu0 0.0
    %440 = vmatpush.xpose.msra.mxu0 0.0
    %441 = vmatpush.xpose.msra.mxu0 0.0
    %442 = vmatpush.xpose.msra.mxu0 0.0
    %443 = vmatpush.xpose.msra.mxu0 0.0
    %444 = vmatpush.xpose.msra.mxu0 %v427
    %445 = vmatmul.f32.gmra.mxu0 %v425
    %v446 = vpop.f32.mrf.mxu0
    %v447 = vadd.f32 %v127, %v446
    %448 = vdwg.mxu0
    %v449 = vsel %vm242, %v265, -inf
    %450 = vmax.xlane.f32.xlu0 %v449
    %v451 = vpop.xlane.xlu0 %450
    %v452 = vsel %vm242, %v291, -inf
    %453 = vmax.xlane.f32.xlu0 %v452
    %v454 = vpop.xlane.xlu0 %453
    %v455 = vsel %vm242, %v317, -inf
    %456 = vmax.xlane.f32.xlu0 %v455
    %v457 = vpop.xlane.xlu0 %456
    %v458 = vsel %vm242, %v343, -inf
    %459 = vmax.xlane.f32.xlu0 %v458
    %v460 = vpop.xlane.xlu0 %459
    %v461 = vsel %vm242, %v369, -inf
    %462 = vmax.xlane.f32.xlu0 %v461
    %v463 = vpop.xlane.xlu0 %462
    %v464 = vsel %vm242, %v395, -inf
    %465 = vmax.xlane.f32.xlu0 %v464
    %v466 = vpop.xlane.xlu0 %465
    %v467 = vsel %vm242, %v421, -inf
    %468 = vmax.xlane.f32.xlu0 %v467
    %v469 = vpop.xlane.xlu0 %468
    %v470 = vsel %vm242, %v447, -inf
    %471 = vmax.xlane.f32.xlu0 %v470
    %v472 = vpop.xlane.xlu0 %471
    %v473 = vsub.f32 %v265, %v451
    %v474 = vsub.f32 %v291, %v454
    %v475 = vsub.f32 %v317, %v457
    %v476 = vsub.f32 %v343, %v460
    %v477 = vsub.f32 %v369, %v463
    %v478 = vsub.f32 %v395, %v466
    %v479 = vsub.f32 %v421, %v469
    %v480 = vsub.f32 %v447, %v472
    %v481 = vmul.f32 %v473, 1.442695
    %v482 = vpow.pop %v481
    %v483 = vmul.f32 %v474, 1.442695
    %v484 = vpow.pop %v483
    %v485 = vmul.f32 %v475, 1.442695
    %v486 = vpow.pop %v485
    %v487 = vmul.f32 %v476, 1.442695
    %v488 = vpow.pop %v487
    %v489 = vmul.f32 %v477, 1.442695
    %v490 = vpow.pop %v489
    %v491 = vmul.f32 %v478, 1.442695
    %v492 = vpow.pop %v491
    %v493 = vmul.f32 %v479, 1.442695
    %v494 = vpow.pop %v493
    %v495 = vmul.f32 %v480, 1.442695
    %v496 = vpow.pop %v495
    %v497 = vsel %vm242, %v482, 0.0
    %498 = vadd.xlane.f32.xlu0 %v497
    %v499 = vpop.xlane.xlu0 %498
    %v500 = vsel %vm242, %v484, 0.0
    %501 = vadd.xlane.f32.xlu0 %v500
    %v502 = vpop.xlane.xlu0 %501
    %v503 = vsel %vm242, %v486, 0.0
    %504 = vadd.xlane.f32.xlu0 %v503
    %v505 = vpop.xlane.xlu0 %504
    %v506 = vsel %vm242, %v488, 0.0
    %507 = vadd.xlane.f32.xlu0 %v506
    %v508 = vpop.xlane.xlu0 %507
    %v509 = vsel %vm242, %v490, 0.0
    %510 = vadd.xlane.f32.xlu0 %v509
    %v511 = vpop.xlane.xlu0 %510
    %v512 = vsel %vm242, %v492, 0.0
    %513 = vadd.xlane.f32.xlu0 %v512
    %v514 = vpop.xlane.xlu0 %513
    %v515 = vsel %vm242, %v494, 0.0
    %516 = vadd.xlane.f32.xlu0 %v515
    %v517 = vpop.xlane.xlu0 %516
    %v518 = vsel %vm242, %v496, 0.0
    %519 = vadd.xlane.f32.xlu0 %v518
    %v520 = vpop.xlane.xlu0 %519
    %v521 = vrcp.pop %v499
    %v522 = vrcp.pop %v502
    %v523 = vrcp.pop %v505
    %v524 = vrcp.pop %v508
    %v525 = vrcp.pop %v511
    %v526 = vrcp.pop %v514
    %v527 = vrcp.pop %v517
    %v528 = vrcp.pop %v520
    %v529 = vmul.f32 %v482, %v521
    %v530 = vmul.f32 %v484, %v522
    %v531 = vmul.f32 %v486, %v523
    %v532 = vmul.f32 %v488, %v524
    %v533 = vmul.f32 %v490, %v525
    %v534 = vmul.f32 %v492, %v526
    %v535 = vmul.f32 %v494, %v527
    %v536 = vmul.f32 %v496, %v528
    %537 = vrot.lane.b32.xlu0 %v221, 64
    %v538 = vpop.permute.xlu0 %537
    %v541 = vsel %vm242, %v529, 0
    %543 = vmatpush.msra.mxu0 0.0
    %544 = vmatpush.msra.mxu0 0.0
    %545 = vmatpush.msra.mxu0 0.0
    %546 = vmatpush.msra.mxu0 0.0
    %547 = vmatpush.msra.mxu0 0.0
    %548 = vmatpush.msra.mxu0 0.0
    %549 = vmatpush.msra.mxu0 0.0
    %550 = vmatpush.msra.mxu0 0.0
    %551 = vmatpush.msra.mxu0 0.0
    %552 = vmatpush.msra.mxu0 0.0
    %553 = vmatpush.msra.mxu0 0.0
    %554 = vmatpush.msra.mxu0 0.0
    %555 = vmatpush.msra.mxu0 0.0
    %556 = vmatpush.msra.mxu0 0.0
    %557 = vmatpush.msra.mxu0 0.0
    %558 = vmatpush.msra.mxu0 %v538
    %559 = vmatmul.f32.gmra.mxu0 %v541
    %v560 = vpop.f32.mrf.mxu0
    %v561 = vadd.f32 0.0, %v560
    %562 = vdwg.mxu0
    %563 = vrot.lane.b32.xlu0 %v224, 64
    %v564 = vpop.permute.xlu0 %563
    %v567 = vsel %vm242, %v530, 0
    %569 = vmatpush.msra.mxu0 0.0
    %570 = vmatpush.msra.mxu0 0.0
    %571 = vmatpush.msra.mxu0 0.0
    %572 = vmatpush.msra.mxu0 0.0
    %573 = vmatpush.msra.mxu0 0.0
    %574 = vmatpush.msra.mxu0 0.0
    %575 = vmatpush.msra.mxu0 0.0
    %576 = vmatpush.msra.mxu0 0.0
    %577 = vmatpush.msra.mxu0 0.0
    %578 = vmatpush.msra.mxu0 0.0
    %579 = vmatpush.msra.mxu0 0.0
    %580 = vmatpush.msra.mxu0 0.0
    %581 = vmatpush.msra.mxu0 0.0
    %582 = vmatpush.msra.mxu0 0.0
    %583 = vmatpush.msra.mxu0 0.0
    %584 = vmatpush.msra.mxu0 %v564
    %585 = vmatmul.f32.gmra.mxu0 %v567
    %v586 = vpop.f32.mrf.mxu0
    %v587 = vadd.f32 0.0, %v586
    %588 = vdwg.mxu0
    %589 = vrot.lane.b32.xlu0 %v229, 64
    %v590 = vpop.permute.xlu0 %589
    %v593 = vsel %vm242, %v531, 0
    %595 = vmatpush.msra.mxu0 0.0
    %596 = vmatpush.msra.mxu0 0.0
    %597 = vmatpush.msra.mxu0 0.0
    %598 = vmatpush.msra.mxu0 0.0
    %599 = vmatpush.msra.mxu0 0.0
    %600 = vmatpush.msra.mxu0 0.0
    %601 = vmatpush.msra.mxu0 0.0
    %602 = vmatpush.msra.mxu0 0.0
    %603 = vmatpush.msra.mxu0 0.0
    %604 = vmatpush.msra.mxu0 0.0
    %605 = vmatpush.msra.mxu0 0.0
    %606 = vmatpush.msra.mxu0 0.0
    %607 = vmatpush.msra.mxu0 0.0
    %608 = vmatpush.msra.mxu0 0.0
    %609 = vmatpush.msra.mxu0 0.0
    %610 = vmatpush.msra.mxu0 %v590
    %611 = vmatmul.f32.gmra.mxu0 %v593
    %v612 = vpop.f32.mrf.mxu0
    %v613 = vadd.f32 0.0, %v612
    %614 = vdwg.mxu0
    %615 = vrot.lane.b32.xlu0 %v231, 64
    %v616 = vpop.permute.xlu0 %615
    %v619 = vsel %vm242, %v532, 0
    %621 = vmatpush.msra.mxu0 0.0
    %622 = vmatpush.msra.mxu0 0.0
    %623 = vmatpush.msra.mxu0 0.0
    %624 = vmatpush.msra.mxu0 0.0
    %625 = vmatpush.msra.mxu0 0.0
    %626 = vmatpush.msra.mxu0 0.0
    %627 = vmatpush.msra.mxu0 0.0
    %628 = vmatpush.msra.mxu0 0.0
    %629 = vmatpush.msra.mxu0 0.0
    %630 = vmatpush.msra.mxu0 0.0
    %631 = vmatpush.msra.mxu0 0.0
    %632 = vmatpush.msra.mxu0 0.0
    %633 = vmatpush.msra.mxu0 0.0
    %634 = vmatpush.msra.mxu0 0.0
    %635 = vmatpush.msra.mxu0 0.0
    %636 = vmatpush.msra.mxu0 %v616
    %637 = vmatmul.f32.gmra.mxu0 %v619
    %v638 = vpop.f32.mrf.mxu0
    %v639 = vadd.f32 0.0, %v638
    %640 = vdwg.mxu0
    %641 = vrot.lane.b32.xlu0 %v233, 64
    %v642 = vpop.permute.xlu0 %641
    %v645 = vsel %vm242, %v533, 0
    %647 = vmatpush.msra.mxu0 0.0
    %648 = vmatpush.msra.mxu0 0.0
    %649 = vmatpush.msra.mxu0 0.0
    %650 = vmatpush.msra.mxu0 0.0
    %651 = vmatpush.msra.mxu0 0.0
    %652 = vmatpush.msra.mxu0 0.0
    %653 = vmatpush.msra.mxu0 0.0
    %654 = vmatpush.msra.mxu0 0.0
    %655 = vmatpush.msra.mxu0 0.0
    %656 = vmatpush.msra.mxu0 0.0
    %657 = vmatpush.msra.mxu0 0.0
    %658 = vmatpush.msra.mxu0 0.0
    %659 = vmatpush.msra.mxu0 0.0
    %660 = vmatpush.msra.mxu0 0.0
    %661 = vmatpush.msra.mxu0 0.0
    %662 = vmatpush.msra.mxu0 %v642
    %663 = vmatmul.f32.gmra.mxu0 %v645
    %v664 = vpop.f32.mrf.mxu0
    %v665 = vadd.f32 0.0, %v664
    %666 = vdwg.mxu0
    %667 = vrot.lane.b32.xlu0 %v235, 64
    %v668 = vpop.permute.xlu0 %667
    %v671 = vsel %vm242, %v534, 0
    %673 = vmatpush.msra.mxu0 0.0
    %674 = vmatpush.msra.mxu0 0.0
    %675 = vmatpush.msra.mxu0 0.0
    %676 = vmatpush.msra.mxu0 0.0
    %677 = vmatpush.msra.mxu0 0.0
    %678 = vmatpush.msra.mxu0 0.0
    %679 = vmatpush.msra.mxu0 0.0
    %680 = vmatpush.msra.mxu0 0.0
    %681 = vmatpush.msra.mxu0 0.0
    %682 = vmatpush.msra.mxu0 0.0
    %683 = vmatpush.msra.mxu0 0.0
    %684 = vmatpush.msra.mxu0 0.0
    %685 = vmatpush.msra.mxu0 0.0
    %686 = vmatpush.msra.mxu0 0.0
    %687 = vmatpush.msra.mxu0 0.0
    %688 = vmatpush.msra.mxu0 %v668
    %689 = vmatmul.f32.gmra.mxu0 %v671
    %v690 = vpop.f32.mrf.mxu0
    %v691 = vadd.f32 0.0, %v690
    %692 = vdwg.mxu0
    %693 = vrot.lane.b32.xlu0 %v237, 64
    %v694 = vpop.permute.xlu0 %693
    %v697 = vsel %vm242, %v535, 0
    %699 = vmatpush.msra.mxu0 0.0
    %700 = vmatpush.msra.mxu0 0.0
    %701 = vmatpush.msra.mxu0 0.0
    %702 = vmatpush.msra.mxu0 0.0
    %703 = vmatpush.msra.mxu0 0.0
    %704 = vmatpush.msra.mxu0 0.0
    %705 = vmatpush.msra.mxu0 0.0
    %706 = vmatpush.msra.mxu0 0.0
    %707 = vmatpush.msra.mxu0 0.0
    %708 = vmatpush.msra.mxu0 0.0
    %709 = vmatpush.msra.mxu0 0.0
    %710 = vmatpush.msra.mxu0 0.0
    %711 = vmatpush.msra.mxu0 0.0
    %712 = vmatpush.msra.mxu0 0.0
    %713 = vmatpush.msra.mxu0 0.0
    %714 = vmatpush.msra.mxu0 %v694
    %715 = vmatmul.f32.gmra.mxu0 %v697
    %v716 = vpop.f32.mrf.mxu0
    %v717 = vadd.f32 0.0, %v716
    %718 = vdwg.mxu0
    %719 = vrot.lane.b32.xlu0 %v239, 64
    %v720 = vpop.permute.xlu0 %719
    %v723 = vsel %vm242, %v536, 0
    %725 = vmatpush.msra.mxu0 0.0
    %726 = vmatpush.msra.mxu0 0.0
    %727 = vmatpush.msra.mxu0 0.0
    %728 = vmatpush.msra.mxu0 0.0
    %729 = vmatpush.msra.mxu0 0.0
    %730 = vmatpush.msra.mxu0 0.0
    %731 = vmatpush.msra.mxu0 0.0
    %732 = vmatpush.msra.mxu0 0.0
    %733 = vmatpush.msra.mxu0 0.0
    %734 = vmatpush.msra.mxu0 0.0
    %735 = vmatpush.msra.mxu0 0.0
    %736 = vmatpush.msra.mxu0 0.0
    %737 = vmatpush.msra.mxu0 0.0
    %738 = vmatpush.msra.mxu0 0.0
    %739 = vmatpush.msra.mxu0 0.0
    %740 = vmatpush.msra.mxu0 %v720
    %741 = vmatmul.f32.gmra.mxu0 %v723
    %v742 = vpop.f32.mrf.mxu0
    %v743 = vadd.f32 0.0, %v742
    %744 = vdwg.mxu0
    %v746 = vsel %vm242, %v561, 0
    %v749 = vsel %vm242, %v587, 0
    %751 = vmatpush.msra.mxu0 0.0
    %752 = vmatpush.msra.mxu0 0.0
    %753 = vmatpush.msra.mxu0 0.0
    %754 = vmatpush.msra.mxu0 0.0
    %755 = vmatpush.msra.mxu0 0.0
    %756 = vmatpush.msra.mxu0 0.0
    %757 = vmatpush.msra.mxu0 0.0
    %758 = vmatpush.msra.mxu0 0.0
    %759 = vmatpush.msra.mxu0 0.0
    %760 = vmatpush.msra.mxu0 0.0
    %761 = vmatpush.msra.mxu0 0.0
    %762 = vmatpush.msra.mxu0 0.0
    %763 = vmatpush.msra.mxu0 0.0
    %764 = vmatpush.msra.mxu0 0.0
    %765 = vmatpush.msra.mxu0 0.0
    %766 = vmatpush.msra.mxu0 %v135
    %767 = vmatmul.f32.gmra.mxu0 %v746
    %v768 = vpop.f32.mrf.mxu0
    %v769 = vadd.f32 0.0, %v768
    %770 = vmatmul.f32.gmra.mxu0 %v749
    %v771 = vpop.f32.mrf.mxu0
    %v772 = vadd.f32 0.0, %v771
    %773 = vdwg.mxu0
    %v775 = vsel %vm242, %v613, 0
    %v778 = vsel %vm242, %v639, 0
    %780 = vmatpush.msra.mxu0 0.0
    %781 = vmatpush.msra.mxu0 0.0
    %782 = vmatpush.msra.mxu0 0.0
    %783 = vmatpush.msra.mxu0 0.0
    %784 = vmatpush.msra.mxu0 0.0
    %785 = vmatpush.msra.mxu0 0.0
    %786 = vmatpush.msra.mxu0 0.0
    %787 = vmatpush.msra.mxu0 0.0
    %788 = vmatpush.msra.mxu0 0.0
    %789 = vmatpush.msra.mxu0 0.0
    %790 = vmatpush.msra.mxu0 0.0
    %791 = vmatpush.msra.mxu0 0.0
    %792 = vmatpush.msra.mxu0 0.0
    %793 = vmatpush.msra.mxu0 0.0
    %794 = vmatpush.msra.mxu0 0.0
    %795 = vmatpush.msra.mxu0 %v136
    %796 = vmatmul.f32.gmra.mxu0 %v775
    %v797 = vpop.f32.mrf.mxu0
    %v798 = vadd.f32 0.0, %v797
    %799 = vmatmul.f32.gmra.mxu0 %v778
    %v800 = vpop.f32.mrf.mxu0
    %v801 = vadd.f32 0.0, %v800
    %802 = vdwg.mxu0
    %v804 = vsel %vm242, %v665, 0
    %v807 = vsel %vm242, %v691, 0
    %809 = vmatpush.msra.mxu0 0.0
    %810 = vmatpush.msra.mxu0 0.0
    %811 = vmatpush.msra.mxu0 0.0
    %812 = vmatpush.msra.mxu0 0.0
    %813 = vmatpush.msra.mxu0 0.0
    %814 = vmatpush.msra.mxu0 0.0
    %815 = vmatpush.msra.mxu0 0.0
    %816 = vmatpush.msra.mxu0 0.0
    %817 = vmatpush.msra.mxu0 0.0
    %818 = vmatpush.msra.mxu0 0.0
    %819 = vmatpush.msra.mxu0 0.0
    %820 = vmatpush.msra.mxu0 0.0
    %821 = vmatpush.msra.mxu0 0.0
    %822 = vmatpush.msra.mxu0 0.0
    %823 = vmatpush.msra.mxu0 0.0
    %824 = vmatpush.msra.mxu0 %v137
    %825 = vmatmul.f32.gmra.mxu0 %v804
    %v826 = vpop.f32.mrf.mxu0
    %v827 = vadd.f32 0.0, %v826
    %828 = vmatmul.f32.gmra.mxu0 %v807
    %v829 = vpop.f32.mrf.mxu0
    %v830 = vadd.f32 0.0, %v829
    %831 = vdwg.mxu0
    %v833 = vsel %vm242, %v717, 0
    %v836 = vsel %vm242, %v743, 0
    %838 = vmatpush.msra.mxu0 0.0
    %839 = vmatpush.msra.mxu0 0.0
    %840 = vmatpush.msra.mxu0 0.0
    %841 = vmatpush.msra.mxu0 0.0
    %842 = vmatpush.msra.mxu0 0.0
    %843 = vmatpush.msra.mxu0 0.0
    %844 = vmatpush.msra.mxu0 0.0
    %845 = vmatpush.msra.mxu0 0.0
    %846 = vmatpush.msra.mxu0 0.0
    %847 = vmatpush.msra.mxu0 0.0
    %848 = vmatpush.msra.mxu0 0.0
    %849 = vmatpush.msra.mxu0 0.0
    %850 = vmatpush.msra.mxu0 0.0
    %851 = vmatpush.msra.mxu0 0.0
    %852 = vmatpush.msra.mxu0 0.0
    %853 = vmatpush.msra.mxu0 %v138
    %854 = vmatmul.f32.gmra.mxu0 %v833
    %v855 = vpop.f32.mrf.mxu0
    %v856 = vadd.f32 0.0, %v855
    %857 = vmatmul.f32.gmra.mxu0 %v836
    %v858 = vpop.f32.mrf.mxu0
    %v859 = vadd.f32 0.0, %v858
    %860 = vdwg.mxu0
    %v861 = vadd.f32 %v769, %v798
    %v862 = vadd.f32 %v772, %v801
    %v863 = vadd.f32 %v861, %v827
    %v864 = vadd.f32 %v862, %v830
    %v865 = vadd.f32 %v863, %v856
    %v866 = vadd.f32 %v864, %v859
    %v867 = vadd.f32 %v75, %v865
    %v868 = vadd.f32 %v78, %v866
    %v869 = vmul.f32 %v867, %v867
    %v870 = vmul.f32 %v868, %v868
    %v871 = vsel %vm154, %v869, 0.0
    %872 = vadd.xlane.f32.xlu0 %v871
    %v873 = vpop.xlane.xlu0 %872
    %v874 = vsel %vm154, %v870, 0.0
    %875 = vadd.xlane.f32.xlu0 %v874
    %v876 = vpop.xlane.xlu0 %875
    %v877 = vmul.f32 %v873, %v167
    %v878 = vmul.f32 %v876, %v167
    %v879 = vadd.f32 %v877, 1e-06
    %v880 = vadd.f32 %v878, 1e-06
    %v881 = vrsqrt.pop %v879
    %v882 = vmul.f32 %v881, %v879
    %v883 = vmul.f32 %v882, %v881
    %v884 = vmul.f32 0.5, %v883
    %v885 = vsub.f32 1.5, %v884
    %v886 = vmul.f32 %v881, %v885
    %vm887 = vweird.f32 %v879
    %vm888 = vweird.f32 %v881
    %vm889 = vmor %vm887, %vm888
    %v890 = vsel %vm889, %v881, %v886
    %v891 = vrsqrt.pop %v880
    %v892 = vmul.f32 %v891, %v880
    %v893 = vmul.f32 %v892, %v891
    %v894 = vmul.f32 0.5, %v893
    %v895 = vsub.f32 1.5, %v894
    %v896 = vmul.f32 %v891, %v895
    %vm897 = vweird.f32 %v880
    %vm898 = vweird.f32 %v891
    %vm899 = vmor %vm897, %vm898
    %v900 = vsel %vm899, %v891, %v896
    %v901 = vmul.f32 %v867, %v890
    %v902 = vmul.f32 %v868, %v900
    %v903 = vperm.slane %v139, 0
    %v904 = vmul.f32 %v901, %v903
    %v905 = vmul.f32 %v902, %v903
    %v907 = vsel %vm154, %v904, 0
    %v910 = vsel %vm154, %v905, 0
    %912 = vmatpush.msra.mxu0 0.0
    %913 = vmatpush.msra.mxu0 0.0
    %914 = vmatpush.msra.mxu0 0.0
    %915 = vmatpush.msra.mxu0 0.0
    %916 = vmatpush.msra.mxu0 0.0
    %917 = vmatpush.msra.mxu0 0.0
    %918 = vmatpush.msra.mxu0 0.0
    %919 = vmatpush.msra.mxu0 0.0
    %920 = vmatpush.msra.mxu0 0.0
    %921 = vmatpush.msra.mxu0 0.0
    %922 = vmatpush.msra.mxu0 0.0
    %923 = vmatpush.msra.mxu0 0.0
    %924 = vmatpush.msra.mxu0 %v143
    %925 = vmatpush.msra.mxu0 %v142
    %926 = vmatpush.msra.mxu0 %v141
    %927 = vmatpush.msra.mxu0 %v140
    %928 = vmatmul.f32.gmra.mxu0 %v907
    %v929 = vpop.f32.mrf.mxu0
    %v930 = vadd.f32 0.0, %v929
    %931 = vmatmul.f32.gmra.mxu0 %v910
    %v932 = vpop.f32.mrf.mxu0
    %v933 = vadd.f32 0.0, %v932
    %934 = vdwg.mxu0
    %v935 = vmul.f32 %v930, %v930
    %v936 = vmul.f32 %v933, %v933
    %v937 = vmul.f32 %v930, %v935
    %v938 = vmul.f32 %v933, %v936
    %v939 = vmul.f32 %v937, 0.044715
    %v940 = vmul.f32 %v938, 0.044715
    %v941 = vadd.f32 %v930, %v939
    %v942 = vadd.f32 %v933, %v940
    %v943 = vmul.f32 %v941, 0.7978846
    %v944 = vmul.f32 %v942, 0.7978846
    %v945 = vtanh.pop %v943
    %v946 = vtanh.pop %v944
    %v947 = vadd.f32 %v945, 1.0
    %v948 = vadd.f32 %v946, 1.0
    %v949 = vmul.f32 %v947, 0.5
    %v950 = vmul.f32 %v948, 0.5
    %v951 = vmul.f32 %v930, %v949
    %v952 = vmul.f32 %v933, %v950
    %955 = vrot.lane.b32.xlu0 %v930, 64
    %v956 = vpop.permute.xlu0 %955
    %957 = vrot.lane.b32.xlu0 %v933, 64
    %v958 = vpop.permute.xlu0 %957
    %v961 = vmul.f32 %v951, %v956
    %v962 = vmul.f32 %v952, %v958
    %vm963 = vcmask 523264
    %v965 = vsel %vm963, %v961, 0
    %v968 = vsel %vm963, %v962, 0
    %970 = vmatpush.msra.mxu0 0.0
    %971 = vmatpush.msra.mxu0 0.0
    %972 = vmatpush.msra.mxu0 0.0
    %973 = vmatpush.msra.mxu0 0.0
    %974 = vmatpush.msra.mxu0 0.0
    %975 = vmatpush.msra.mxu0 0.0
    %976 = vmatpush.msra.mxu0 0.0
    %977 = vmatpush.msra.mxu0 0.0
    %978 = vmatpush.msra.mxu0 %v151
    %979 = vmatpush.msra.mxu0 %v150
    %980 = vmatpush.msra.mxu0 %v149
    %981 = vmatpush.msra.mxu0 %v148
    %982 = vmatpush.msra.mxu0 %v147
    %983 = vmatpush.msra.mxu0 %v146
    %984 = vmatpush.msra.mxu0 %v145
    %985 = vmatpush.msra.mxu0 %v144
    %986 = vmatmul.f32.gmra.mxu0 %v965
    %v987 = vpop.f32.mrf.mxu0
    %v988 = vadd.f32 0.0, %v987
    %989 = vmatmul.f32.gmra.mxu0 %v968
    %v990 = vpop.f32.mrf.mxu0
    %v991 = vadd.f32 0.0, %v990
    %992 = vdwg.mxu0
    %v993 = vadd.f32 %v867, %v988
    %v994 = vadd.f32 %v868, %v991
    %v995 = vld [vmem:[%s4 + $0xa0] sm:$0x1]
    %v996 = vmul.f32 %v993, %v993
    %v997 = vmul.f32 %v994, %v994
    %v998 = vsel %vm154, %v996, 0.0
    %999 = vadd.xlane.f32.xlu0 %v998
    %v1000 = vpop.xlane.xlu0 %999
    %v1001 = vsel %vm154, %v997, 0.0
    %1002 = vadd.xlane.f32.xlu0 %v1001
    %v1003 = vpop.xlane.xlu0 %1002
    %v1004 = vmul.f32 %v1000, %v167
    %v1005 = vmul.f32 %v1003, %v167
    %v1006 = vadd.f32 %v1004, 1e-06
    %v1007 = vadd.f32 %v1005, 1e-06
    %v1008 = vrsqrt.pop %v1006
    %v1009 = vmul.f32 %v1008, %v1006
    %v1010 = vmul.f32 %v1009, %v1008
    %v1011 = vmul.f32 0.5, %v1010
    %v1012 = vsub.f32 1.5, %v1011
    %v1013 = vmul.f32 %v1008, %v1012
    %vm1014 = vweird.f32 %v1006
    %vm1015 = vweird.f32 %v1008
    %vm1016 = vmor %vm1014, %vm1015
    %v1017 = vsel %vm1016, %v1008, %v1013
    %v1018 = vrsqrt.pop %v1007
    %v1019 = vmul.f32 %v1018, %v1007
    %v1020 = vmul.f32 %v1019, %v1018
    %v1021 = vmul.f32 0.5, %v1020
    %v1022 = vsub.f32 1.5, %v1021
    %v1023 = vmul.f32 %v1018, %v1022
    %vm1024 = vweird.f32 %v1007
    %vm1025 = vweird.f32 %v1018
    %vm1026 = vmor %vm1024, %vm1025
    %v1027 = vsel %vm1026, %v1018, %v1023
    %v1028 = vmul.f32 %v993, %v1017
    %v1029 = vmul.f32 %v994, %v1027
    %v1030 = vperm.slane %v995, 0
    %v1031 = vmul.f32 %v1028, %v1030
    %v1032 = vmul.f32 %v1029, %v1030
    %1033 = vst.msk [vmem:[#allocation2] sm:$0xff] %vm154, %v1031
    %1034 = vst.msk [vmem:[#allocation2 + $0x8] sm:$0xff] %vm154, %v1032
    %v1035 = vld [vmem:[%s4 + $0x160] sm:$0x1]
    %v1036 = vld [vmem:[%s4 + $0x168] sm:$0xff]
    %v1037 = vld [vmem:[%s4 + $0x170] sm:$0xff]
    %v1038 = vld [vmem:[%s4 + $0x178] sm:$0xff]
    %v1039 = vld [vmem:[%s4 + $0x180] sm:$0xff]
    %v1040 = vld [vmem:[%s4 + $0x188] sm:$0xff]
    %v1041 = vld [vmem:[%s4 + $0x190] sm:$0xff]
    %v1042 = vld [vmem:[%s4 + $0x198] sm:$0xff]
    %v1043 = vld [vmem:[%s4 + $0x1a0] sm:$0xff]
    %v1044 = vld [vmem:[%s4 + $0x1a8] sm:$0x1]
    %v1045 = vld [vmem:[%s4 + $0x1b0] sm:$0xff]
    %v1046 = vld [vmem:[%s4 + $0x1b8] sm:$0xff]
    %v1047 = vld [vmem:[%s4 + $0x1c0] sm:$0xff]
    %v1048 = vld [vmem:[%s4 + $0x1c8] sm:$0xff]
    %v1049 = vld [vmem:[%s4 + $0x1d0] sm:$0xff]
    %v1050 = vld [vmem:[%s4 + $0x1d8] sm:$0xff]
    %v1051 = vld [vmem:[%s4 + $0x1e0] sm:$0xff]
    %v1052 = vld [vmem:[%s4 + $0x1e8] sm:$0xff]
    %v1053 = vld [vmem:[%s4 + $0x1f0] sm:$0xff]
    %v1054 = vld [vmem:[%s4 + $0x1f8] sm:$0xff]
    %v1055 = vld [vmem:[%s4 + $0x200] sm:$0xff]
    %v1056 = vld [vmem:[%s4 + $0x208] sm:$0xff]
    %v1057 = vld [vmem:[%s4 + $0x210] sm:$0x1]
    %v1058 = vld [vmem:[%s4 + $0x218] sm:$0xff]
    %v1059 = vld [vmem:[%s4 + $0x220] sm:$0xff]
    %v1060 = vld [vmem:[%s4 + $0x228] sm:$0xff]
    %v1061 = vld [vmem:[%s4 + $0x230] sm:$0xff]
    %v1062 = vld [vmem:[%s4 + $0x238] sm:$0xff]
    %v1063 = vld [vmem:[%s4 + $0x240] sm:$0xff]
    %v1064 = vld [vmem:[%s4 + $0x248] sm:$0xff]
    %v1065 = vld [vmem:[%s4 + $0x250] sm:$0xff]
    %v1066 = vld [vmem:[%s4 + $0x258] sm:$0xff]
    %v1067 = vld [vmem:[%s4 + $0x260] sm:$0xff]
    %v1068 = vld [vmem:[%s4 + $0x268] sm:$0xff]
    %v1069 = vld [vmem:[%s4 + $0x270] sm:$0xff]
    %v1070 = vmul.f32 %v112, %v112
    %v1071 = vmul.f32 %v115, %v115
    %v1072 = vsel %vm154, %v1070, 0.0
    %1073 = vadd.xlane.f32.xlu0 %v1072
    %v1074 = vpop.xlane.xlu0 %1073
    %v1075 = vsel %vm154, %v1071, 0.0
    %1076 = vadd.xlane.f32.xlu0 %v1075
    %v1077 = vpop.xlane.xlu0 %1076
    %v1078 = vmul.f32 %v1074, %v167
    %v1079 = vmul.f32 %v1077, %v167
    %v1080 = vadd.f32 %v1078, 1e-06
    %v1081 = vadd.f32 %v1079, 1e-06
    %v1082 = vrsqrt.pop %v1080
    %v1083 = vmul.f32 %v1082, %v1080
    %v1084 = vmul.f32 %v1083, %v1082
    %v1085 = vmul.f32 0.5, %v1084
    %v1086 = vsub.f32 1.5, %v1085
    %v1087 = vmul.f32 %v1082, %v1086
    %vm1088 = vweird.f32 %v1080
    %vm1089 = vweird.f32 %v1082
    %vm1090 = vmor %vm1088, %vm1089
    %v1091 = vsel %vm1090, %v1082, %v1087
    %v1092 = vrsqrt.pop %v1081
    %v1093 = vmul.f32 %v1092, %v1081
    %v1094 = vmul.f32 %v1093, %v1092
    %v1095 = vmul.f32 0.5, %v1094
    %v1096 = vsub.f32 1.5, %v1095
    %v1097 = vmul.f32 %v1092, %v1096
    %vm1098 = vweird.f32 %v1081
    %vm1099 = vweird.f32 %v1092
    %vm1100 = vmor %vm1098, %vm1099
    %v1101 = vsel %vm1100, %v1092, %v1097
    %v1102 = vmul.f32 %v112, %v1091
    %v1103 = vmul.f32 %v115, %v1101
    %v1104 = vperm.slane %v1035, 0
    %v1105 = vmul.f32 %v1102, %v1104
    %v1106 = vmul.f32 %v1103, %v1104
    %v1108 = vsel %vm154, %v1105, 0
    %v1111 = vsel %vm154, %v1106, 0
    %1113 = vmatpush.msra.mxu0 0.0
    %1114 = vmatpush.msra.mxu0 0.0
    %1115 = vmatpush.msra.mxu0 0.0
    %1116 = vmatpush.msra.mxu0 0.0
    %1117 = vmatpush.msra.mxu0 0.0
    %1118 = vmatpush.msra.mxu0 0.0
    %1119 = vmatpush.msra.mxu0 0.0
    %1120 = vmatpush.msra.mxu0 0.0
    %1121 = vmatpush.msra.mxu0 0.0
    %1122 = vmatpush.msra.mxu0 0.0
    %1123 = vmatpush.msra.mxu0 0.0
    %1124 = vmatpush.msra.mxu0 0.0
    %1125 = vmatpush.msra.mxu0 %v1039
    %1126 = vmatpush.msra.mxu0 %v1038
    %1127 = vmatpush.msra.mxu0 %v1037
    %1128 = vmatpush.msra.mxu0 %v1036
    %1129 = vmatmul.f32.gmra.mxu0 %v1108
    %v1130 = vpop.f32.mrf.mxu0
    %v1131 = vadd.f32 0.0, %v1130
    %1132 = vmatmul.f32.gmra.mxu0 %v1111
    %v1133 = vpop.f32.mrf.mxu0
    %v1134 = vadd.f32 0.0, %v1133
    %1135 = vdwg.mxu0
    %1138 = vrot.lane.b32.xlu0 %v1131, 120
    %v1139 = vpop.permute.xlu0 %1138
    %1140 = vrot.lane.b32.xlu0 %v1134, 120
    %v1141 = vpop.permute.xlu0 %1140
    %1142 = vrot.lane.b32.xlu0 %v1131, 112
    %v1143 = vpop.permute.xlu0 %1142
    %1144 = vrot.lane.b32.xlu0 %v1134, 112
    %v1145 = vpop.permute.xlu0 %1144
    %1146 = vrot.lane.b32.xlu0 %v1131, 104
    %v1147 = vpop.permute.xlu0 %1146
    %1148 = vrot.lane.b32.xlu0 %v1134, 104
    %v1149 = vpop.permute.xlu0 %1148
    %1150 = vrot.lane.b32.xlu0 %v1131, 96
    %v1151 = vpop.permute.xlu0 %1150
    %v1152 = vsel %vm242, %v1131, 0
    %v1154 = vsel %vm242, %v1151, 0
    %1156 = vmatpush.xpose.msra.mxu0 0.0
    %1157 = vmatpush.xpose.msra.mxu0 0.0
    %1158 = vmatpush.xpose.msra.mxu0 0.0
    %1159 = vmatpush.xpose.msra.mxu0 0.0
    %1160 = vmatpush.xpose.msra.mxu0 0.0
    %1161 = vmatpush.xpose.msra.mxu0 0.0
    %1162 = vmatpush.xpose.msra.mxu0 0.0
    %1163 = vmatpush.xpose.msra.mxu0 0.0
    %1164 = vmatpush.xpose.msra.mxu0 0.0
    %1165 = vmatpush.xpose.msra.mxu0 0.0
    %1166 = vmatpush.xpose.msra.mxu0 0.0
    %1167 = vmatpush.xpose.msra.mxu0 0.0
    %1168 = vmatpush.xpose.msra.mxu0 0.0
    %1169 = vmatpush.xpose.msra.mxu0 0.0
    %1170 = vmatpush.xpose.msra.mxu0 0.0
    %1171 = vmatpush.xpose.msra.mxu0 %v1154
    %1172 = vmatmul.f32.gmra.mxu0 %v1152
    %v1173 = vpop.f32.mrf.mxu0
    %v1174 = vadd.f32 %v123, %v1173
    %1175 = vdwg.mxu0
    %1176 = vrot.lane.b32.xlu0 %v1134, 96
    %v1177 = vpop.permute.xlu0 %1176
    %v1178 = vsel %vm242, %v1134, 0
    %v1180 = vsel %vm242, %v1177, 0
    %1182 = vmatpush.xpose.msra.mxu0 0.0
    %1183 = vmatpush.xpose.msra.mxu0 0.0
    %1184 = vmatpush.xpose.msra.mxu0 0.0
    %1185 = vmatpush.xpose.msra.mxu0 0.0
    %1186 = vmatpush.xpose.msra.mxu0 0.0
    %1187 = vmatpush.xpose.msra.mxu0 0.0
    %1188 = vmatpush.xpose.msra.mxu0 0.0
    %1189 = vmatpush.xpose.msra.mxu0 0.0
    %1190 = vmatpush.xpose.msra.mxu0 0.0
    %1191 = vmatpush.xpose.msra.mxu0 0.0
    %1192 = vmatpush.xpose.msra.mxu0 0.0
    %1193 = vmatpush.xpose.msra.mxu0 0.0
    %1194 = vmatpush.xpose.msra.mxu0 0.0
    %1195 = vmatpush.xpose.msra.mxu0 0.0
    %1196 = vmatpush.xpose.msra.mxu0 0.0
    %1197 = vmatpush.xpose.msra.mxu0 %v1180
    %1198 = vmatmul.f32.gmra.mxu0 %v1178
    %v1199 = vpop.f32.mrf.mxu0
    %v1200 = vadd.f32 %v123, %v1199
    %1201 = vdwg.mxu0
    %1202 = vrot.lane.b32.xlu0 %v1139, 96
    %v1203 = vpop.permute.xlu0 %1202
    %v1204 = vsel %vm242, %v1139, 0
    %v1206 = vsel %vm242, %v1203, 0
    %1208 = vmatpush.xpose.msra.mxu0 0.0
    %1209 = vmatpush.xpose.msra.mxu0 0.0
    %1210 = vmatpush.xpose.msra.mxu0 0.0
    %1211 = vmatpush.xpose.msra.mxu0 0.0
    %1212 = vmatpush.xpose.msra.mxu0 0.0
    %1213 = vmatpush.xpose.msra.mxu0 0.0
    %1214 = vmatpush.xpose.msra.mxu0 0.0
    %1215 = vmatpush.xpose.msra.mxu0 0.0
    %1216 = vmatpush.xpose.msra.mxu0 0.0
    %1217 = vmatpush.xpose.msra.mxu0 0.0
    %1218 = vmatpush.xpose.msra.mxu0 0.0
    %1219 = vmatpush.xpose.msra.mxu0 0.0
    %1220 = vmatpush.xpose.msra.mxu0 0.0
    %1221 = vmatpush.xpose.msra.mxu0 0.0
    %1222 = vmatpush.xpose.msra.mxu0 0.0
    %1223 = vmatpush.xpose.msra.mxu0 %v1206
    %1224 = vmatmul.f32.gmra.mxu0 %v1204
    %v1225 = vpop.f32.mrf.mxu0
    %v1226 = vadd.f32 %v123, %v1225
    %1227 = vdwg.mxu0
    %1228 = vrot.lane.b32.xlu0 %v1141, 96
    %v1229 = vpop.permute.xlu0 %1228
    %v1230 = vsel %vm242, %v1141, 0
    %v1232 = vsel %vm242, %v1229, 0
    %1234 = vmatpush.xpose.msra.mxu0 0.0
    %1235 = vmatpush.xpose.msra.mxu0 0.0
    %1236 = vmatpush.xpose.msra.mxu0 0.0
    %1237 = vmatpush.xpose.msra.mxu0 0.0
    %1238 = vmatpush.xpose.msra.mxu0 0.0
    %1239 = vmatpush.xpose.msra.mxu0 0.0
    %1240 = vmatpush.xpose.msra.mxu0 0.0
    %1241 = vmatpush.xpose.msra.mxu0 0.0
    %1242 = vmatpush.xpose.msra.mxu0 0.0
    %1243 = vmatpush.xpose.msra.mxu0 0.0
    %1244 = vmatpush.xpose.msra.mxu0 0.0
    %1245 = vmatpush.xpose.msra.mxu0 0.0
    %1246 = vmatpush.xpose.msra.mxu0 0.0
    %1247 = vmatpush.xpose.msra.mxu0 0.0
    %1248 = vmatpush.xpose.msra.mxu0 0.0
    %1249 = vmatpush.xpose.msra.mxu0 %v1232
    %1250 = vmatmul.f32.gmra.mxu0 %v1230
    %v1251 = vpop.f32.mrf.mxu0
    %v1252 = vadd.f32 %v123, %v1251
    %1253 = vdwg.mxu0
    %1254 = vrot.lane.b32.xlu0 %v1143, 96
    %v1255 = vpop.permute.xlu0 %1254
    %v1256 = vsel %vm242, %v1143, 0
    %v1258 = vsel %vm242, %v1255, 0
    %1260 = vmatpush.xpose.msra.mxu0 0.0
    %1261 = vmatpush.xpose.msra.mxu0 0.0
    %1262 = vmatpush.xpose.msra.mxu0 0.0
    %1263 = vmatpush.xpose.msra.mxu0 0.0
    %1264 = vmatpush.xpose.msra.mxu0 0.0
    %1265 = vmatpush.xpose.msra.mxu0 0.0
    %1266 = vmatpush.xpose.msra.mxu0 0.0
    %1267 = vmatpush.xpose.msra.mxu0 0.0
    %1268 = vmatpush.xpose.msra.mxu0 0.0
    %1269 = vmatpush.xpose.msra.mxu0 0.0
    %1270 = vmatpush.xpose.msra.mxu0 0.0
    %1271 = vmatpush.xpose.msra.mxu0 0.0
    %1272 = vmatpush.xpose.msra.mxu0 0.0
    %1273 = vmatpush.xpose.msra.mxu0 0.0
    %1274 = vmatpush.xpose.msra.mxu0 0.0
    %1275 = vmatpush.xpose.msra.mxu0 %v1258
    %1276 = vmatmul.f32.gmra.mxu0 %v1256
    %v1277 = vpop.f32.mrf.mxu0
    %v1278 = vadd.f32 %v123, %v1277
    %1279 = vdwg.mxu0
    %1280 = vrot.lane.b32.xlu0 %v1145, 96
    %v1281 = vpop.permute.xlu0 %1280
    %v1282 = vsel %vm242, %v1145, 0
    %v1284 = vsel %vm242, %v1281, 0
    %1286 = vmatpush.xpose.msra.mxu0 0.0
    %1287 = vmatpush.xpose.msra.mxu0 0.0
    %1288 = vmatpush.xpose.msra.mxu0 0.0
    %1289 = vmatpush.xpose.msra.mxu0 0.0
    %1290 = vmatpush.xpose.msra.mxu0 0.0
    %1291 = vmatpush.xpose.msra.mxu0 0.0
    %1292 = vmatpush.xpose.msra.mxu0 0.0
    %1293 = vmatpush.xpose.msra.mxu0 0.0
    %1294 = vmatpush.xpose.msra.mxu0 0.0
    %1295 = vmatpush.xpose.msra.mxu0 0.0
    %1296 = vmatpush.xpose.msra.mxu0 0.0
    %1297 = vmatpush.xpose.msra.mxu0 0.0
    %1298 = vmatpush.xpose.msra.mxu0 0.0
    %1299 = vmatpush.xpose.msra.mxu0 0.0
    %1300 = vmatpush.xpose.msra.mxu0 0.0
    %1301 = vmatpush.xpose.msra.mxu0 %v1284
    %1302 = vmatmul.f32.gmra.mxu0 %v1282
    %v1303 = vpop.f32.mrf.mxu0
    %v1304 = vadd.f32 %v123, %v1303
    %1305 = vdwg.mxu0
    %1306 = vrot.lane.b32.xlu0 %v1147, 96
    %v1307 = vpop.permute.xlu0 %1306
    %v1308 = vsel %vm242, %v1147, 0
    %v1310 = vsel %vm242, %v1307, 0
    %1312 = vmatpush.xpose.msra.mxu0 0.0
    %1313 = vmatpush.xpose.msra.mxu0 0.0
    %1314 = vmatpush.xpose.msra.mxu0 0.0
    %1315 = vmatpush.xpose.msra.mxu0 0.0
    %1316 = vmatpush.xpose.msra.mxu0 0.0
    %1317 = vmatpush.xpose.msra.mxu0 0.0
    %1318 = vmatpush.xpose.msra.mxu0 0.0
    %1319 = vmatpush.xpose.msra.mxu0 0.0
    %1320 = vmatpush.xpose.msra.mxu0 0.0
    %1321 = vmatpush.xpose.msra.mxu0 0.0
    %1322 = vmatpush.xpose.msra.mxu0 0.0
    %1323 = vmatpush.xpose.msra.mxu0 0.0
    %1324 = vmatpush.xpose.msra.mxu0 0.0
    %1325 = vmatpush.xpose.msra.mxu0 0.0
    %1326 = vmatpush.xpose.msra.mxu0 0.0
    %1327 = vmatpush.xpose.msra.mxu0 %v1310
    %1328 = vmatmul.f32.gmra.mxu0 %v1308
    %v1329 = vpop.f32.mrf.mxu0
    %v1330 = vadd.f32 %v123, %v1329
    %1331 = vdwg.mxu0
    %1332 = vrot.lane.b32.xlu0 %v1149, 96
    %v1333 = vpop.permute.xlu0 %1332
    %v1334 = vsel %vm242, %v1149, 0
    %v1336 = vsel %vm242, %v1333, 0
    %1338 = vmatpush.xpose.msra.mxu0 0.0
    %1339 = vmatpush.xpose.msra.mxu0 0.0
    %1340 = vmatpush.xpose.msra.mxu0 0.0
    %1341 = vmatpush.xpose.msra.mxu0 0.0
    %1342 = vmatpush.xpose.msra.mxu0 0.0
    %1343 = vmatpush.xpose.msra.mxu0 0.0
    %1344 = vmatpush.xpose.msra.mxu0 0.0
    %1345 = vmatpush.xpose.msra.mxu0 0.0
    %1346 = vmatpush.xpose.msra.mxu0 0.0
    %1347 = vmatpush.xpose.msra.mxu0 0.0
    %1348 = vmatpush.xpose.msra.mxu0 0.0
    %1349 = vmatpush.xpose.msra.mxu0 0.0
    %1350 = vmatpush.xpose.msra.mxu0 0.0
    %1351 = vmatpush.xpose.msra.mxu0 0.0
    %1352 = vmatpush.xpose.msra.mxu0 0.0
    %1353 = vmatpush.xpose.msra.mxu0 %v1336
    %1354 = vmatmul.f32.gmra.mxu0 %v1334
    %v1355 = vpop.f32.mrf.mxu0
    %v1356 = vadd.f32 %v123, %v1355
    %1357 = vdwg.mxu0
    %v1358 = vsel %vm242, %v1174, -inf
    %1359 = vmax.xlane.f32.xlu0 %v1358
    %v1360 = vpop.xlane.xlu0 %1359
    %v1361 = vsel %vm242, %v1200, -inf
    %1362 = vmax.xlane.f32.xlu0 %v1361
    %v1363 = vpop.xlane.xlu0 %1362
    %v1364 = vsel %vm242, %v1226, -inf
    %1365 = vmax.xlane.f32.xlu0 %v1364
    %v1366 = vpop.xlane.xlu0 %1365
    %v1367 = vsel %vm242, %v1252, -inf
    %1368 = vmax.xlane.f32.xlu0 %v1367
    %v1369 = vpop.xlane.xlu0 %1368
    %v1370 = vsel %vm242, %v1278, -inf
    %1371 = vmax.xlane.f32.xlu0 %v1370
    %v1372 = vpop.xlane.xlu0 %1371
    %v1373 = vsel %vm242, %v1304, -inf
    %1374 = vmax.xlane.f32.xlu0 %v1373
    %v1375 = vpop.xlane.xlu0 %1374
    %v1376 = vsel %vm242, %v1330, -inf
    %1377 = vmax.xlane.f32.xlu0 %v1376
    %v1378 = vpop.xlane.xlu0 %1377
    %v1379 = vsel %vm242, %v1356, -inf
    %1380 = vmax.xlane.f32.xlu0 %v1379
    %v1381 = vpop.xlane.xlu0 %1380
    %v1382 = vsub.f32 %v1174, %v1360
    %v1383 = vsub.f32 %v1200, %v1363
    %v1384 = vsub.f32 %v1226, %v1366
    %v1385 = vsub.f32 %v1252, %v1369
    %v1386 = vsub.f32 %v1278, %v1372
    %v1387 = vsub.f32 %v1304, %v1375
    %v1388 = vsub.f32 %v1330, %v1378
    %v1389 = vsub.f32 %v1356, %v1381
    %v1390 = vmul.f32 %v1382, 1.442695
    %v1391 = vpow.pop %v1390
    %v1392 = vmul.f32 %v1383, 1.442695
    %v1393 = vpow.pop %v1392
    %v1394 = vmul.f32 %v1384, 1.442695
    %v1395 = vpow.pop %v1394
    %v1396 = vmul.f32 %v1385, 1.442695
    %v1397 = vpow.pop %v1396
    %v1398 = vmul.f32 %v1386, 1.442695
    %v1399 = vpow.pop %v1398
    %v1400 = vmul.f32 %v1387, 1.442695
    %v1401 = vpow.pop %v1400
    %v1402 = vmul.f32 %v1388, 1.442695
    %v1403 = vpow.pop %v1402
    %v1404 = vmul.f32 %v1389, 1.442695
    %v1405 = vpow.pop %v1404
    %v1406 = vsel %vm242, %v1391, 0.0
    %1407 = vadd.xlane.f32.xlu0 %v1406
    %v1408 = vpop.xlane.xlu0 %1407
    %v1409 = vsel %vm242, %v1393, 0.0
    %1410 = vadd.xlane.f32.xlu0 %v1409
    %v1411 = vpop.xlane.xlu0 %1410
    %v1412 = vsel %vm242, %v1395, 0.0
    %1413 = vadd.xlane.f32.xlu0 %v1412
    %v1414 = vpop.xlane.xlu0 %1413
    %v1415 = vsel %vm242, %v1397, 0.0
    %1416 = vadd.xlane.f32.xlu0 %v1415
    %v1417 = vpop.xlane.xlu0 %1416
    %v1418 = vsel %vm242, %v1399, 0.0
    %1419 = vadd.xlane.f32.xlu0 %v1418
    %v1420 = vpop.xlane.xlu0 %1419
    %v1421 = vsel %vm242, %v1401, 0.0
    %1422 = vadd.xlane.f32.xlu0 %v1421
    %v1423 = vpop.xlane.xlu0 %1422
    %v1424 = vsel %vm242, %v1403, 0.0
    %1425 = vadd.xlane.f32.xlu0 %v1424
    %v1426 = vpop.xlane.xlu0 %1425
    %v1427 = vsel %vm242, %v1405, 0.0
    %1428 = vadd.xlane.f32.xlu0 %v1427
    %v1429 = vpop.xlane.xlu0 %1428
    %v1430 = vrcp.pop %v1408
    %v1431 = vrcp.pop %v1411
    %v1432 = vrcp.pop %v1414
    %v1433 = vrcp.pop %v1417
    %v1434 = vrcp.pop %v1420
    %v1435 = vrcp.pop %v1423
    %v1436 = vrcp.pop %v1426
    %v1437 = vrcp.pop %v1429
    %v1438 = vmul.f32 %v1391, %v1430
    %v1439 = vmul.f32 %v1393, %v1431
    %v1440 = vmul.f32 %v1395, %v1432
    %v1441 = vmul.f32 %v1397, %v1433
    %v1442 = vmul.f32 %v1399, %v1434
    %v1443 = vmul.f32 %v1401, %v1435
    %v1444 = vmul.f32 %v1403, %v1436
    %v1445 = vmul.f32 %v1405, %v1437
    %1446 = vrot.lane.b32.xlu0 %v1131, 64
    %v1447 = vpop.permute.xlu0 %1446
    %v1450 = vsel %vm242, %v1438, 0
    %1452 = vmatpush.msra.mxu0 0.0
    %1453 = vmatpush.msra.mxu0 0.0
    %1454 = vmatpush.msra.mxu0 0.0
    %1455 = vmatpush.msra.mxu0 0.0
    %1456 = vmatpush.msra.mxu0 0.0
    %1457 = vmatpush.msra.mxu0 0.0
    %1458 = vmatpush.msra.mxu0 0.0
    %1459 = vmatpush.msra.mxu0 0.0
    %1460 = vmatpush.msra.mxu0 0.0
    %1461 = vmatpush.msra.mxu0 0.0
    %1462 = vmatpush.msra.mxu0 0.0
    %1463 = vmatpush.msra.mxu0 0.0
    %1464 = vmatpush.msra.mxu0 0.0
    %1465 = vmatpush.msra.mxu0 0.0
    %1466 = vmatpush.msra.mxu0 0.0
    %1467 = vmatpush.msra.mxu0 %v1447
    %1468 = vmatmul.f32.gmra.mxu0 %v1450
    %v1469 = vpop.f32.mrf.mxu0
    %v1470 = vadd.f32 0.0, %v1469
    %1471 = vdwg.mxu0
    %1472 = vrot.lane.b32.xlu0 %v1134, 64
    %v1473 = vpop.permute.xlu0 %1472
    %v1476 = vsel %vm242, %v1439, 0
    %1478 = vmatpush.msra.mxu0 0.0
    %1479 = vmatpush.msra.mxu0 0.0
    %1480 = vmatpush.msra.mxu0 0.0
    %1481 = vmatpush.msra.mxu0 0.0
    %1482 = vmatpush.msra.mxu0 0.0
    %1483 = vmatpush.msra.mxu0 0.0
    %1484 = vmatpush.msra.mxu0 0.0
    %1485 = vmatpush.msra.mxu0 0.0
    %1486 = vmatpush.msra.mxu0 0.0
    %1487 = vmatpush.msra.mxu0 0.0
    %1488 = vmatpush.msra.mxu0 0.0
    %1489 = vmatpush.msra.mxu0 0.0
    %1490 = vmatpush.msra.mxu0 0.0
    %1491 = vmatpush.msra.mxu0 0.0
    %1492 = vmatpush.msra.mxu0 0.0
    %1493 = vmatpush.msra.mxu0 %v1473
    %1494 = vmatmul.f32.gmra.mxu0 %v1476
    %v1495 = vpop.f32.mrf.mxu0
    %v1496 = vadd.f32 0.0, %v1495
    %1497 = vdwg.mxu0
    %1498 = vrot.lane.b32.xlu0 %v1139, 64
    %v1499 = vpop.permute.xlu0 %1498
    %v1502 = vsel %vm242, %v1440, 0
    %1504 = vmatpush.msra.mxu0 0.0
    %1505 = vmatpush.msra.mxu0 0.0
    %1506 = vmatpush.msra.mxu0 0.0
    %1507 = vmatpush.msra.mxu0 0.0
    %1508 = vmatpush.msra.mxu0 0.0
    %1509 = vmatpush.msra.mxu0 0.0
    %1510 = vmatpush.msra.mxu0 0.0
    %1511 = vmatpush.msra.mxu0 0.0
    %1512 = vmatpush.msra.mxu0 0.0
    %1513 = vmatpush.msra.mxu0 0.0
    %1514 = vmatpush.msra.mxu0 0.0
    %1515 = vmatpush.msra.mxu0 0.0
    %1516 = vmatpush.msra.mxu0 0.0
    %1517 = vmatpush.msra.mxu0 0.0
    %1518 = vmatpush.msra.mxu0 0.0
    %1519 = vmatpush.msra.mxu0 %v1499
    %1520 = vmatmul.f32.gmra.mxu0 %v1502
    %v1521 = vpop.f32.mrf.mxu0
    %v1522 = vadd.f32 0.0, %v1521
    %1523 = vdwg.mxu0
    %1524 = vrot.lane.b32.xlu0 %v1141, 64
    %v1525 = vpop.permute.xlu0 %1524
    %v1528 = vsel %vm242, %v1441, 0
    %1530 = vmatpush.msra.mxu0 0.0
    %1531 = vmatpush.msra.mxu0 0.0
    %1532 = vmatpush.msra.mxu0 0.0
    %1533 = vmatpush.msra.mxu0 0.0
    %1534 = vmatpush.msra.mxu0 0.0
    %1535 = vmatpush.msra.mxu0 0.0
    %1536 = vmatpush.msra.mxu0 0.0
    %1537 = vmatpush.msra.mxu0 0.0
    %1538 = vmatpush.msra.mxu0 0.0
    %1539 = vmatpush.msra.mxu0 0.0
    %1540 = vmatpush.msra.mxu0 0.0
    %1541 = vmatpush.msra.mxu0 0.0
    %1542 = vmatpush.msra.mxu0 0.0
    %1543 = vmatpush.msra.mxu0 0.0
    %1544 = vmatpush.msra.mxu0 0.0
    %1545 = vmatpush.msra.mxu0 %v1525
    %1546 = vmatmul.f32.gmra.mxu0 %v1528
    %v1547 = vpop.f32.mrf.mxu0
    %v1548 = vadd.f32 0.0, %v1547
    %1549 = vdwg.mxu0
    %1550 = vrot.lane.b32.xlu0 %v1143, 64
    %v1551 = vpop.permute.xlu0 %1550
    %v1554 = vsel %vm242, %v1442, 0
    %1556 = vmatpush.msra.mxu0 0.0
    %1557 = vmatpush.msra.mxu0 0.0
    %1558 = vmatpush.msra.mxu0 0.0
    %1559 = vmatpush.msra.mxu0 0.0
    %1560 = vmatpush.msra.mxu0 0.0
    %1561 = vmatpush.msra.mxu0 0.0
    %1562 = vmatpush.msra.mxu0 0.0
    %1563 = vmatpush.msra.mxu0 0.0
    %1564 = vmatpush.msra.mxu0 0.0
    %1565 = vmatpush.msra.mxu0 0.0
    %1566 = vmatpush.msra.mxu0 0.0
    %1567 = vmatpush.msra.mxu0 0.0
    %1568 = vmatpush.msra.mxu0 0.0
    %1569 = vmatpush.msra.mxu0 0.0
    %1570 = vmatpush.msra.mxu0 0.0
    %1571 = vmatpush.msra.mxu0 %v1551
    %1572 = vmatmul.f32.gmra.mxu0 %v1554
    %v1573 = vpop.f32.mrf.mxu0
    %v1574 = vadd.f32 0.0, %v1573
    %1575 = vdwg.mxu0
    %1576 = vrot.lane.b32.xlu0 %v1145, 64
    %v1577 = vpop.permute.xlu0 %1576
    %v1580 = vsel %vm242, %v1443, 0
    %1582 = vmatpush.msra.mxu0 0.0
    %1583 = vmatpush.msra.mxu0 0.0
    %1584 = vmatpush.msra.mxu0 0.0
    %1585 = vmatpush.msra.mxu0 0.0
    %1586 = vmatpush.msra.mxu0 0.0
    %1587 = vmatpush.msra.mxu0 0.0
    %1588 = vmatpush.msra.mxu0 0.0
    %1589 = vmatpush.msra.mxu0 0.0
    %1590 = vmatpush.msra.mxu0 0.0
    %1591 = vmatpush.msra.mxu0 0.0
    %1592 = vmatpush.msra.mxu0 0.0
    %1593 = vmatpush.msra.mxu0 0.0
    %1594 = vmatpush.msra.mxu0 0.0
    %1595 = vmatpush.msra.mxu0 0.0
    %1596 = vmatpush.msra.mxu0 0.0
    %1597 = vmatpush.msra.mxu0 %v1577
    %1598 = vmatmul.f32.gmra.mxu0 %v1580
    %v1599 = vpop.f32.mrf.mxu0
    %v1600 = vadd.f32 0.0, %v1599
    %1601 = vdwg.mxu0
    %1602 = vrot.lane.b32.xlu0 %v1147, 64
    %v1603 = vpop.permute.xlu0 %1602
    %v1606 = vsel %vm242, %v1444, 0
    %1608 = vmatpush.msra.mxu0 0.0
    %1609 = vmatpush.msra.mxu0 0.0
    %1610 = vmatpush.msra.mxu0 0.0
    %1611 = vmatpush.msra.mxu0 0.0
    %1612 = vmatpush.msra.mxu0 0.0
    %1613 = vmatpush.msra.mxu0 0.0
    %1614 = vmatpush.msra.mxu0 0.0
    %1615 = vmatpush.msra.mxu0 0.0
    %1616 = vmatpush.msra.mxu0 0.0
    %1617 = vmatpush.msra.mxu0 0.0
    %1618 = vmatpush.msra.mxu0 0.0
    %1619 = vmatpush.msra.mxu0 0.0
    %1620 = vmatpush.msra.mxu0 0.0
    %1621 = vmatpush.msra.mxu0 0.0
    %1622 = vmatpush.msra.mxu0 0.0
    %1623 = vmatpush.msra.mxu0 %v1603
    %1624 = vmatmul.f32.gmra.mxu0 %v1606
    %v1625 = vpop.f32.mrf.mxu0
    %v1626 = vadd.f32 0.0, %v1625
    %1627 = vdwg.mxu0
    %1628 = vrot.lane.b32.xlu0 %v1149, 64
    %v1629 = vpop.permute.xlu0 %1628
    %v1632 = vsel %vm242, %v1445, 0
    %1634 = vmatpush.msra.mxu0 0.0
    %1635 = vmatpush.msra.mxu0 0.0
    %1636 = vmatpush.msra.mxu0 0.0
    %1637 = vmatpush.msra.mxu0 0.0
    %1638 = vmatpush.msra.mxu0 0.0
    %1639 = vmatpush.msra.mxu0 0.0
    %1640 = vmatpush.msra.mxu0 0.0
    %1641 = vmatpush.msra.mxu0 0.0
    %1642 = vmatpush.msra.mxu0 0.0
    %1643 = vmatpush.msra.mxu0 0.0
    %1644 = vmatpush.msra.mxu0 0.0
    %1645 = vmatpush.msra.mxu0 0.0
    %1646 = vmatpush.msra.mxu0 0.0
    %1647 = vmatpush.msra.mxu0 0.0
    %1648 = vmatpush.msra.mxu0 0.0
    %1649 = vmatpush.msra.mxu0 %v1629
    %1650 = vmatmul.f32.gmra.mxu0 %v1632
    %v1651 = vpop.f32.mrf.mxu0
    %v1652 = vadd.f32 0.0, %v1651
    %1653 = vdwg.mxu0
    %v1655 = vsel %vm242, %v1470, 0
    %v1658 = vsel %vm242, %v1496, 0
    %1660 = vmatpush.msra.mxu0 0.0
    %1661 = vmatpush.msra.mxu0 0.0
    %1662 = vmatpush.msra.mxu0 0.0
    %1663 = vmatpush.msra.mxu0 0.0
    %1664 = vmatpush.msra.mxu0 0.0
    %1665 = vmatpush.msra.mxu0 0.0
    %1666 = vmatpush.msra.mxu0 0.0
    %1667 = vmatpush.msra.mxu0 0.0
    %1668 = vmatpush.msra.mxu0 0.0
    %1669 = vmatpush.msra.mxu0 0.0
    %1670 = vmatpush.msra.mxu0 0.0
    %1671 = vmatpush.msra.mxu0 0.0
    %1672 = vmatpush.msra.mxu0 0.0
    %1673 = vmatpush.msra.mxu0 0.0
    %1674 = vmatpush.msra.mxu0 0.0
    %1675 = vmatpush.msra.mxu0 %v1040
    %1676 = vmatmul.f32.gmra.mxu0 %v1655
    %v1677 = vpop.f32.mrf.mxu0
    %v1678 = vadd.f32 0.0, %v1677
    %1679 = vmatmul.f32.gmra.mxu0 %v1658
    %v1680 = vpop.f32.mrf.mxu0
    %v1681 = vadd.f32 0.0, %v1680
    %1682 = vdwg.mxu0
    %v1684 = vsel %vm242, %v1522, 0
    %v1687 = vsel %vm242, %v1548, 0
    %1689 = vmatpush.msra.mxu0 0.0
    %1690 = vmatpush.msra.mxu0 0.0
    %1691 = vmatpush.msra.mxu0 0.0
    %1692 = vmatpush.msra.mxu0 0.0
    %1693 = vmatpush.msra.mxu0 0.0
    %1694 = vmatpush.msra.mxu0 0.0
    %1695 = vmatpush.msra.mxu0 0.0
    %1696 = vmatpush.msra.mxu0 0.0
    %1697 = vmatpush.msra.mxu0 0.0
    %1698 = vmatpush.msra.mxu0 0.0
    %1699 = vmatpush.msra.mxu0 0.0
    %1700 = vmatpush.msra.mxu0 0.0
    %1701 = vmatpush.msra.mxu0 0.0
    %1702 = vmatpush.msra.mxu0 0.0
    %1703 = vmatpush.msra.mxu0 0.0
    %1704 = vmatpush.msra.mxu0 %v1041
    %1705 = vmatmul.f32.gmra.mxu0 %v1684
    %v1706 = vpop.f32.mrf.mxu0
    %v1707 = vadd.f32 0.0, %v1706
    %1708 = vmatmul.f32.gmra.mxu0 %v1687
    %v1709 = vpop.f32.mrf.mxu0
    %v1710 = vadd.f32 0.0, %v1709
    %1711 = vdwg.mxu0
    %v1713 = vsel %vm242, %v1574, 0
    %v1716 = vsel %vm242, %v1600, 0
    %1718 = vmatpush.msra.mxu0 0.0
    %1719 = vmatpush.msra.mxu0 0.0
    %1720 = vmatpush.msra.mxu0 0.0
    %1721 = vmatpush.msra.mxu0 0.0
    %1722 = vmatpush.msra.mxu0 0.0
    %1723 = vmatpush.msra.mxu0 0.0
    %1724 = vmatpush.msra.mxu0 0.0
    %1725 = vmatpush.msra.mxu0 0.0
    %1726 = vmatpush.msra.mxu0 0.0
    %1727 = vmatpush.msra.mxu0 0.0
    %1728 = vmatpush.msra.mxu0 0.0
    %1729 = vmatpush.msra.mxu0 0.0
    %1730 = vmatpush.msra.mxu0 0.0
    %1731 = vmatpush.msra.mxu0 0.0
    %1732 = vmatpush.msra.mxu0 0.0
    %1733 = vmatpush.msra.mxu0 %v1042
    %1734 = vmatmul.f32.gmra.mxu0 %v1713
    %v1735 = vpop.f32.mrf.mxu0
    %v1736 = vadd.f32 0.0, %v1735
    %1737 = vmatmul.f32.gmra.mxu0 %v1716
    %v1738 = vpop.f32.mrf.mxu0
    %v1739 = vadd.f32 0.0, %v1738
    %1740 = vdwg.mxu0
    %v1742 = vsel %vm242, %v1626, 0
    %v1745 = vsel %vm242, %v1652, 0
    %1747 = vmatpush.msra.mxu0 0.0
    %1748 = vmatpush.msra.mxu0 0.0
    %1749 = vmatpush.msra.mxu0 0.0
    %1750 = vmatpush.msra.mxu0 0.0
    %1751 = vmatpush.msra.mxu0 0.0
    %1752 = vmatpush.msra.mxu0 0.0
    %1753 = vmatpush.msra.mxu0 0.0
    %1754 = vmatpush.msra.mxu0 0.0
    %1755 = vmatpush.msra.mxu0 0.0
    %1756 = vmatpush.msra.mxu0 0.0
    %1757 = vmatpush.msra.mxu0 0.0
    %1758 = vmatpush.msra.mxu0 0.0
    %1759 = vmatpush.msra.mxu0 0.0
    %1760 = vmatpush.msra.mxu0 0.0
    %1761 = vmatpush.msra.mxu0 0.0
    %1762 = vmatpush.msra.mxu0 %v1043
    %1763 = vmatmul.f32.gmra.mxu0 %v1742
    %v1764 = vpop.f32.mrf.mxu0
    %v1765 = vadd.f32 0.0, %v1764
    %1766 = vmatmul.f32.gmra.mxu0 %v1745
    %v1767 = vpop.f32.mrf.mxu0
    %v1768 = vadd.f32 0.0, %v1767
    %1769 = vdwg.mxu0
    %v1770 = vadd.f32 %v1678, %v1707
    %v1771 = vadd.f32 %v1681, %v1710
    %v1772 = vadd.f32 %v1770, %v1736
    %v1773 = vadd.f32 %v1771, %v1739
    %v1774 = vadd.f32 %v1772, %v1765
    %v1775 = vadd.f32 %v1773, %v1768
    %v1776 = vadd.f32 %v112, %v1774
    %v1777 = vadd.f32 %v115, %v1775
    %v1778 = vmul.f32 %v1776, %v1776
    %v1779 = vmul.f32 %v1777, %v1777
    %v1780 = vsel %vm154, %v1778, 0.0
    %1781 = vadd.xlane.f32.xlu0 %v1780
    %v1782 = vpop.xlane.xlu0 %1781
    %v1783 = vsel %vm154, %v1779, 0.0
    %1784 = vadd.xlane.f32.xlu0 %v1783
    %v1785 = vpop.xlane.xlu0 %1784
    %v1786 = vmul.f32 %v1782, %v167
    %v1787 = vmul.f32 %v1785, %v167
    %v1788 = vadd.f32 %v1786, 1e-06
    %v1789 = vadd.f32 %v1787, 1e-06
    %v1790 = vrsqrt.pop %v1788
    %v1791 = vmul.f32 %v1790, %v1788
    %v1792 = vmul.f32 %v1791, %v1790
    %v1793 = vmul.f32 0.5, %v1792
    %v1794 = vsub.f32 1.5, %v1793
    %v1795 = vmul.f32 %v1790, %v1794
    %vm1796 = vweird.f32 %v1788
    %vm1797 = vweird.f32 %v1790
    %vm1798 = vmor %vm1796, %vm1797
    %v1799 = vsel %vm1798, %v1790, %v1795
    %v1800 = vrsqrt.pop %v1789
    %v1801 = vmul.f32 %v1800, %v1789
    %v1802 = vmul.f32 %v1801, %v1800
    %v1803 = vmul.f32 0.5, %v1802
    %v1804 = vsub.f32 1.5, %v1803
    %v1805 = vmul.f32 %v1800, %v1804
    %vm1806 = vweird.f32 %v1789
    %vm1807 = vweird.f32 %v1800
    %vm1808 = vmor %vm1806, %vm1807
    %v1809 = vsel %vm1808, %v1800, %v1805
    %v1810 = vmul.f32 %v1776, %v1799
    %v1811 = vmul.f32 %v1777, %v1809
    %v1812 = vperm.slane %v1044, 0
    %v1813 = vmul.f32 %v1810, %v1812
    %v1814 = vmul.f32 %v1811, %v1812
    %v1816 = vsel %vm154, %v1813, 0
    %v1819 = vsel %vm154, %v1814, 0
    %1821 = vmatpush.msra.mxu0 0.0
    %1822 = vmatpush.msra.mxu0 0.0
    %1823 = vmatpush.msra.mxu0 0.0
    %1824 = vmatpush.msra.mxu0 0.0
    %1825 = vmatpush.msra.mxu0 0.0
    %1826 = vmatpush.msra.mxu0 0.0
    %1827 = vmatpush.msra.mxu0 0.0
    %1828 = vmatpush.msra.mxu0 0.0
    %1829 = vmatpush.msra.mxu0 0.0
    %1830 = vmatpush.msra.mxu0 0.0
    %1831 = vmatpush.msra.mxu0 0.0
    %1832 = vmatpush.msra.mxu0 0.0
    %1833 = vmatpush.msra.mxu0 %v1048
    %1834 = vmatpush.msra.mxu0 %v1047
    %1835 = vmatpush.msra.mxu0 %v1046
    %1836 = vmatpush.msra.mxu0 %v1045
    %1837 = vmatmul.f32.gmra.mxu0 %v1816
    %v1838 = vpop.f32.mrf.mxu0
    %v1839 = vadd.f32 0.0, %v1838
    %1840 = vmatmul.f32.gmra.mxu0 %v1819
    %v1841 = vpop.f32.mrf.mxu0
    %v1842 = vadd.f32 0.0, %v1841
    %1843 = vdwg.mxu0
    %v1845 = vsel %vm154, %v1031, 0
    %v1848 = vsel %vm154, %v1032, 0
    %1850 = vmatpush.msra.mxu0 0.0
    %1851 = vmatpush.msra.mxu0 0.0
    %1852 = vmatpush.msra.mxu0 0.0
    %1853 = vmatpush.msra.mxu0 0.0
    %1854 = vmatpush.msra.mxu0 0.0
    %1855 = vmatpush.msra.mxu0 0.0
    %1856 = vmatpush.msra.mxu0 0.0
    %1857 = vmatpush.msra.mxu0 0.0
    %1858 = vmatpush.msra.mxu0 0.0
    %1859 = vmatpush.msra.mxu0 0.0
    %1860 = vmatpush.msra.mxu0 0.0
    %1861 = vmatpush.msra.mxu0 0.0
    %1862 = vmatpush.msra.mxu0 %v1052
    %1863 = vmatpush.msra.mxu0 %v1051
    %1864 = vmatpush.msra.mxu0 %v1050
    %1865 = vmatpush.msra.mxu0 %v1049
    %1866 = vmatmul.f32.gmra.mxu0 %v1845
    %v1867 = vpop.f32.mrf.mxu0
    %v1868 = vadd.f32 0.0, %v1867
    %1869 = vmatmul.f32.gmra.mxu0 %v1848
    %v1870 = vpop.f32.mrf.mxu0
    %v1871 = vadd.f32 0.0, %v1870
    %1872 = vdwg.mxu0
    %1875 = vrot.lane.b32.xlu0 %v1839, 120
    %v1876 = vpop.permute.xlu0 %1875
    %1877 = vrot.lane.b32.xlu0 %v1842, 120
    %v1878 = vpop.permute.xlu0 %1877
    %1879 = vrot.lane.b32.xlu0 %v1839, 112
    %v1880 = vpop.permute.xlu0 %1879
    %1881 = vrot.lane.b32.xlu0 %v1842, 112
    %v1882 = vpop.permute.xlu0 %1881
    %1883 = vrot.lane.b32.xlu0 %v1839, 104
    %v1884 = vpop.permute.xlu0 %1883
    %1885 = vrot.lane.b32.xlu0 %v1842, 104
    %v1886 = vpop.permute.xlu0 %1885
    %1889 = vrot.lane.b32.xlu0 %v1868, 120
    %v1890 = vpop.permute.xlu0 %1889
    %1891 = vrot.lane.b32.xlu0 %v1871, 120
    %v1892 = vpop.permute.xlu0 %1891
    %1893 = vrot.lane.b32.xlu0 %v1868, 112
    %v1894 = vpop.permute.xlu0 %1893
    %1895 = vrot.lane.b32.xlu0 %v1871, 112
    %v1896 = vpop.permute.xlu0 %1895
    %1897 = vrot.lane.b32.xlu0 %v1868, 104
    %v1898 = vpop.permute.xlu0 %1897
    %1899 = vrot.lane.b32.xlu0 %v1871, 104
    %v1900 = vpop.permute.xlu0 %1899
    %v1901 = vsel %vm242, %v1839, 0
    %v1903 = vsel %vm242, %v1868, 0
    %1905 = vmatpush.xpose.msra.mxu0 0.0
    %1906 = vmatpush.xpose.msra.mxu0 0.0
    %1907 = vmatpush.xpose.msra.mxu0 0.0
    %1908 = vmatpush.xpose.msra.mxu0 0.0
    %1909 = vmatpush.xpose.msra.mxu0 0.0
    %1910 = vmatpush.xpose.msra.mxu0 0.0
    %1911 = vmatpush.xpose.msra.mxu0 0.0
    %1912 = vmatpush.xpose.msra.mxu0 0.0
    %1913 = vmatpush.xpose.msra.mxu0 0.0
    %1914 = vmatpush.xpose.msra.mxu0 0.0
    %1915 = vmatpush.xpose.msra.mxu0 0.0
    %1916 = vmatpush.xpose.msra.mxu0 0.0
    %1917 = vmatpush.xpose.msra.mxu0 0.0
    %1918 = vmatpush.xpose.msra.mxu0 0.0
    %1919 = vmatpush.xpose.msra.mxu0 0.0
    %1920 = vmatpush.xpose.msra.mxu0 %v1903
    %1921 = vmatmul.f32.gmra.mxu0 %v1901
    %v1922 = vpop.f32.mrf.mxu0
    %v1923 = vadd.f32 %v126, %v1922
    %1924 = vdwg.mxu0
    %v1925 = vsel %vm242, %v1842, 0
    %v1927 = vsel %vm242, %v1871, 0
    %1929 = vmatpush.xpose.msra.mxu0 0.0
    %1930 = vmatpush.xpose.msra.mxu0 0.0
    %1931 = vmatpush.xpose.msra.mxu0 0.0
    %1932 = vmatpush.xpose.msra.mxu0 0.0
    %1933 = vmatpush.xpose.msra.mxu0 0.0
    %1934 = vmatpush.xpose.msra.mxu0 0.0
    %1935 = vmatpush.xpose.msra.mxu0 0.0
    %1936 = vmatpush.xpose.msra.mxu0 0.0
    %1937 = vmatpush.xpose.msra.mxu0 0.0
    %1938 = vmatpush.xpose.msra.mxu0 0.0
    %1939 = vmatpush.xpose.msra.mxu0 0.0
    %1940 = vmatpush.xpose.msra.mxu0 0.0
    %1941 = vmatpush.xpose.msra.mxu0 0.0
    %1942 = vmatpush.xpose.msra.mxu0 0.0
    %1943 = vmatpush.xpose.msra.mxu0 0.0
    %1944 = vmatpush.xpose.msra.mxu0 %v1927
    %1945 = vmatmul.f32.gmra.mxu0 %v1925
    %v1946 = vpop.f32.mrf.mxu0
    %v1947 = vadd.f32 %v127, %v1946
    %1948 = vdwg.mxu0
    %v1949 = vsel %vm242, %v1876, 0
    %v1951 = vsel %vm242, %v1890, 0
    %1953 = vmatpush.xpose.msra.mxu0 0.0
    %1954 = vmatpush.xpose.msra.mxu0 0.0
    %1955 = vmatpush.xpose.msra.mxu0 0.0
    %1956 = vmatpush.xpose.msra.mxu0 0.0
    %1957 = vmatpush.xpose.msra.mxu0 0.0
    %1958 = vmatpush.xpose.msra.mxu0 0.0
    %1959 = vmatpush.xpose.msra.mxu0 0.0
    %1960 = vmatpush.xpose.msra.mxu0 0.0
    %1961 = vmatpush.xpose.msra.mxu0 0.0
    %1962 = vmatpush.xpose.msra.mxu0 0.0
    %1963 = vmatpush.xpose.msra.mxu0 0.0
    %1964 = vmatpush.xpose.msra.mxu0 0.0
    %1965 = vmatpush.xpose.msra.mxu0 0.0
    %1966 = vmatpush.xpose.msra.mxu0 0.0
    %1967 = vmatpush.xpose.msra.mxu0 0.0
    %1968 = vmatpush.xpose.msra.mxu0 %v1951
    %1969 = vmatmul.f32.gmra.mxu0 %v1949
    %v1970 = vpop.f32.mrf.mxu0
    %v1971 = vadd.f32 %v126, %v1970
    %1972 = vdwg.mxu0
    %v1973 = vsel %vm242, %v1878, 0
    %v1975 = vsel %vm242, %v1892, 0
    %1977 = vmatpush.xpose.msra.mxu0 0.0
    %1978 = vmatpush.xpose.msra.mxu0 0.0
    %1979 = vmatpush.xpose.msra.mxu0 0.0
    %1980 = vmatpush.xpose.msra.mxu0 0.0
    %1981 = vmatpush.xpose.msra.mxu0 0.0
    %1982 = vmatpush.xpose.msra.mxu0 0.0
    %1983 = vmatpush.xpose.msra.mxu0 0.0
    %1984 = vmatpush.xpose.msra.mxu0 0.0
    %1985 = vmatpush.xpose.msra.mxu0 0.0
    %1986 = vmatpush.xpose.msra.mxu0 0.0
    %1987 = vmatpush.xpose.msra.mxu0 0.0
    %1988 = vmatpush.xpose.msra.mxu0 0.0
    %1989 = vmatpush.xpose.msra.mxu0 0.0
    %1990 = vmatpush.xpose.msra.mxu0 0.0
    %1991 = vmatpush.xpose.msra.mxu0 0.0
    %1992 = vmatpush.xpose.msra.mxu0 %v1975
    %1993 = vmatmul.f32.gmra.mxu0 %v1973
    %v1994 = vpop.f32.mrf.mxu0
    %v1995 = vadd.f32 %v127, %v1994
    %1996 = vdwg.mxu0
    %v1997 = vsel %vm242, %v1880, 0
    %v1999 = vsel %vm242, %v1894, 0
    %2001 = vmatpush.xpose.msra.mxu0 0.0
    %2002 = vmatpush.xpose.msra.mxu0 0.0
    %2003 = vmatpush.xpose.msra.mxu0 0.0
    %2004 = vmatpush.xpose.msra.mxu0 0.0
    %2005 = vmatpush.xpose.msra.mxu0 0.0
    %2006 = vmatpush.xpose.msra.mxu0 0.0
    %2007 = vmatpush.xpose.msra.mxu0 0.0
    %2008 = vmatpush.xpose.msra.mxu0 0.0
    %2009 = vmatpush.xpose.msra.mxu0 0.0
    %2010 = vmatpush.xpose.msra.mxu0 0.0
    %2011 = vmatpush.xpose.msra.mxu0 0.0
    %2012 = vmatpush.xpose.msra.mxu0 0.0
    %2013 = vmatpush.xpose.msra.mxu0 0.0
    %2014 = vmatpush.xpose.msra.mxu0 0.0
    %2015 = vmatpush.xpose.msra.mxu0 0.0
    %2016 = vmatpush.xpose.msra.mxu0 %v1999
    %2017 = vmatmul.f32.gmra.mxu0 %v1997
    %v2018 = vpop.f32.mrf.mxu0
    %v2019 = vadd.f32 %v126, %v2018
    %2020 = vdwg.mxu0
    %v2021 = vsel %vm242, %v1882, 0
    %v2023 = vsel %vm242, %v1896, 0
    %2025 = vmatpush.xpose.msra.mxu0 0.0
    %2026 = vmatpush.xpose.msra.mxu0 0.0
    %2027 = vmatpush.xpose.msra.mxu0 0.0
    %2028 = vmatpush.xpose.msra.mxu0 0.0
    %2029 = vmatpush.xpose.msra.mxu0 0.0
    %2030 = vmatpush.xpose.msra.mxu0 0.0
    %2031 = vmatpush.xpose.msra.mxu0 0.0
    %2032 = vmatpush.xpose.msra.mxu0 0.0
    %2033 = vmatpush.xpose.msra.mxu0 0.0
    %2034 = vmatpush.xpose.msra.mxu0 0.0
    %2035 = vmatpush.xpose.msra.mxu0 0.0
    %2036 = vmatpush.xpose.msra.mxu0 0.0
    %2037 = vmatpush.xpose.msra.mxu0 0.0
    %2038 = vmatpush.xpose.msra.mxu0 0.0
    %2039 = vmatpush.xpose.msra.mxu0 0.0
    %2040 = vmatpush.xpose.msra.mxu0 %v2023
    %2041 = vmatmul.f32.gmra.mxu0 %v2021
    %v2042 = vpop.f32.mrf.mxu0
    %v2043 = vadd.f32 %v127, %v2042
    %2044 = vdwg.mxu0
    %v2045 = vsel %vm242, %v1884, 0
    %v2047 = vsel %vm242, %v1898, 0
    %2049 = vmatpush.xpose.msra.mxu0 0.0
    %2050 = vmatpush.xpose.msra.mxu0 0.0
    %2051 = vmatpush.xpose.msra.mxu0 0.0
    %2052 = vmatpush.xpose.msra.mxu0 0.0
    %2053 = vmatpush.xpose.msra.mxu0 0.0
    %2054 = vmatpush.xpose.msra.mxu0 0.0
    %2055 = vmatpush.xpose.msra.mxu0 0.0
    %2056 = vmatpush.xpose.msra.mxu0 0.0
    %2057 = vmatpush.xpose.msra.mxu0 0.0
    %2058 = vmatpush.xpose.msra.mxu0 0.0
    %2059 = vmatpush.xpose.msra.mxu0 0.0
    %2060 = vmatpush.xpose.msra.mxu0 0.0
    %2061 = vmatpush.xpose.msra.mxu0 0.0
    %2062 = vmatpush.xpose.msra.mxu0 0.0
    %2063 = vmatpush.xpose.msra.mxu0 0.0
    %2064 = vmatpush.xpose.msra.mxu0 %v2047
    %2065 = vmatmul.f32.gmra.mxu0 %v2045
    %v2066 = vpop.f32.mrf.mxu0
    %v2067 = vadd.f32 %v126, %v2066
    %2068 = vdwg.mxu0
    %v2069 = vsel %vm242, %v1886, 0
    %v2071 = vsel %vm242, %v1900, 0
    %2073 = vmatpush.xpose.msra.mxu0 0.0
    %2074 = vmatpush.xpose.msra.mxu0 0.0
    %2075 = vmatpush.xpose.msra.mxu0 0.0
    %2076 = vmatpush.xpose.msra.mxu0 0.0
    %2077 = vmatpush.xpose.msra.mxu0 0.0
    %2078 = vmatpush.xpose.msra.mxu0 0.0
    %2079 = vmatpush.xpose.msra.mxu0 0.0
    %2080 = vmatpush.xpose.msra.mxu0 0.0
    %2081 = vmatpush.xpose.msra.mxu0 0.0
    %2082 = vmatpush.xpose.msra.mxu0 0.0
    %2083 = vmatpush.xpose.msra.mxu0 0.0
    %2084 = vmatpush.xpose.msra.mxu0 0.0
    %2085 = vmatpush.xpose.msra.mxu0 0.0
    %2086 = vmatpush.xpose.msra.mxu0 0.0
    %2087 = vmatpush.xpose.msra.mxu0 0.0
    %2088 = vmatpush.xpose.msra.mxu0 %v2071
    %2089 = vmatmul.f32.gmra.mxu0 %v2069
    %v2090 = vpop.f32.mrf.mxu0
    %v2091 = vadd.f32 %v127, %v2090
    %2092 = vdwg.mxu0
    %v2093 = vsel %vm242, %v1923, -inf
    %2094 = vmax.xlane.f32.xlu0 %v2093
    %v2095 = vpop.xlane.xlu0 %2094
    %v2096 = vsel %vm242, %v1947, -inf
    %2097 = vmax.xlane.f32.xlu0 %v2096
    %v2098 = vpop.xlane.xlu0 %2097
    %v2099 = vsel %vm242, %v1971, -inf
    %2100 = vmax.xlane.f32.xlu0 %v2099
    %v2101 = vpop.xlane.xlu0 %2100
    %v2102 = vsel %vm242, %v1995, -inf
    %2103 = vmax.xlane.f32.xlu0 %v2102
    %v2104 = vpop.xlane.xlu0 %2103
    %v2105 = vsel %vm242, %v2019, -inf
    %2106 = vmax.xlane.f32.xlu0 %v2105
    %v2107 = vpop.xlane.xlu0 %2106
    %v2108 = vsel %vm242, %v2043, -inf
    %2109 = vmax.xlane.f32.xlu0 %v2108
    %v2110 = vpop.xlane.xlu0 %2109
    %v2111 = vsel %vm242, %v2067, -inf
    %2112 = vmax.xlane.f32.xlu0 %v2111
    %v2113 = vpop.xlane.xlu0 %2112
    %v2114 = vsel %vm242, %v2091, -inf
    %2115 = vmax.xlane.f32.xlu0 %v2114
    %v2116 = vpop.xlane.xlu0 %2115
    %v2117 = vsub.f32 %v1923, %v2095
    %v2118 = vsub.f32 %v1947, %v2098
    %v2119 = vsub.f32 %v1971, %v2101
    %v2120 = vsub.f32 %v1995, %v2104
    %v2121 = vsub.f32 %v2019, %v2107
    %v2122 = vsub.f32 %v2043, %v2110
    %v2123 = vsub.f32 %v2067, %v2113
    %v2124 = vsub.f32 %v2091, %v2116
    %v2125 = vmul.f32 %v2117, 1.442695
    %v2126 = vpow.pop %v2125
    %v2127 = vmul.f32 %v2118, 1.442695
    %v2128 = vpow.pop %v2127
    %v2129 = vmul.f32 %v2119, 1.442695
    %v2130 = vpow.pop %v2129
    %v2131 = vmul.f32 %v2120, 1.442695
    %v2132 = vpow.pop %v2131
    %v2133 = vmul.f32 %v2121, 1.442695
    %v2134 = vpow.pop %v2133
    %v2135 = vmul.f32 %v2122, 1.442695
    %v2136 = vpow.pop %v2135
    %v2137 = vmul.f32 %v2123, 1.442695
    %v2138 = vpow.pop %v2137
    %v2139 = vmul.f32 %v2124, 1.442695
    %v2140 = vpow.pop %v2139
    %v2141 = vsel %vm242, %v2126, 0.0
    %2142 = vadd.xlane.f32.xlu0 %v2141
    %v2143 = vpop.xlane.xlu0 %2142
    %v2144 = vsel %vm242, %v2128, 0.0
    %2145 = vadd.xlane.f32.xlu0 %v2144
    %v2146 = vpop.xlane.xlu0 %2145
    %v2147 = vsel %vm242, %v2130, 0.0
    %2148 = vadd.xlane.f32.xlu0 %v2147
    %v2149 = vpop.xlane.xlu0 %2148
    %v2150 = vsel %vm242, %v2132, 0.0
    %2151 = vadd.xlane.f32.xlu0 %v2150
    %v2152 = vpop.xlane.xlu0 %2151
    %v2153 = vsel %vm242, %v2134, 0.0
    %2154 = vadd.xlane.f32.xlu0 %v2153
    %v2155 = vpop.xlane.xlu0 %2154
    %v2156 = vsel %vm242, %v2136, 0.0
    %2157 = vadd.xlane.f32.xlu0 %v2156
    %v2158 = vpop.xlane.xlu0 %2157
    %v2159 = vsel %vm242, %v2138, 0.0
    %2160 = vadd.xlane.f32.xlu0 %v2159
    %v2161 = vpop.xlane.xlu0 %2160
    %v2162 = vsel %vm242, %v2140, 0.0
    %2163 = vadd.xlane.f32.xlu0 %v2162
    %v2164 = vpop.xlane.xlu0 %2163
    %v2165 = vrcp.pop %v2143
    %v2166 = vrcp.pop %v2146
    %v2167 = vrcp.pop %v2149
    %v2168 = vrcp.pop %v2152
    %v2169 = vrcp.pop %v2155
    %v2170 = vrcp.pop %v2158
    %v2171 = vrcp.pop %v2161
    %v2172 = vrcp.pop %v2164
    %v2173 = vmul.f32 %v2126, %v2165
    %v2174 = vmul.f32 %v2128, %v2166
    %v2175 = vmul.f32 %v2130, %v2167
    %v2176 = vmul.f32 %v2132, %v2168
    %v2177 = vmul.f32 %v2134, %v2169
    %v2178 = vmul.f32 %v2136, %v2170
    %v2179 = vmul.f32 %v2138, %v2171
    %v2180 = vmul.f32 %v2140, %v2172
    %2181 = vrot.lane.b32.xlu0 %v1868, 96
    %v2182 = vpop.permute.xlu0 %2181
    %v2185 = vsel %vm242, %v2173, 0
    %2187 = vmatpush.msra.mxu0 0.0
    %2188 = vmatpush.msra.mxu0 0.0
    %2189 = vmatpush.msra.mxu0 0.0
    %2190 = vmatpush.msra.mxu0 0.0
    %2191 = vmatpush.msra.mxu0 0.0
    %2192 = vmatpush.msra.mxu0 0.0
    %2193 = vmatpush.msra.mxu0 0.0
    %2194 = vmatpush.msra.mxu0 0.0
    %2195 = vmatpush.msra.mxu0 0.0
    %2196 = vmatpush.msra.mxu0 0.0
    %2197 = vmatpush.msra.mxu0 0.0
    %2198 = vmatpush.msra.mxu0 0.0
    %2199 = vmatpush.msra.mxu0 0.0
    %2200 = vmatpush.msra.mxu0 0.0
    %2201 = vmatpush.msra.mxu0 0.0
    %2202 = vmatpush.msra.mxu0 %v2182
    %2203 = vmatmul.f32.gmra.mxu0 %v2185
    %v2204 = vpop.f32.mrf.mxu0
    %v2205 = vadd.f32 0.0, %v2204
    %2206 = vdwg.mxu0
    %2207 = vrot.lane.b32.xlu0 %v1871, 96
    %v2208 = vpop.permute.xlu0 %2207
    %v2211 = vsel %vm242, %v2174, 0
    %2213 = vmatpush.msra.mxu0 0.0
    %2214 = vmatpush.msra.mxu0 0.0
    %2215 = vmatpush.msra.mxu0 0.0
    %2216 = vmatpush.msra.mxu0 0.0
    %2217 = vmatpush.msra.mxu0 0.0
    %2218 = vmatpush.msra.mxu0 0.0
    %2219 = vmatpush.msra.mxu0 0.0
    %2220 = vmatpush.msra.mxu0 0.0
    %2221 = vmatpush.msra.mxu0 0.0
    %2222 = vmatpush.msra.mxu0 0.0
    %2223 = vmatpush.msra.mxu0 0.0
    %2224 = vmatpush.msra.mxu0 0.0
    %2225 = vmatpush.msra.mxu0 0.0
    %2226 = vmatpush.msra.mxu0 0.0
    %2227 = vmatpush.msra.mxu0 0.0
    %2228 = vmatpush.msra.mxu0 %v2208
    %2229 = vmatmul.f32.gmra.mxu0 %v2211
    %v2230 = vpop.f32.mrf.mxu0
    %v2231 = vadd.f32 0.0, %v2230
    %2232 = vdwg.mxu0
    %2233 = vrot.lane.b32.xlu0 %v1890, 96
    %v2234 = vpop.permute.xlu0 %2233
    %v2237 = vsel %vm242, %v2175, 0
    %2239 = vmatpush.msra.mxu0 0.0
    %2240 = vmatpush.msra.mxu0 0.0
    %2241 = vmatpush.msra.mxu0 0.0
    %2242 = vmatpush.msra.mxu0 0.0
    %2243 = vmatpush.msra.mxu0 0.0
    %2244 = vmatpush.msra.mxu0 0.0
    %2245 = vmatpush.msra.mxu0 0.0
    %2246 = vmatpush.msra.mxu0 0.0
    %2247 = vmatpush.msra.mxu0 0.0
    %2248 = vmatpush.msra.mxu0 0.0
    %2249 = vmatpush.msra.mxu0 0.0
    %2250 = vmatpush.msra.mxu0 0.0
    %2251 = vmatpush.msra.mxu0 0.0
    %2252 = vmatpush.msra.mxu0 0.0
    %2253 = vmatpush.msra.mxu0 0.0
    %2254 = vmatpush.msra.mxu0 %v2234
    %2255 = vmatmul.f32.gmra.mxu0 %v2237
    %v2256 = vpop.f32.mrf.mxu0
    %v2257 = vadd.f32 0.0, %v2256
    %2258 = vdwg.mxu0
    %2259 = vrot.lane.b32.xlu0 %v1892, 96
    %v2260 = vpop.permute.xlu0 %2259
    %v2263 = vsel %vm242, %v2176, 0
    %2265 = vmatpush.msra.mxu0 0.0
    %2266 = vmatpush.msra.mxu0 0.0
    %2267 = vmatpush.msra.mxu0 0.0
    %2268 = vmatpush.msra.mxu0 0.0
    %2269 = vmatpush.msra.mxu0 0.0
    %2270 = vmatpush.msra.mxu0 0.0
    %2271 = vmatpush.msra.mxu0 0.0
    %2272 = vmatpush.msra.mxu0 0.0
    %2273 = vmatpush.msra.mxu0 0.0
    %2274 = vmatpush.msra.mxu0 0.0
    %2275 = vmatpush.msra.mxu0 0.0
    %2276 = vmatpush.msra.mxu0 0.0
    %2277 = vmatpush.msra.mxu0 0.0
    %2278 = vmatpush.msra.mxu0 0.0
    %2279 = vmatpush.msra.mxu0 0.0
    %2280 = vmatpush.msra.mxu0 %v2260
    %2281 = vmatmul.f32.gmra.mxu0 %v2263
    %v2282 = vpop.f32.mrf.mxu0
    %v2283 = vadd.f32 0.0, %v2282
    %2284 = vdwg.mxu0
    %2285 = vrot.lane.b32.xlu0 %v1894, 96
    %v2286 = vpop.permute.xlu0 %2285
    %v2289 = vsel %vm242, %v2177, 0
    %2291 = vmatpush.msra.mxu0 0.0
    %2292 = vmatpush.msra.mxu0 0.0
    %2293 = vmatpush.msra.mxu0 0.0
    %2294 = vmatpush.msra.mxu0 0.0
    %2295 = vmatpush.msra.mxu0 0.0
    %2296 = vmatpush.msra.mxu0 0.0
    %2297 = vmatpush.msra.mxu0 0.0
    %2298 = vmatpush.msra.mxu0 0.0
    %2299 = vmatpush.msra.mxu0 0.0
    %2300 = vmatpush.msra.mxu0 0.0
    %2301 = vmatpush.msra.mxu0 0.0
    %2302 = vmatpush.msra.mxu0 0.0
    %2303 = vmatpush.msra.mxu0 0.0
    %2304 = vmatpush.msra.mxu0 0.0
    %2305 = vmatpush.msra.mxu0 0.0
    %2306 = vmatpush.msra.mxu0 %v2286
    %2307 = vmatmul.f32.gmra.mxu0 %v2289
    %v2308 = vpop.f32.mrf.mxu0
    %v2309 = vadd.f32 0.0, %v2308
    %2310 = vdwg.mxu0
    %2311 = vrot.lane.b32.xlu0 %v1896, 96
    %v2312 = vpop.permute.xlu0 %2311
    %v2315 = vsel %vm242, %v2178, 0
    %2317 = vmatpush.msra.mxu0 0.0
    %2318 = vmatpush.msra.mxu0 0.0
    %2319 = vmatpush.msra.mxu0 0.0
    %2320 = vmatpush.msra.mxu0 0.0
    %2321 = vmatpush.msra.mxu0 0.0
    %2322 = vmatpush.msra.mxu0 0.0
    %2323 = vmatpush.msra.mxu0 0.0
    %2324 = vmatpush.msra.mxu0 0.0
    %2325 = vmatpush.msra.mxu0 0.0
    %2326 = vmatpush.msra.mxu0 0.0
    %2327 = vmatpush.msra.mxu0 0.0
    %2328 = vmatpush.msra.mxu0 0.0
    %2329 = vmatpush.msra.mxu0 0.0
    %2330 = vmatpush.msra.mxu0 0.0
    %2331 = vmatpush.msra.mxu0 0.0
    %2332 = vmatpush.msra.mxu0 %v2312
    %2333 = vmatmul.f32.gmra.mxu0 %v2315
    %v2334 = vpop.f32.mrf.mxu0
    %v2335 = vadd.f32 0.0, %v2334
    %2336 = vdwg.mxu0
    %2337 = vrot.lane.b32.xlu0 %v1898, 96
    %v2338 = vpop.permute.xlu0 %2337
    %v2341 = vsel %vm242, %v2179, 0
    %2343 = vmatpush.msra.mxu0 0.0
    %2344 = vmatpush.msra.mxu0 0.0
    %2345 = vmatpush.msra.mxu0 0.0
    %2346 = vmatpush.msra.mxu0 0.0
    %2347 = vmatpush.msra.mxu0 0.0
    %2348 = vmatpush.msra.mxu0 0.0
    %2349 = vmatpush.msra.mxu0 0.0
    %2350 = vmatpush.msra.mxu0 0.0
    %2351 = vmatpush.msra.mxu0 0.0
    %2352 = vmatpush.msra.mxu0 0.0
    %2353 = vmatpush.msra.mxu0 0.0
    %2354 = vmatpush.msra.mxu0 0.0
    %2355 = vmatpush.msra.mxu0 0.0
    %2356 = vmatpush.msra.mxu0 0.0
    %2357 = vmatpush.msra.mxu0 0.0
    %2358 = vmatpush.msra.mxu0 %v2338
    %2359 = vmatmul.f32.gmra.mxu0 %v2341
    %v2360 = vpop.f32.mrf.mxu0
    %v2361 = vadd.f32 0.0, %v2360
    %2362 = vdwg.mxu0
    %2363 = vrot.lane.b32.xlu0 %v1900, 96
    %v2364 = vpop.permute.xlu0 %2363
    %v2367 = vsel %vm242, %v2180, 0
    %2369 = vmatpush.msra.mxu0 0.0
    %2370 = vmatpush.msra.mxu0 0.0
    %2371 = vmatpush.msra.mxu0 0.0
    %2372 = vmatpush.msra.mxu0 0.0
    %2373 = vmatpush.msra.mxu0 0.0
    %2374 = vmatpush.msra.mxu0 0.0
    %2375 = vmatpush.msra.mxu0 0.0
    %2376 = vmatpush.msra.mxu0 0.0
    %2377 = vmatpush.msra.mxu0 0.0
    %2378 = vmatpush.msra.mxu0 0.0
    %2379 = vmatpush.msra.mxu0 0.0
    %2380 = vmatpush.msra.mxu0 0.0
    %2381 = vmatpush.msra.mxu0 0.0
    %2382 = vmatpush.msra.mxu0 0.0
    %2383 = vmatpush.msra.mxu0 0.0
    %2384 = vmatpush.msra.mxu0 %v2364
    %2385 = vmatmul.f32.gmra.mxu0 %v2367
    %v2386 = vpop.f32.mrf.mxu0
    %v2387 = vadd.f32 0.0, %v2386
    %2388 = vdwg.mxu0
    %v2390 = vsel %vm242, %v2205, 0
    %v2393 = vsel %vm242, %v2231, 0
    %2395 = vmatpush.msra.mxu0 0.0
    %2396 = vmatpush.msra.mxu0 0.0
    %2397 = vmatpush.msra.mxu0 0.0
    %2398 = vmatpush.msra.mxu0 0.0
    %2399 = vmatpush.msra.mxu0 0.0
    %2400 = vmatpush.msra.mxu0 0.0
    %2401 = vmatpush.msra.mxu0 0.0
    %2402 = vmatpush.msra.mxu0 0.0
    %2403 = vmatpush.msra.mxu0 0.0
    %2404 = vmatpush.msra.mxu0 0.0
    %2405 = vmatpush.msra.mxu0 0.0
    %2406 = vmatpush.msra.mxu0 0.0
    %2407 = vmatpush.msra.mxu0 0.0
    %2408 = vmatpush.msra.mxu0 0.0
    %2409 = vmatpush.msra.mxu0 0.0
    %2410 = vmatpush.msra.mxu0 %v1053
    %2411 = vmatmul.f32.gmra.mxu0 %v2390
    %v2412 = vpop.f32.mrf.mxu0
    %v2413 = vadd.f32 0.0, %v2412
    %2414 = vmatmul.f32.gmra.mxu0 %v2393
    %v2415 = vpop.f32.mrf.mxu0
    %v2416 = vadd.f32 0.0, %v2415
    %2417 = vdwg.mxu0
    %v2419 = vsel %vm242, %v2257, 0
    %v2422 = vsel %vm242, %v2283, 0
    %2424 = vmatpush.msra.mxu0 0.0
    %2425 = vmatpush.msra.mxu0 0.0
    %2426 = vmatpush.msra.mxu0 0.0
    %2427 = vmatpush.msra.mxu0 0.0
    %2428 = vmatpush.msra.mxu0 0.0
    %2429 = vmatpush.msra.mxu0 0.0
    %2430 = vmatpush.msra.mxu0 0.0
    %2431 = vmatpush.msra.mxu0 0.0
    %2432 = vmatpush.msra.mxu0 0.0
    %2433 = vmatpush.msra.mxu0 0.0
    %2434 = vmatpush.msra.mxu0 0.0
    %2435 = vmatpush.msra.mxu0 0.0
    %2436 = vmatpush.msra.mxu0 0.0
    %2437 = vmatpush.msra.mxu0 0.0
    %2438 = vmatpush.msra.mxu0 0.0
    %2439 = vmatpush.msra.mxu0 %v1054
    %2440 = vmatmul.f32.gmra.mxu0 %v2419
    %v2441 = vpop.f32.mrf.mxu0
    %v2442 = vadd.f32 0.0, %v2441
    %2443 = vmatmul.f32.gmra.mxu0 %v2422
    %v2444 = vpop.f32.mrf.mxu0
    %v2445 = vadd.f32 0.0, %v2444
    %2446 = vdwg.mxu0
    %v2448 = vsel %vm242, %v2309, 0
    %v2451 = vsel %vm242, %v2335, 0
    %2453 = vmatpush.msra.mxu0 0.0
    %2454 = vmatpush.msra.mxu0 0.0
    %2455 = vmatpush.msra.mxu0 0.0
    %2456 = vmatpush.msra.mxu0 0.0
    %2457 = vmatpush.msra.mxu0 0.0
    %2458 = vmatpush.msra.mxu0 0.0
    %2459 = vmatpush.msra.mxu0 0.0
    %2460 = vmatpush.msra.mxu0 0.0
    %2461 = vmatpush.msra.mxu0 0.0
    %2462 = vmatpush.msra.mxu0 0.0
    %2463 = vmatpush.msra.mxu0 0.0
    %2464 = vmatpush.msra.mxu0 0.0
    %2465 = vmatpush.msra.mxu0 0.0
    %2466 = vmatpush.msra.mxu0 0.0
    %2467 = vmatpush.msra.mxu0 0.0
    %2468 = vmatpush.msra.mxu0 %v1055
    %2469 = vmatmul.f32.gmra.mxu0 %v2448
    %v2470 = vpop.f32.mrf.mxu0
    %v2471 = vadd.f32 0.0, %v2470
    %2472 = vmatmul.f32.gmra.mxu0 %v2451
    %v2473 = vpop.f32.mrf.mxu0
    %v2474 = vadd.f32 0.0, %v2473
    %2475 = vdwg.mxu0
    %v2477 = vsel %vm242, %v2361, 0
    %v2480 = vsel %vm242, %v2387, 0
    %2482 = vmatpush.msra.mxu0 0.0
    %2483 = vmatpush.msra.mxu0 0.0
    %2484 = vmatpush.msra.mxu0 0.0
    %2485 = vmatpush.msra.mxu0 0.0
    %2486 = vmatpush.msra.mxu0 0.0
    %2487 = vmatpush.msra.mxu0 0.0
    %2488 = vmatpush.msra.mxu0 0.0
    %2489 = vmatpush.msra.mxu0 0.0
    %2490 = vmatpush.msra.mxu0 0.0
    %2491 = vmatpush.msra.mxu0 0.0
    %2492 = vmatpush.msra.mxu0 0.0
    %2493 = vmatpush.msra.mxu0 0.0
    %2494 = vmatpush.msra.mxu0 0.0
    %2495 = vmatpush.msra.mxu0 0.0
    %2496 = vmatpush.msra.mxu0 0.0
    %2497 = vmatpush.msra.mxu0 %v1056
    %2498 = vmatmul.f32.gmra.mxu0 %v2477
    %v2499 = vpop.f32.mrf.mxu0
    %v2500 = vadd.f32 0.0, %v2499
    %2501 = vmatmul.f32.gmra.mxu0 %v2480
    %v2502 = vpop.f32.mrf.mxu0
    %v2503 = vadd.f32 0.0, %v2502
    %2504 = vdwg.mxu0
    %v2505 = vadd.f32 %v2413, %v2442
    %v2506 = vadd.f32 %v2416, %v2445
    %v2507 = vadd.f32 %v2505, %v2471
    %v2508 = vadd.f32 %v2506, %v2474
    %v2509 = vadd.f32 %v2507, %v2500
    %v2510 = vadd.f32 %v2508, %v2503
    %v2511 = vadd.f32 %v1776, %v2509
    %v2512 = vadd.f32 %v1777, %v2510
    %v2513 = vmul.f32 %v2511, %v2511
    %v2514 = vmul.f32 %v2512, %v2512
    %v2515 = vsel %vm154, %v2513, 0.0
    %2516 = vadd.xlane.f32.xlu0 %v2515
    %v2517 = vpop.xlane.xlu0 %2516
    %v2518 = vsel %vm154, %v2514, 0.0
    %2519 = vadd.xlane.f32.xlu0 %v2518
    %v2520 = vpop.xlane.xlu0 %2519
    %v2521 = vmul.f32 %v2517, %v167
    %v2522 = vmul.f32 %v2520, %v167
    %v2523 = vadd.f32 %v2521, 1e-06
    %v2524 = vadd.f32 %v2522, 1e-06
    %v2525 = vrsqrt.pop %v2523
    %v2526 = vmul.f32 %v2525, %v2523
    %v2527 = vmul.f32 %v2526, %v2525
    %v2528 = vmul.f32 0.5, %v2527
    %v2529 = vsub.f32 1.5, %v2528
    %v2530 = vmul.f32 %v2525, %v2529
    %vm2531 = vweird.f32 %v2523
    %vm2532 = vweird.f32 %v2525
    %vm2533 = vmor %vm2531, %vm2532
    %v2534 = vsel %vm2533, %v2525, %v2530
    %v2535 = vrsqrt.pop %v2524
    %v2536 = vmul.f32 %v2535, %v2524
    %v2537 = vmul.f32 %v2536, %v2535
    %v2538 = vmul.f32 0.5, %v2537
    %v2539 = vsub.f32 1.5, %v2538
    %v2540 = vmul.f32 %v2535, %v2539
    %vm2541 = vweird.f32 %v2524
    %vm2542 = vweird.f32 %v2535
    %vm2543 = vmor %vm2541, %vm2542
    %v2544 = vsel %vm2543, %v2535, %v2540
    %v2545 = vmul.f32 %v2511, %v2534
    %v2546 = vmul.f32 %v2512, %v2544
    %v2547 = vperm.slane %v1057, 0
    %v2548 = vmul.f32 %v2545, %v2547
    %v2549 = vmul.f32 %v2546, %v2547
    %v2551 = vsel %vm154, %v2548, 0
    %v2554 = vsel %vm154, %v2549, 0
    %2556 = vmatpush.msra.mxu0 0.0
    %2557 = vmatpush.msra.mxu0 0.0
    %2558 = vmatpush.msra.mxu0 0.0
    %2559 = vmatpush.msra.mxu0 0.0
    %2560 = vmatpush.msra.mxu0 0.0
    %2561 = vmatpush.msra.mxu0 0.0
    %2562 = vmatpush.msra.mxu0 0.0
    %2563 = vmatpush.msra.mxu0 0.0
    %2564 = vmatpush.msra.mxu0 0.0
    %2565 = vmatpush.msra.mxu0 0.0
    %2566 = vmatpush.msra.mxu0 0.0
    %2567 = vmatpush.msra.mxu0 0.0
    %2568 = vmatpush.msra.mxu0 %v1061
    %2569 = vmatpush.msra.mxu0 %v1060
    %2570 = vmatpush.msra.mxu0 %v1059
    %2571 = vmatpush.msra.mxu0 %v1058
    %2572 = vmatmul.f32.gmra.mxu0 %v2551
    %v2573 = vpop.f32.mrf.mxu0
    %v2574 = vadd.f32 0.0, %v2573
    %2575 = vmatmul.f32.gmra.mxu0 %v2554
    %v2576 = vpop.f32.mrf.mxu0
    %v2577 = vadd.f32 0.0, %v2576
    %2578 = vdwg.mxu0
    %v2579 = vmul.f32 %v2574, %v2574
    %v2580 = vmul.f32 %v2577, %v2577
    %v2581 = vmul.f32 %v2574, %v2579
    %v2582 = vmul.f32 %v2577, %v2580
    %v2583 = vmul.f32 %v2581, 0.044715
    %v2584 = vmul.f32 %v2582, 0.044715
    %v2585 = vadd.f32 %v2574, %v2583
    %v2586 = vadd.f32 %v2577, %v2584
    %v2587 = vmul.f32 %v2585, 0.7978846
    %v2588 = vmul.f32 %v2586, 0.7978846
    %v2589 = vtanh.pop %v2587
    %v2590 = vtanh.pop %v2588
    %v2591 = vadd.f32 %v2589, 1.0
    %v2592 = vadd.f32 %v2590, 1.0
    %v2593 = vmul.f32 %v2591, 0.5
    %v2594 = vmul.f32 %v2592, 0.5
    %v2595 = vmul.f32 %v2574, %v2593
    %v2596 = vmul.f32 %v2577, %v2594
    %2599 = vrot.lane.b32.xlu0 %v2574, 64
    %v2600 = vpop.permute.xlu0 %2599
    %2601 = vrot.lane.b32.xlu0 %v2577, 64
    %v2602 = vpop.permute.xlu0 %2601
    %v2605 = vmul.f32 %v2595, %v2600
    %v2606 = vmul.f32 %v2596, %v2602
    %v2608 = vsel %vm963, %v2605, 0
    %v2611 = vsel %vm963, %v2606, 0
    %2613 = vmatpush.msra.mxu0 0.0
    %2614 = vmatpush.msra.mxu0 0.0
    %2615 = vmatpush.msra.mxu0 0.0
    %2616 = vmatpush.msra.mxu0 0.0
    %2617 = vmatpush.msra.mxu0 0.0
    %2618 = vmatpush.msra.mxu0 0.0
    %2619 = vmatpush.msra.mxu0 0.0
    %2620 = vmatpush.msra.mxu0 0.0
    %2621 = vmatpush.msra.mxu0 %v1069
    %2622 = vmatpush.msra.mxu0 %v1068
    %2623 = vmatpush.msra.mxu0 %v1067
    %2624 = vmatpush.msra.mxu0 %v1066
    %2625 = vmatpush.msra.mxu0 %v1065
    %2626 = vmatpush.msra.mxu0 %v1064
    %2627 = vmatpush.msra.mxu0 %v1063
    %2628 = vmatpush.msra.mxu0 %v1062
    %2629 = vmatmul.f32.gmra.mxu0 %v2608
    %v2630 = vpop.f32.mrf.mxu0
    %v2631 = vadd.f32 0.0, %v2630
    %2632 = vmatmul.f32.gmra.mxu0 %v2611
    %v2633 = vpop.f32.mrf.mxu0
    %v2634 = vadd.f32 0.0, %v2633
    %2635 = vdwg.mxu0
    %v2636 = vadd.f32 %v2511, %v2631
    %v2637 = vadd.f32 %v2512, %v2634
    %v2638 = vld [vmem:[%s4 + $0xa8] sm:$0x1]
    %v2639 = vmul.f32 %v2636, %v2636
    %v2640 = vmul.f32 %v2637, %v2637
    %v2641 = vsel %vm154, %v2639, 0.0
    %2642 = vadd.xlane.f32.xlu0 %v2641
    %v2643 = vpop.xlane.xlu0 %2642
    %v2644 = vsel %vm154, %v2640, 0.0
    %2645 = vadd.xlane.f32.xlu0 %v2644
    %v2646 = vpop.xlane.xlu0 %2645
    %v2647 = vmul.f32 %v2643, %v167
    %v2648 = vmul.f32 %v2646, %v167
    %v2649 = vadd.f32 %v2647, 1e-06
    %v2650 = vadd.f32 %v2648, 1e-06
    %v2651 = vrsqrt.pop %v2649
    %v2652 = vmul.f32 %v2651, %v2649
    %v2653 = vmul.f32 %v2652, %v2651
    %v2654 = vmul.f32 0.5, %v2653
    %v2655 = vsub.f32 1.5, %v2654
    %v2656 = vmul.f32 %v2651, %v2655
    %vm2657 = vweird.f32 %v2649
    %vm2658 = vweird.f32 %v2651
    %vm2659 = vmor %vm2657, %vm2658
    %v2660 = vsel %vm2659, %v2651, %v2656
    %v2661 = vrsqrt.pop %v2650
    %v2662 = vmul.f32 %v2661, %v2650
    %v2663 = vmul.f32 %v2662, %v2661
    %v2664 = vmul.f32 0.5, %v2663
    %v2665 = vsub.f32 1.5, %v2664
    %v2666 = vmul.f32 %v2661, %v2665
    %vm2667 = vweird.f32 %v2650
    %vm2668 = vweird.f32 %v2661
    %vm2669 = vmor %vm2667, %vm2668
    %v2670 = vsel %vm2669, %v2661, %v2666
    %v2671 = vmul.f32 %v2636, %v2660
    %v2672 = vmul.f32 %v2637, %v2670
    %v2673 = vperm.slane %v2638, 0
    %v2674 = vmul.f32 %v2671, %v2673
    %v2675 = vmul.f32 %v2672, %v2673
    %v2676 = vld [vmem:[%s4 + $0x80] sm:$0xff]
    %v2677 = vld [vmem:[%s4 + $0x88] sm:$0xff]
    %v2678 = vld [vmem:[%s4 + $0x90] sm:$0xff]
    %v2679 = vld [vmem:[%s4 + $0x98] sm:$0xff]
    %v2681 = vsel %vm154, %v2674, 0
    %v2684 = vsel %vm154, %v2675, 0
    %2686 = vmatpush.msra.mxu0 0.0
    %2687 = vmatpush.msra.mxu0 0.0
    %2688 = vmatpush.msra.mxu0 0.0
    %2689 = vmatpush.msra.mxu0 0.0
    %2690 = vmatpush.msra.mxu0 0.0
    %2691 = vmatpush.msra.mxu0 0.0
    %2692 = vmatpush.msra.mxu0 0.0
    %2693 = vmatpush.msra.mxu0 0.0
    %2694 = vmatpush.msra.mxu0 0.0
    %2695 = vmatpush.msra.mxu0 0.0
    %2696 = vmatpush.msra.mxu0 0.0
    %2697 = vmatpush.msra.mxu0 0.0
    %2698 = vmatpush.msra.mxu0 %v2679
    %2699 = vmatpush.msra.mxu0 %v2678
    %2700 = vmatpush.msra.mxu0 %v2677
    %2701 = vmatpush.msra.mxu0 %v2676
    %2702 = vmatmul.f32.gmra.mxu0 %v2681
    %v2703 = vpop.f32.mrf.mxu0
    %v2704 = vadd.f32 0.0, %v2703
    %2705 = vmatmul.f32.gmra.mxu0 %v2684
    %v2706 = vpop.f32.mrf.mxu0
    %v2707 = vadd.f32 0.0, %v2706
    %2708 = vdwg.mxu0
    %2709 = vst [vmem:[#allocation4] sm:$0xff] %v2704
    %2710 = vst [vmem:[#allocation4 + $0x8] sm:$0xff] %v2707
    %2711 = vmax.xlane.f32.xlu0 %v2704
    %v2712 = vpop.xlane.xlu0 %2711
    %2713 = vmax.xlane.f32.xlu0 %v2707
    %v2714 = vpop.xlane.xlu0 %2713
    %v2715 = vsub.f32 %v2704, %v2712
    %v2716 = vsub.f32 %v2707, %v2714
    %v2717 = vmul.f32 %v2715, 1.442695
    %v2718 = vpow.pop %v2717
    %v2719 = vmul.f32 %v2716, 1.442695
    %v2720 = vpow.pop %v2719
    %2721 = vadd.xlane.f32.xlu0 %v2718
    %v2722 = vpop.xlane.xlu0 %2721
    %2723 = vadd.xlane.f32.xlu0 %v2720
    %v2724 = vpop.xlane.xlu0 %2723
    %v2725 = vlog2.pop %v2722
    %v2726 = vmul.f32 %v2725, 0.6931472
    %v2727 = vlog2.pop %v2724
    %v2728 = vmul.f32 %v2727, 0.6931472
    %v2729 = vsub.f32 %v2715, %v2726
    %v2730 = vsub.f32 %v2716, %v2728
    %v2731 = vld [vmem:[%s2] sm:$0xff]
    %v2732 = vld [vmem:[%s2 + $0x8] sm:$0xff]
    %vm2733 = vcmp.ne.s32.totalorder %v2731, 4294967196
    %vm2734 = vcmp.ne.s32.totalorder %v2732, 4294967196
    %v2735 = vsel %vm2733, 1, 0
    %v2736 = vsel %vm2734, 1, 0
    %v2737 = vcvt.s32.f32 %v2735
    %v2738 = vcvt.s32.f32 %v2736
    %vm2739 = vcmp.eq.s32.totalorder %v2731, 4294967196
    %vm2740 = vcmp.eq.s32.totalorder %v2732, 4294967196
    %v2741 = vsel %vm2739, 0, %v2731
    %v2742 = vsel %vm2740, 0, %v2732
    %2743 = vset.pattern.permute.xlu0 0
    %2744 = vperm.xlu0 %2743, %v2741
    %v2745 = vpop.permute.xlu0 %2744
    %2746 = vset.pattern.permute.xlu0 0
    %2747 = vperm.xlu0 %2746, %v2742
    %v2748 = vpop.permute.xlu0 %2747
    %vm2749 = vcmp.eq.s32.totalorder %v44, %v2745
    %vm2750 = vcmp.eq.s32.totalorder %v44, %v2748
    %v2751 = vsel %vm2749, 1, 0
    %v2752 = vsel %vm2750, 1, 0
    %v2753 = vcvt.s32.f32 %v2751
    %v2754 = vcvt.s32.f32 %v2752
    %v2755 = vmul.f32 %v2729, %v2753
    %v2756 = vmul.f32 %v2730, %v2754
    %2757 = vadd.xlane.f32.xlu0 %v2755
    %v2758 = vpop.xlane.xlu0 %2757
    %2759 = vadd.xlane.f32.xlu0 %v2756
    %v2760 = vpop.xlane.xlu0 %2759
    %v2761 = vsub.f32 0.0, %v2758
    %v2762 = vsub.f32 0.0, %v2760
    %v2763 = vmul.f32 %v2761, %v2737
    %v2764 = vmul.f32 %v2762, %v2738
    %vm2765 = vcmask 7168
    %v2766 = vsel %vm2765, %v2763, 0.0
    %v2767 = vsel %vm2765, %v2764, 0.0
    %v2768 = vadd.f32 %v2766, %v2767
    %2769 = vadd.xlane.f32.xlu0 %v2768
    %v2770 = vpop.xlane.xlu0 %2769
    %v2771 = vrot.slane %v2770, 4
    %v2772 = vadd.f32 %v2770, %v2771
    %v2773 = vrot.slane %v2772, 2
    %v2774 = vadd.f32 %v2772, %v2773
    %v2775 = vrot.slane %v2774, 1
    %v2776 = vadd.f32 %v2774, %v2775
    %s2777 = vtos %v2776
    %v2778 = vstv %s2777
    %v2779 = vsel %vm2765, %v2737, 0.0
    %v2780 = vsel %vm2765, %v2738, 0.0
    %v2781 = vadd.f32 %v2779, %v2780
    %2782 = vadd.xlane.f32.xlu0 %v2781
    %v2783 = vpop.xlane.xlu0 %2782
    %v2784 = vrot.slane %v2783, 4
    %v2785 = vadd.f32 %v2783, %v2784
    %v2786 = vrot.slane %v2785, 2
    %v2787 = vadd.f32 %v2785, %v2786
    %v2788 = vrot.slane %v2787, 1
    %v2789 = vadd.f32 %v2787, %v2788
    %s2790 = vtos %v2789
    %v2791 = vstv %s2790
    %v2792 = vmax.f32 %v2791, 1.0
    %v2793 = vrcp.pop %v2792
    %v2794 = vmul.f32 %v2792, %v2793
    %v2795 = vsub.f32 1.0, %v2794
    %v2796 = vmul.f32 %v2793, %v2795
    %v2797 = vadd.f32 %v2793, %v2796
    %vm2798 = vweird.f32 %v2792
    %vm2799 = vweird.f32 %v2793
    %vm2800 = vmor %vm2798, %vm2799
    %v2801 = vsel %vm2800, %v2793, %v2797
    %v2802 = vand.u32 2147483647, %v2792
    %vm2803 = vcmp.eq.f32.partialorder %v2802, 8.507059e+37
    %v2804 = vand.u32 %v2792, 2147483648
    %v2805 = vor.u32 1.1754944e-38, %v2804
    %v2806 = vsel %vm2803, %v2805, %v2801
    %v2807 = vmul.f32 %v2778, %v2806
    %vm2808 = vcmask 0
    %2809 = vst.msk [vmem:[#allocation6] sm:$0x1] %vm2808, %v2807
    // Predicated region
    $region22: #{medical_llama7b_forward.1} parent=1 // pred_check
      _
    $region23: #{medical_llama7b_forward.1} parent=1 // pred_check_branch
      %2811 = sbr.rel (0) target = $region25
    $region24: #{medical_llama7b_forward.1} parent=1 // pred_region
      %2813 = vsyncadd [#allocation3], 0
      %s2814 = sshll.u32 [#allocation2], 4
      %s2815 = int_to_ptr.vmem [resolvable:$true] %s2814
      %s2816 = sshll.u32 %s5, 4
      %s2817 = int_to_ptr.hbm [resolvable:$true] %s2816
      %2822 = dma.vmem_to_hbm [thread:$0]  %s2815, 256, %s2817, [#allocation3], 128, 128, 8
    $region25: #{medical_llama7b_forward.1} parent=1 // pred_fallthru
      _
    // Predicated region
    $region26: #{medical_llama7b_forward.1} parent=1 // pred_check
      _
    $region27: #{medical_llama7b_forward.1} parent=1 // pred_check_branch
      %2824 = sbr.rel (0) target = $region29
    $region28: #{medical_llama7b_forward.1} parent=1 // pred_region
      %2826 = vsyncadd [#allocation5], 0
      %s2827 = sshll.u32 [#allocation4], 4
      %s2828 = int_to_ptr.vmem [resolvable:$true] %s2827
      %s2829 = sshll.u32 %s6, 4
      %s2830 = int_to_ptr.hbm [resolvable:$true] %s2829
      %2835 = dma.vmem_to_hbm [thread:$0]  %s2828, 256, %s2830, [#allocation5], 128, 128, 8
    $region29: #{medical_llama7b_forward.1} parent=1 // pred_fallthru
      _
    // Predicated region
    $region30: #{medical_llama7b_forward.1} parent=1 // pred_check
      _
    $region31: #{medical_llama7b_forward.1} parent=1 // pred_check_branch
      %2837 = sbr.rel (0) target = $region33
    $region32: #{medical_llama7b_forward.1} parent=1 // pred_region
      %2839 = vsyncadd [#allocation5], 0
      %s2841 = sshll.u32 [#allocation6], 4
      %s2842 = int_to_ptr.vmem [resolvable:$true] %s2841
      %s2843 = sshll.u32 %s7, 4
      %s2844 = int_to_ptr.hbm [resolvable:$true] %s2843
      %2846 = dma.vmem_to_hbm [thread:$0]  %s2842, 16, %s2844, [#allocation5]
    $region33: #{medical_llama7b_forward.1} parent=1 // pred_fallthru
      _
    // Predicated region
    $region34: #{medical_llama7b_forward.1} parent=1 // pred_check
      _
    $region35: #{medical_llama7b_forward.1} parent=1 // pred_check_branch
      %2848 = sbr.rel (0) target = $region37
    $region36: #{medical_llama7b_forward.1} parent=1 // pred_region
      %2850 = dma.done [#allocation3], 256
    $region37: #{medical_llama7b_forward.1} parent=1 // pred_fallthru
      _
    // Predicated region
    $region38: #{medical_llama7b_forward.1} parent=1 // pred_check
      _
    $region39: #{medical_llama7b_forward.1} parent=1 // pred_check_branch
      %2852 = sbr.rel (0) target = $region41
    $region40: #{medical_llama7b_forward.1} parent=1 // pred_region
      %2854 = dma.done [#allocation5], 256
    $region41: #{medical_llama7b_forward.1} parent=1 // pred_fallthru
      _
    // Predicated region
    $region42: #{medical_llama7b_forward.1} parent=1 // pred_check
      _
    $region43: #{medical_llama7b_forward.1} parent=1 // pred_check_branch
      %2856 = sbr.rel (0) target = $region45
    $region44: #{medical_llama7b_forward.1} parent=1 // pred_region
      %2858 = dma.done [#allocation5], 16
    $region45: #{medical_llama7b_forward.1} parent=1 // pred_fallthru
      _
    %2859 = vsyncpa [#allocation3], 1
    %2860 = vsyncpa [#allocation5], 1

</llo_original>
